<compile_context>
chip_gen: v7x
topology: tpu7x:2x2x1
jax: 0.10.0
libtpu: 0.0.40
codegen_flags: <defaults>
</compile_context>

<pallas_src>
import functools
import math

import jax
import jax.numpy as jnp
from jax import lax
from jax.experimental import pallas as pl
from jax.experimental.pallas import tpu as pltpu


_EPS = 1e-5
_NBLOCKS = 3


# ------------------------------ kernel helpers ------------------------------ #

def _layernorm(x):
    # PyTorch nn.LayerNorm over size()[1:] (joint (L, D)), no affine params,
    # biased variance, eps=1e-5.  One-pass form: both reductions depend only
    # on x, so they are not serialized behind the mean like the centered form.
    mean = jnp.mean(x)
    meansq = jnp.mean(x * x)
    var = jnp.maximum(meansq - mean * mean, 0.0)
    return (x - mean) * lax.rsqrt(var + _EPS)


def _attend(q_all, k_all, v_all, mask, *, H, dk, dv):
    # q_all/k_all: (L, H*dk), v_all: (L, H*dv), heads stacked along lanes.
    # Returns the concatenated multi-head attention output (L, H*dv).
    inv_sqrt_dk = 1.0 / math.sqrt(dk)
    heads = []
    for h in range(H):
        q = q_all[:, h * dk:(h + 1) * dk]
        k = k_all[:, h * dk:(h + 1) * dk]
        v = v_all[:, h * dv:(h + 1) * dv]
        # contract last axes of q and k directly (no transposed copy of k)
        s = lax.dot_general(q, k, (((1,), (1,)), ((), ())),
                            preferred_element_type=jnp.float32) * inv_sqrt_dk
        if mask is not None:
            s = s + mask
        s = s - jnp.max(s, axis=-1, keepdims=True)
        p = jnp.exp(s)
        # softmax denominator on the (otherwise idle) EUP reciprocal slot
        p = p * pl.reciprocal(jnp.sum(p, axis=-1, keepdims=True), approx=True)
        heads.append(jnp.dot(p, v, preferred_element_type=jnp.float32))
    return heads[0] if H == 1 else jnp.concatenate(heads, axis=-1)


def _decoder_kernel(x_enc_ref, x_dec_ref,
                    w_sqkv_ref, w_cq_ref, w_ckv_ref, w_o_ref,
                    w1_ref, b1_ref, w2_ref, b2_ref,
                    o_ref, *, H, dk, dv, nblocks):
    # grid=(B,): one batch element per grid step, fully VMEM-resident.
    x_enc = x_enc_ref[0]      # (L, D)
    x = x_dec_ref[0]          # (L, D) decoder stream
    L = x.shape[0]

    # x_enc layernorm is identical for all three blocks -> compute once.
    x_enc_n = _layernorm(x_enc)

    # Hoisted cross-attention K/V for ALL blocks: one lane-dense matmul
    # producing (L, nblocks*(H*dk + H*dv)).
    kv_all = jnp.dot(x_enc_n, w_ckv_ref[...], preferred_element_type=jnp.float32)

    # Causal additive mask (diagonal unmasked -> no all--inf softmax rows).
    row = lax.broadcasted_iota(jnp.int32, (L, L), 0)
    col = lax.broadcasted_iota(jnp.int32, (L, L), 1)
    causal_mask = jnp.where(col > row, -jnp.inf, 0.0).astype(jnp.float32)

    hq = H * dk
    hkv = H * dk + H * dv

    for blk in range(nblocks):
        # ---- masked self-attention + residual (dropout == identity, eval) ----
        x_n = _layernorm(x)
        # fused Q|K|V projection: single (L,D)@(D, H*(2dk+dv)) matmul
        qkv = jnp.dot(x_n, w_sqkv_ref[blk], preferred_element_type=jnp.float32)
        att = _attend(qkv[:, :hq], qkv[:, hq:2 * hq], qkv[:, 2 * hq:],
                      causal_mask, H=H, dk=dk, dv=dv)
        # heads-concat + output projection as one matmul
        x_masked = jnp.dot(att, w_o_ref[2 * blk],
                           preferred_element_type=jnp.float32)
        current = x + x_masked

        # ---- cross-attention (Q from decoder stream, K/V precomputed) ----
        current_n = _layernorm(current)
        q_all = jnp.dot(current_n, w_cq_ref[blk],
                        preferred_element_type=jnp.float32)
        kv = kv_all[:, blk * hkv:(blk + 1) * hkv]
        att = _attend(q_all, kv[:, :hq], kv[:, hq:], None, H=H, dk=dk, dv=dv)
        cross = jnp.dot(att, w_o_ref[2 * blk + 1],
                        preferred_element_type=jnp.float32)
        result = current + cross

        # ---- feed-forward + residual ----
        result_n = _layernorm(result)
        h1 = jnp.dot(result_n, w1_ref[blk],
                     preferred_element_type=jnp.float32) + b1_ref[blk]
        h1 = jnp.maximum(h1, 0.0)
        ff = jnp.dot(h1, w2_ref[blk],
                     preferred_element_type=jnp.float32) + b2_ref[blk]
        x = result + ff

    o_ref[0] = x


# ------------------------------ Pallas wrapper ------------------------------ #

def _pack_params(params):
    # Pack the 36 logical weights into 8 stacked slabs (static leading-axis
    # indexing in-kernel; no lane-offset loads, far fewer DMA descriptors).
    blocks = [params["block1"], params["block2"], params["block3"]]
    w_sqkv = jnp.stack([jnp.concatenate(
        [b["self_attn"]["wq"], b["self_attn"]["wk"], b["self_attn"]["wv"]],
        axis=1) for b in blocks])                                   # (3, D, H*(2dk+dv))
    w_cq = jnp.stack([b["cross_attn"]["wq"] for b in blocks])       # (3, D, H*dk)
    w_ckv = jnp.concatenate(
        [jnp.concatenate([b["cross_attn"]["wk"], b["cross_attn"]["wv"]], axis=1)
         for b in blocks], axis=1)                                  # (D, 3*(H*dk+H*dv))
    w_o = jnp.stack([w for b in blocks
                     for w in (b["self_attn"]["wo"],
                               b["cross_attn"]["wo"])])             # (6, H*dv, D)
    w1 = jnp.stack([b["ffn"]["w1"] for b in blocks])                # (3, D, dff)
    b1 = jnp.stack([b["ffn"]["b1"] for b in blocks])                # (3, 1, dff)
    w2 = jnp.stack([b["ffn"]["w2"] for b in blocks])                # (3, dff, D)
    b2 = jnp.stack([b["ffn"]["b2"] for b in blocks])                # (3, 1, D)
    return [w_sqkv, w_cq, w_ckv, w_o, w1, b1, w2, b2]


def decoder_fwd(params, x_enc, x_dec, *, h, dk, dv):
    B, L, D = x_dec.shape
    packed = _pack_params(params)
    kern = functools.partial(_decoder_kernel, H=h, dk=dk, dv=dv,
                             nblocks=_NBLOCKS)

    act_spec = pl.BlockSpec((1, L, D), lambda b: (b, 0, 0))

    def _const_map(ndim):
        # constant block index across the grid -> weights stay VMEM-resident
        return lambda b: (0,) * ndim

    w_specs = [pl.BlockSpec(w.shape, _const_map(w.ndim)) for w in packed]

    # grid=(B,) "parallel": lets v7x's two TensorCores each take a batch
    # element; on single-TC v5e/v6e the extra grid step costs ~0.35us.
    return pl.pallas_call(
        kern,
        out_shape=jax.ShapeDtypeStruct((B, L, D), jnp.float32),
        grid=(B,),
        in_specs=[act_spec, act_spec] + w_specs,
        out_specs=pl.BlockSpec((1, L, D), lambda b: (b, 0, 0)),
        compiler_params=pltpu.CompilerParams(
            dimension_semantics=("parallel",)),
    )(x_enc, x_dec, *packed)


# --------------------------- Deterministic params --------------------------- #

def _init_attn(key, h, dmodel, dk, dv):
    # per-head weights stacked along the output (lane) axis:
    # head `i` owns columns [i*dk:(i+1)*dk] of wq/wk and [i*dv:(i+1)*dv] of wv,
    # and rows [i*dv:(i+1)*dv] of wo -- identical math to per-head nn.Linear.
    k1, k2, k3, k4 = jax.random.split(key, 4)
    s_in = 1.0 / math.sqrt(dmodel)
    s_o = 1.0 / math.sqrt(h * dv)
    return {
        "wq": jax.random.normal(k1, (dmodel, h * dk), jnp.float32) * s_in,
        "wk": jax.random.normal(k2, (dmodel, h * dk), jnp.float32) * s_in,
        "wv": jax.random.normal(k3, (dmodel, h * dv), jnp.float32) * s_in,
        "wo": jax.random.normal(k4, (h * dv, dmodel), jnp.float32) * s_o,
    }


def _init_ffn(key, dmodel, dff):
    k1, k2, k3, k4 = jax.random.split(key, 4)
    return {
        "w1": jax.random.normal(k1, (dmodel, dff), jnp.float32) / math.sqrt(dmodel),
        "b1": jax.random.normal(k2, (1, dff), jnp.float32) * 0.01,
        "w2": jax.random.normal(k3, (dff, dmodel), jnp.float32) / math.sqrt(dff),
        "b2": jax.random.normal(k4, (1, dmodel), jnp.float32) * 0.01,
    }


def _init_block(key, h, dmodel, dk, dv, dff):
    k1, k2, k3 = jax.random.split(key, 3)
    return {
        "self_attn": _init_attn(k1, h, dmodel, dk, dv),
        "cross_attn": _init_attn(k2, h, dmodel, dk, dv),
        "ffn": _init_ffn(k3, dmodel, dff),
    }


def init_decoder_params(key, h, dmodel, dk, dv, dff):
    k1, k2, k3 = jax.random.split(key, 3)
    return {
        "block1": _init_block(k1, h, dmodel, dk, dv, dff),
        "block2": _init_block(k2, h, dmodel, dk, dv, dff),
        "block3": _init_block(k3, h, dmodel, dk, dv, dff),
    }


# ---------------------------------- Main ------------------------------------ #

if __name__ == "__main__":
    B, L = 2, 8
    H, DMODEL, DK, DV, DFF = 2, 32, 8, 8, 64

    root = jax.random.PRNGKey(0)
    kp, ke, kd = jax.random.split(root, 3)

    params = init_decoder_params(kp, H, DMODEL, DK, DV, DFF)
    x_enc = jax.random.normal(ke, (B, L, DMODEL), jnp.float32)
    x_dec = jax.random.normal(kd, (B, L, DMODEL), jnp.float32)

    fwd = jax.jit(functools.partial(decoder_fwd, h=H, dk=DK, dv=DV))
    out = fwd(params, x_enc, x_dec)
    out = jax.block_until_ready(out)

    assert out.shape == (B, L, DMODEL)
    assert bool(jnp.all(jnp.isfinite(out)))
    print("KERNEL_OK")
</pallas_src>

<mosaic_0001>
module attributes {stable_mosaic.version = 11 : i64} {
  func.func @_decoder_kernel(%arg0: i32, %arg1: memref<1x8x32xf32, #tpu.memory_space<vmem>>, %arg2: memref<1x8x32xf32, #tpu.memory_space<vmem>>, %arg3: memref<3x32x48xf32, #tpu.memory_space<vmem>>, %arg4: memref<3x32x16xf32, #tpu.memory_space<vmem>>, %arg5: memref<32x96xf32, #tpu.memory_space<vmem>>, %arg6: memref<6x16x32xf32, #tpu.memory_space<vmem>>, %arg7: memref<3x32x64xf32, #tpu.memory_space<vmem>>, %arg8: memref<3x1x64xf32, #tpu.memory_space<vmem>>, %arg9: memref<3x64x32xf32, #tpu.memory_space<vmem>>, %arg10: memref<3x1x32xf32, #tpu.memory_space<vmem>>, %arg11: memref<1x8x32xf32, #tpu.memory_space<vmem>>) attributes {dimension_semantics = [#tpu.dimension_semantics<parallel>], iteration_bounds = array<i64: 2>, scalar_prefetch = 0 : i64, scratch_operands = 0 : i64, tpu.core_type = #tpu.core_type<tc>, window_params = [{transform_indices = @transform_0, window_bounds = array<i64: 1, 8, 32>}, {transform_indices = @transform_1, window_bounds = array<i64: 1, 8, 32>}, {pipeline_mode = #tpu.pipeline_mode<synchronous>, transform_indices = @transform_2, window_bounds = array<i64: 3, 32, 48>}, {pipeline_mode = #tpu.pipeline_mode<synchronous>, transform_indices = @transform_3, window_bounds = array<i64: 3, 32, 16>}, {pipeline_mode = #tpu.pipeline_mode<synchronous>, transform_indices = @transform_4, window_bounds = array<i64: 32, 96>}, {pipeline_mode = #tpu.pipeline_mode<synchronous>, transform_indices = @transform_5, window_bounds = array<i64: 6, 16, 32>}, {pipeline_mode = #tpu.pipeline_mode<synchronous>, transform_indices = @transform_6, window_bounds = array<i64: 3, 32, 64>}, {pipeline_mode = #tpu.pipeline_mode<synchronous>, transform_indices = @transform_7, window_bounds = array<i64: 3, 1, 64>}, {pipeline_mode = #tpu.pipeline_mode<synchronous>, transform_indices = @transform_8, window_bounds = array<i64: 3, 64, 32>}, {pipeline_mode = #tpu.pipeline_mode<synchronous>, transform_indices = @transform_9, window_bounds = array<i64: 3, 1, 32>}, {transform_indices = @transform_10, window_bounds = array<i64: 1, 8, 32>}]} {
    %c0 = arith.constant 0 : index
    %c0_0 = arith.constant 0 : index
    %c0_1 = arith.constant 0 : index
    %0 = vector.load %arg1[%c0, %c0_0, %c0_1] : memref<1x8x32xf32, #tpu.memory_space<vmem>>, vector<1x8x32xf32>
    %1 = vector.shape_cast %0 : vector<1x8x32xf32> to vector<8x32xf32>
    %c0_2 = arith.constant 0 : index
    %c0_3 = arith.constant 0 : index
    %c0_4 = arith.constant 0 : index
    %2 = vector.load %arg2[%c0_2, %c0_3, %c0_4] : memref<1x8x32xf32, #tpu.memory_space<vmem>>, vector<1x8x32xf32>
    %3 = vector.shape_cast %2 : vector<1x8x32xf32> to vector<8x32xf32>
    %4 = vector.shape_cast %1 : vector<8x32xf32> to vector<1x8x32xf32>
    %cst = arith.constant dense<0.000000e+00> : vector<1xf32>
    %5 = vector.multi_reduction <add>, %4, %cst [1, 2] : vector<1x8x32xf32> to vector<1xf32>
    %6 = vector.shape_cast %5 : vector<1xf32> to vector<1x1x1xf32>
    %7 = vector.extract %6[0, 0, 0] : f32 from vector<1x1x1xf32>
    %cst_5 = arith.constant 2.560000e+02 : f32
    %8 = arith.divf %7, %cst_5 : f32
    %9 = arith.mulf %1, %1 : vector<8x32xf32>
    %10 = vector.shape_cast %9 : vector<8x32xf32> to vector<1x8x32xf32>
    %cst_6 = arith.constant dense<0.000000e+00> : vector<1xf32>
    %11 = vector.multi_reduction <add>, %10, %cst_6 [1, 2] : vector<1x8x32xf32> to vector<1xf32>
    %12 = vector.shape_cast %11 : vector<1xf32> to vector<1x1x1xf32>
    %13 = vector.extract %12[0, 0, 0] : f32 from vector<1x1x1xf32>
    %cst_7 = arith.constant 2.560000e+02 : f32
    %14 = arith.divf %13, %cst_7 : f32
    %15 = arith.mulf %8, %8 : f32
    %16 = arith.subf %14, %15 : f32
    %cst_8 = arith.constant 0.000000e+00 : f32
    %17 = arith.maximumf %16, %cst_8 : f32
    %18 = vector.broadcast %8 : f32 to vector<8x32xf32>
    %19 = arith.subf %1, %18 : vector<8x32xf32>
    %cst_9 = arith.constant 9.99999974E-6 : f32
    %20 = arith.addf %17, %cst_9 : f32
    %21 = math.rsqrt %20 : f32
    %22 = vector.broadcast %21 : f32 to vector<8x32xf32>
    %23 = arith.mulf %19, %22 : vector<8x32xf32>
    %c0_10 = arith.constant 0 : index
    %c0_11 = arith.constant 0 : index
    %24 = vector.load %arg5[%c0_10, %c0_11] : memref<32x96xf32, #tpu.memory_space<vmem>>, vector<32x96xf32>
    %cst_12 = arith.constant dense<0.000000e+00> : vector<8x96xf32>
    %25 = tpu.matmul %23, %24, %cst_12 {dimension_numbers = #tpu.dot_dimension_numbers<[1], [0], [0], [1], [0, 0, 1, 1], [], []>} : vector<8x32xf32>, vector<32x96xf32>, vector<8x96xf32> -> vector<8x96xf32>
    %26 = tpu.iota {dimensions = array<i32: 0>} : vector<8x8xi32>
    %27 = tpu.iota {dimensions = array<i32: 1>} : vector<8x8xi32>
    %28 = arith.cmpi sgt, %27, %26 : vector<8x8xi32>
    %cst_13 = arith.constant 0xFF800000 : f32
    %cst_14 = arith.constant 0.000000e+00 : f32
    %29 = vector.broadcast %cst_13 : f32 to vector<8x8xf32>
    %30 = vector.broadcast %cst_14 : f32 to vector<8x8xf32>
    %31 = arith.select %28, %29, %30 : vector<8x8xi1>, vector<8x8xf32>
    %32 = vector.shape_cast %3 : vector<8x32xf32> to vector<1x8x32xf32>
    %cst_15 = arith.constant dense<0.000000e+00> : vector<1xf32>
    %33 = vector.multi_reduction <add>, %32, %cst_15 [1, 2] : vector<1x8x32xf32> to vector<1xf32>
    %34 = vector.shape_cast %33 : vector<1xf32> to vector<1x1x1xf32>
    %35 = vector.extract %34[0, 0, 0] : f32 from vector<1x1x1xf32>
    %cst_16 = arith.constant 2.560000e+02 : f32
    %36 = arith.divf %35, %cst_16 : f32
    %37 = arith.mulf %3, %3 : vector<8x32xf32>
    %38 = vector.shape_cast %37 : vector<8x32xf32> to vector<1x8x32xf32>
    %cst_17 = arith.constant dense<0.000000e+00> : vector<1xf32>
    %39 = vector.multi_reduction <add>, %38, %cst_17 [1, 2] : vector<1x8x32xf32> to vector<1xf32>
    %40 = vector.shape_cast %39 : vector<1xf32> to vector<1x1x1xf32>
    %41 = vector.extract %40[0, 0, 0] : f32 from vector<1x1x1xf32>
    %cst_18 = arith.constant 2.560000e+02 : f32
    %42 = arith.divf %41, %cst_18 : f32
    %43 = arith.mulf %36, %36 : f32
    %44 = arith.subf %42, %43 : f32
    %cst_19 = arith.constant 0.000000e+00 : f32
    %45 = arith.maximumf %44, %cst_19 : f32
    %46 = vector.broadcast %36 : f32 to vector<8x32xf32>
    %47 = arith.subf %3, %46 : vector<8x32xf32>
    %cst_20 = arith.constant 9.99999974E-6 : f32
    %48 = arith.addf %45, %cst_20 : f32
    %49 = math.rsqrt %48 : f32
    %50 = vector.broadcast %49 : f32 to vector<8x32xf32>
    %51 = arith.mulf %47, %50 : vector<8x32xf32>
    %c0_21 = arith.constant 0 : index
    %c0_22 = arith.constant 0 : index
    %c0_23 = arith.constant 0 : index
    %52 = vector.load %arg3[%c0_21, %c0_22, %c0_23] : memref<3x32x48xf32, #tpu.memory_space<vmem>>, vector<1x32x48xf32>
    %53 = vector.shape_cast %52 : vector<1x32x48xf32> to vector<32x48xf32>
    %cst_24 = arith.constant dense<0.000000e+00> : vector<8x48xf32>
    %54 = tpu.matmul %51, %53, %cst_24 {dimension_numbers = #tpu.dot_dimension_numbers<[1], [0], [0], [1], [0, 0, 1, 1], [], []>} : vector<8x32xf32>, vector<32x48xf32>, vector<8x48xf32> -> vector<8x48xf32>
    %55 = vector.extract_strided_slice %54 {offsets = [0, 0], sizes = [8, 16], strides = [1, 1]} : vector<8x48xf32> to vector<8x16xf32>
    %56 = vector.extract_strided_slice %54 {offsets = [0, 16], sizes = [8, 16], strides = [1, 1]} : vector<8x48xf32> to vector<8x16xf32>
    %57 = vector.extract_strided_slice %54 {offsets = [0, 32], sizes = [8, 16], strides = [1, 1]} : vector<8x48xf32> to vector<8x16xf32>
    %58 = vector.extract_strided_slice %55 {offsets = [0, 0], sizes = [8, 8], strides = [1, 1]} : vector<8x16xf32> to vector<8x8xf32>
    %59 = vector.extract_strided_slice %56 {offsets = [0, 0], sizes = [8, 8], strides = [1, 1]} : vector<8x16xf32> to vector<8x8xf32>
    %60 = vector.extract_strided_slice %57 {offsets = [0, 0], sizes = [8, 8], strides = [1, 1]} : vector<8x16xf32> to vector<8x8xf32>
    %cst_25 = arith.constant dense<0.000000e+00> : vector<8x8xf32>
    %61 = tpu.matmul %58, %59, %cst_25 {dimension_numbers = #tpu.dot_dimension_numbers<[1], [1], [0], [0], [0, 0, 1, 0], [], []>} : vector<8x8xf32>, vector<8x8xf32>, vector<8x8xf32> -> vector<8x8xf32>
    %cst_26 = arith.constant 0.353553385 : f32
    %62 = vector.broadcast %cst_26 : f32 to vector<8x8xf32>
    %63 = arith.mulf %61, %62 : vector<8x8xf32>
    %64 = arith.addf %63, %31 : vector<8x8xf32>
    %cst_27 = arith.constant dense<0xFF800000> : vector<8xf32>
    %65 = vector.multi_reduction <maximumf>, %64, %cst_27 [1] : vector<8x8xf32> to vector<8xf32>
    %66 = vector.shape_cast %65 : vector<8xf32> to vector<8x1xf32>
    %67 = vector.broadcast %66 : vector<8x1xf32> to vector<8x8xf32>
    %68 = arith.subf %64, %67 : vector<8x8xf32>
    %69 = math.exp %68 : vector<8x8xf32>
    %cst_28 = arith.constant dense<0.000000e+00> : vector<8xf32>
    %70 = vector.multi_reduction <add>, %69, %cst_28 [1] : vector<8x8xf32> to vector<8xf32>
    %71 = vector.shape_cast %70 : vector<8xf32> to vector<8x1xf32>
    %72 = tpu.reciprocal %71 {approx = true} : vector<8x1xf32> -> vector<8x1xf32>
    %73 = vector.broadcast %72 : vector<8x1xf32> to vector<8x8xf32>
    %74 = arith.mulf %69, %73 : vector<8x8xf32>
    %cst_29 = arith.constant dense<0.000000e+00> : vector<8x8xf32>
    %75 = tpu.matmul %74, %60, %cst_29 {dimension_numbers = #tpu.dot_dimension_numbers<[1], [0], [0], [1], [0, 0, 1, 1], [], []>} : vector<8x8xf32>, vector<8x8xf32>, vector<8x8xf32> -> vector<8x8xf32>
    %76 = vector.extract_strided_slice %55 {offsets = [0, 8], sizes = [8, 8], strides = [1, 1]} : vector<8x16xf32> to vector<8x8xf32>
    %77 = vector.extract_strided_slice %56 {offsets = [0, 8], sizes = [8, 8], strides = [1, 1]} : vector<8x16xf32> to vector<8x8xf32>
    %78 = vector.extract_strided_slice %57 {offsets = [0, 8], sizes = [8, 8], strides = [1, 1]} : vector<8x16xf32> to vector<8x8xf32>
    %cst_30 = arith.constant dense<0.000000e+00> : vector<8x8xf32>
    %79 = tpu.matmul %76, %77, %cst_30 {dimension_numbers = #tpu.dot_dimension_numbers<[1], [1], [0], [0], [0, 0, 1, 0], [], []>} : vector<8x8xf32>, vector<8x8xf32>, vector<8x8xf32> -> vector<8x8xf32>
    %cst_31 = arith.constant 0.353553385 : f32
    %80 = vector.broadcast %cst_31 : f32 to vector<8x8xf32>
    %81 = arith.mulf %79, %80 : vector<8x8xf32>
    %82 = arith.addf %81, %31 : vector<8x8xf32>
    %cst_32 = arith.constant dense<0xFF800000> : vector<8xf32>
    %83 = vector.multi_reduction <maximumf>, %82, %cst_32 [1] : vector<8x8xf32> to vector<8xf32>
    %84 = vector.shape_cast %83 : vector<8xf32> to vector<8x1xf32>
    %85 = vector.broadcast %84 : vector<8x1xf32> to vector<8x8xf32>
    %86 = arith.subf %82, %85 : vector<8x8xf32>
    %87 = math.exp %86 : vector<8x8xf32>
    %cst_33 = arith.constant dense<0.000000e+00> : vector<8xf32>
    %88 = vector.multi_reduction <add>, %87, %cst_33 [1] : vector<8x8xf32> to vector<8xf32>
    %89 = vector.shape_cast %88 : vector<8xf32> to vector<8x1xf32>
    %90 = tpu.reciprocal %89 {approx = true} : vector<8x1xf32> -> vector<8x1xf32>
    %91 = vector.broadcast %90 : vector<8x1xf32> to vector<8x8xf32>
    %92 = arith.mulf %87, %91 : vector<8x8xf32>
    %cst_34 = arith.constant dense<0.000000e+00> : vector<8x8xf32>
    %93 = tpu.matmul %92, %78, %cst_34 {dimension_numbers = #tpu.dot_dimension_numbers<[1], [0], [0], [1], [0, 0, 1, 1], [], []>} : vector<8x8xf32>, vector<8x8xf32>, vector<8x8xf32> -> vector<8x8xf32>
    %94 = tpu.concatenate %75, %93 in 1 : vector<8x8xf32>, vector<8x8xf32> -> vector<8x16xf32>
    %c0_35 = arith.constant 0 : index
    %c0_36 = arith.constant 0 : index
    %c0_37 = arith.constant 0 : index
    %95 = vector.load %arg6[%c0_35, %c0_36, %c0_37] : memref<6x16x32xf32, #tpu.memory_space<vmem>>, vector<1x16x32xf32>
    %96 = vector.shape_cast %95 : vector<1x16x32xf32> to vector<16x32xf32>
    %cst_38 = arith.constant dense<0.000000e+00> : vector<8x32xf32>
    %97 = tpu.matmul %94, %96, %cst_38 {dimension_numbers = #tpu.dot_dimension_numbers<[1], [0], [0], [1], [0, 0, 1, 1], [], []>} : vector<8x16xf32>, vector<16x32xf32>, vector<8x32xf32> -> vector<8x32xf32>
    %98 = arith.addf %3, %97 : vector<8x32xf32>
    %99 = vector.shape_cast %98 : vector<8x32xf32> to vector<1x8x32xf32>
    %cst_39 = arith.constant dense<0.000000e+00> : vector<1xf32>
    %100 = vector.multi_reduction <add>, %99, %cst_39 [1, 2] : vector<1x8x32xf32> to vector<1xf32>
    %101 = vector.shape_cast %100 : vector<1xf32> to vector<1x1x1xf32>
    %102 = vector.extract %101[0, 0, 0] : f32 from vector<1x1x1xf32>
    %cst_40 = arith.constant 2.560000e+02 : f32
    %103 = arith.divf %102, %cst_40 : f32
    %104 = arith.mulf %98, %98 : vector<8x32xf32>
    %105 = vector.shape_cast %104 : vector<8x32xf32> to vector<1x8x32xf32>
    %cst_41 = arith.constant dense<0.000000e+00> : vector<1xf32>
    %106 = vector.multi_reduction <add>, %105, %cst_41 [1, 2] : vector<1x8x32xf32> to vector<1xf32>
    %107 = vector.shape_cast %106 : vector<1xf32> to vector<1x1x1xf32>
    %108 = vector.extract %107[0, 0, 0] : f32 from vector<1x1x1xf32>
    %cst_42 = arith.constant 2.560000e+02 : f32
    %109 = arith.divf %108, %cst_42 : f32
    %110 = arith.mulf %103, %103 : f32
    %111 = arith.subf %109, %110 : f32
    %cst_43 = arith.constant 0.000000e+00 : f32
    %112 = arith.maximumf %111, %cst_43 : f32
    %113 = vector.broadcast %103 : f32 to vector<8x32xf32>
    %114 = arith.subf %98, %113 : vector<8x32xf32>
    %cst_44 = arith.constant 9.99999974E-6 : f32
    %115 = arith.addf %112, %cst_44 : f32
    %116 = math.rsqrt %115 : f32
    %117 = vector.broadcast %116 : f32 to vector<8x32xf32>
    %118 = arith.mulf %114, %117 : vector<8x32xf32>
    %c0_45 = arith.constant 0 : index
    %c0_46 = arith.constant 0 : index
    %c0_47 = arith.constant 0 : index
    %119 = vector.load %arg4[%c0_45, %c0_46, %c0_47] : memref<3x32x16xf32, #tpu.memory_space<vmem>>, vector<1x32x16xf32>
    %120 = vector.shape_cast %119 : vector<1x32x16xf32> to vector<32x16xf32>
    %cst_48 = arith.constant dense<0.000000e+00> : vector<8x16xf32>
    %121 = tpu.matmul %118, %120, %cst_48 {dimension_numbers = #tpu.dot_dimension_numbers<[1], [0], [0], [1], [0, 0, 1, 1], [], []>} : vector<8x32xf32>, vector<32x16xf32>, vector<8x16xf32> -> vector<8x16xf32>
    %122 = vector.extract_strided_slice %25 {offsets = [0, 0], sizes = [8, 32], strides = [1, 1]} : vector<8x96xf32> to vector<8x32xf32>
    %123 = vector.extract_strided_slice %122 {offsets = [0, 0], sizes = [8, 16], strides = [1, 1]} : vector<8x32xf32> to vector<8x16xf32>
    %124 = vector.extract_strided_slice %122 {offsets = [0, 16], sizes = [8, 16], strides = [1, 1]} : vector<8x32xf32> to vector<8x16xf32>
    %125 = vector.extract_strided_slice %121 {offsets = [0, 0], sizes = [8, 8], strides = [1, 1]} : vector<8x16xf32> to vector<8x8xf32>
    %126 = vector.extract_strided_slice %123 {offsets = [0, 0], sizes = [8, 8], strides = [1, 1]} : vector<8x16xf32> to vector<8x8xf32>
    %127 = vector.extract_strided_slice %124 {offsets = [0, 0], sizes = [8, 8], strides = [1, 1]} : vector<8x16xf32> to vector<8x8xf32>
    %cst_49 = arith.constant dense<0.000000e+00> : vector<8x8xf32>
    %128 = tpu.matmul %125, %126, %cst_49 {dimension_numbers = #tpu.dot_dimension_numbers<[1], [1], [0], [0], [0, 0, 1, 0], [], []>} : vector<8x8xf32>, vector<8x8xf32>, vector<8x8xf32> -> vector<8x8xf32>
    %cst_50 = arith.constant 0.353553385 : f32
    %129 = vector.broadcast %cst_50 : f32 to vector<8x8xf32>
    %130 = arith.mulf %128, %129 : vector<8x8xf32>
    %cst_51 = arith.constant dense<0xFF800000> : vector<8xf32>
    %131 = vector.multi_reduction <maximumf>, %130, %cst_51 [1] : vector<8x8xf32> to vector<8xf32>
    %132 = vector.shape_cast %131 : vector<8xf32> to vector<8x1xf32>
    %133 = vector.broadcast %132 : vector<8x1xf32> to vector<8x8xf32>
    %134 = arith.subf %130, %133 : vector<8x8xf32>
    %135 = math.exp %134 : vector<8x8xf32>
    %cst_52 = arith.constant dense<0.000000e+00> : vector<8xf32>
    %136 = vector.multi_reduction <add>, %135, %cst_52 [1] : vector<8x8xf32> to vector<8xf32>
    %137 = vector.shape_cast %136 : vector<8xf32> to vector<8x1xf32>
    %138 = tpu.reciprocal %137 {approx = true} : vector<8x1xf32> -> vector<8x1xf32>
    %139 = vector.broadcast %138 : vector<8x1xf32> to vector<8x8xf32>
    %140 = arith.mulf %135, %139 : vector<8x8xf32>
    %cst_53 = arith.constant dense<0.000000e+00> : vector<8x8xf32>
    %141 = tpu.matmul %140, %127, %cst_53 {dimension_numbers = #tpu.dot_dimension_numbers<[1], [0], [0], [1], [0, 0, 1, 1], [], []>} : vector<8x8xf32>, vector<8x8xf32>, vector<8x8xf32> -> vector<8x8xf32>
    %142 = vector.extract_strided_slice %121 {offsets = [0, 8], sizes = [8, 8], strides = [1, 1]} : vector<8x16xf32> to vector<8x8xf32>
    %143 = vector.extract_strided_slice %123 {offsets = [0, 8], sizes = [8, 8], strides = [1, 1]} : vector<8x16xf32> to vector<8x8xf32>
    %144 = vector.extract_strided_slice %124 {offsets = [0, 8], sizes = [8, 8], strides = [1, 1]} : vector<8x16xf32> to vector<8x8xf32>
    %cst_54 = arith.constant dense<0.000000e+00> : vector<8x8xf32>
    %145 = tpu.matmul %142, %143, %cst_54 {dimension_numbers = #tpu.dot_dimension_numbers<[1], [1], [0], [0], [0, 0, 1, 0], [], []>} : vector<8x8xf32>, vector<8x8xf32>, vector<8x8xf32> -> vector<8x8xf32>
    %cst_55 = arith.constant 0.353553385 : f32
    %146 = vector.broadcast %cst_55 : f32 to vector<8x8xf32>
    %147 = arith.mulf %145, %146 : vector<8x8xf32>
    %cst_56 = arith.constant dense<0xFF800000> : vector<8xf32>
    %148 = vector.multi_reduction <maximumf>, %147, %cst_56 [1] : vector<8x8xf32> to vector<8xf32>
    %149 = vector.shape_cast %148 : vector<8xf32> to vector<8x1xf32>
    %150 = vector.broadcast %149 : vector<8x1xf32> to vector<8x8xf32>
    %151 = arith.subf %147, %150 : vector<8x8xf32>
    %152 = math.exp %151 : vector<8x8xf32>
    %cst_57 = arith.constant dense<0.000000e+00> : vector<8xf32>
    %153 = vector.multi_reduction <add>, %152, %cst_57 [1] : vector<8x8xf32> to vector<8xf32>
    %154 = vector.shape_cast %153 : vector<8xf32> to vector<8x1xf32>
    %155 = tpu.reciprocal %154 {approx = true} : vector<8x1xf32> -> vector<8x1xf32>
    %156 = vector.broadcast %155 : vector<8x1xf32> to vector<8x8xf32>
    %157 = arith.mulf %152, %156 : vector<8x8xf32>
    %cst_58 = arith.constant dense<0.000000e+00> : vector<8x8xf32>
    %158 = tpu.matmul %157, %144, %cst_58 {dimension_numbers = #tpu.dot_dimension_numbers<[1], [0], [0], [1], [0, 0, 1, 1], [], []>} : vector<8x8xf32>, vector<8x8xf32>, vector<8x8xf32> -> vector<8x8xf32>
    %159 = tpu.concatenate %141, %158 in 1 : vector<8x8xf32>, vector<8x8xf32> -> vector<8x16xf32>
    %c1 = arith.constant 1 : index
    %c0_59 = arith.constant 0 : index
    %c0_60 = arith.constant 0 : index
    %160 = vector.load %arg6[%c1, %c0_59, %c0_60] : memref<6x16x32xf32, #tpu.memory_space<vmem>>, vector<1x16x32xf32>
    %161 = vector.shape_cast %160 : vector<1x16x32xf32> to vector<16x32xf32>
    %cst_61 = arith.constant dense<0.000000e+00> : vector<8x32xf32>
    %162 = tpu.matmul %159, %161, %cst_61 {dimension_numbers = #tpu.dot_dimension_numbers<[1], [0], [0], [1], [0, 0, 1, 1], [], []>} : vector<8x16xf32>, vector<16x32xf32>, vector<8x32xf32> -> vector<8x32xf32>
    %163 = arith.addf %98, %162 : vector<8x32xf32>
    %164 = vector.shape_cast %163 : vector<8x32xf32> to vector<1x8x32xf32>
    %cst_62 = arith.constant dense<0.000000e+00> : vector<1xf32>
    %165 = vector.multi_reduction <add>, %164, %cst_62 [1, 2] : vector<1x8x32xf32> to vector<1xf32>
    %166 = vector.shape_cast %165 : vector<1xf32> to vector<1x1x1xf32>
    %167 = vector.extract %166[0, 0, 0] : f32 from vector<1x1x1xf32>
    %cst_63 = arith.constant 2.560000e+02 : f32
    %168 = arith.divf %167, %cst_63 : f32
    %169 = arith.mulf %163, %163 : vector<8x32xf32>
    %170 = vector.shape_cast %169 : vector<8x32xf32> to vector<1x8x32xf32>
    %cst_64 = arith.constant dense<0.000000e+00> : vector<1xf32>
    %171 = vector.multi_reduction <add>, %170, %cst_64 [1, 2] : vector<1x8x32xf32> to vector<1xf32>
    %172 = vector.shape_cast %171 : vector<1xf32> to vector<1x1x1xf32>
    %173 = vector.extract %172[0, 0, 0] : f32 from vector<1x1x1xf32>
    %cst_65 = arith.constant 2.560000e+02 : f32
    %174 = arith.divf %173, %cst_65 : f32
    %175 = arith.mulf %168, %168 : f32
    %176 = arith.subf %174, %175 : f32
    %cst_66 = arith.constant 0.000000e+00 : f32
    %177 = arith.maximumf %176, %cst_66 : f32
    %178 = vector.broadcast %168 : f32 to vector<8x32xf32>
    %179 = arith.subf %163, %178 : vector<8x32xf32>
    %cst_67 = arith.constant 9.99999974E-6 : f32
    %180 = arith.addf %177, %cst_67 : f32
    %181 = math.rsqrt %180 : f32
    %182 = vector.broadcast %181 : f32 to vector<8x32xf32>
    %183 = arith.mulf %179, %182 : vector<8x32xf32>
    %c0_68 = arith.constant 0 : index
    %c0_69 = arith.constant 0 : index
    %c0_70 = arith.constant 0 : index
    %184 = vector.load %arg7[%c0_68, %c0_69, %c0_70] : memref<3x32x64xf32, #tpu.memory_space<vmem>>, vector<1x32x64xf32>
    %185 = vector.shape_cast %184 : vector<1x32x64xf32> to vector<32x64xf32>
    %cst_71 = arith.constant dense<0.000000e+00> : vector<8x64xf32>
    %186 = tpu.matmul %183, %185, %cst_71 {dimension_numbers = #tpu.dot_dimension_numbers<[1], [0], [0], [1], [0, 0, 1, 1], [], []>} : vector<8x32xf32>, vector<32x64xf32>, vector<8x64xf32> -> vector<8x64xf32>
    %c0_72 = arith.constant 0 : index
    %c0_73 = arith.constant 0 : index
    %c0_74 = arith.constant 0 : index
    %187 = vector.load %arg8[%c0_72, %c0_73, %c0_74] : memref<3x1x64xf32, #tpu.memory_space<vmem>>, vector<1x1x64xf32>
    %188 = vector.shape_cast %187 : vector<1x1x64xf32> to vector<1x64xf32>
    %189 = vector.broadcast %188 : vector<1x64xf32> to vector<8x64xf32>
    %190 = arith.addf %186, %189 : vector<8x64xf32>
    %cst_75 = arith.constant 0.000000e+00 : f32
    %191 = vector.broadcast %cst_75 : f32 to vector<8x64xf32>
    %192 = arith.maximumf %190, %191 : vector<8x64xf32>
    %c0_76 = arith.constant 0 : index
    %c0_77 = arith.constant 0 : index
    %c0_78 = arith.constant 0 : index
    %193 = vector.load %arg9[%c0_76, %c0_77, %c0_78] : memref<3x64x32xf32, #tpu.memory_space<vmem>>, vector<1x64x32xf32>
    %194 = vector.shape_cast %193 : vector<1x64x32xf32> to vector<64x32xf32>
    %cst_79 = arith.constant dense<0.000000e+00> : vector<8x32xf32>
    %195 = tpu.matmul %192, %194, %cst_79 {dimension_numbers = #tpu.dot_dimension_numbers<[1], [0], [0], [1], [0, 0, 1, 1], [], []>} : vector<8x64xf32>, vector<64x32xf32>, vector<8x32xf32> -> vector<8x32xf32>
    %c0_80 = arith.constant 0 : index
    %c0_81 = arith.constant 0 : index
    %c0_82 = arith.constant 0 : index
    %196 = vector.load %arg10[%c0_80, %c0_81, %c0_82] : memref<3x1x32xf32, #tpu.memory_space<vmem>>, vector<1x1x32xf32>
    %197 = vector.shape_cast %196 : vector<1x1x32xf32> to vector<1x32xf32>
    %198 = vector.broadcast %197 : vector<1x32xf32> to vector<8x32xf32>
    %199 = arith.addf %195, %198 : vector<8x32xf32>
    %200 = arith.addf %163, %199 : vector<8x32xf32>
    %201 = vector.shape_cast %200 : vector<8x32xf32> to vector<1x8x32xf32>
    %cst_83 = arith.constant dense<0.000000e+00> : vector<1xf32>
    %202 = vector.multi_reduction <add>, %201, %cst_83 [1, 2] : vector<1x8x32xf32> to vector<1xf32>
    %203 = vector.shape_cast %202 : vector<1xf32> to vector<1x1x1xf32>
    %204 = vector.extract %203[0, 0, 0] : f32 from vector<1x1x1xf32>
    %cst_84 = arith.constant 2.560000e+02 : f32
    %205 = arith.divf %204, %cst_84 : f32
    %206 = arith.mulf %200, %200 : vector<8x32xf32>
    %207 = vector.shape_cast %206 : vector<8x32xf32> to vector<1x8x32xf32>
    %cst_85 = arith.constant dense<0.000000e+00> : vector<1xf32>
    %208 = vector.multi_reduction <add>, %207, %cst_85 [1, 2] : vector<1x8x32xf32> to vector<1xf32>
    %209 = vector.shape_cast %208 : vector<1xf32> to vector<1x1x1xf32>
    %210 = vector.extract %209[0, 0, 0] : f32 from vector<1x1x1xf32>
    %cst_86 = arith.constant 2.560000e+02 : f32
    %211 = arith.divf %210, %cst_86 : f32
    %212 = arith.mulf %205, %205 : f32
    %213 = arith.subf %211, %212 : f32
    %cst_87 = arith.constant 0.000000e+00 : f32
    %214 = arith.maximumf %213, %cst_87 : f32
    %215 = vector.broadcast %205 : f32 to vector<8x32xf32>
    %216 = arith.subf %200, %215 : vector<8x32xf32>
    %cst_88 = arith.constant 9.99999974E-6 : f32
    %217 = arith.addf %214, %cst_88 : f32
    %218 = math.rsqrt %217 : f32
    %219 = vector.broadcast %218 : f32 to vector<8x32xf32>
    %220 = arith.mulf %216, %219 : vector<8x32xf32>
    %c1_89 = arith.constant 1 : index
    %c0_90 = arith.constant 0 : index
    %c0_91 = arith.constant 0 : index
    %221 = vector.load %arg3[%c1_89, %c0_90, %c0_91] : memref<3x32x48xf32, #tpu.memory_space<vmem>>, vector<1x32x48xf32>
    %222 = vector.shape_cast %221 : vector<1x32x48xf32> to vector<32x48xf32>
    %cst_92 = arith.constant dense<0.000000e+00> : vector<8x48xf32>
    %223 = tpu.matmul %220, %222, %cst_92 {dimension_numbers = #tpu.dot_dimension_numbers<[1], [0], [0], [1], [0, 0, 1, 1], [], []>} : vector<8x32xf32>, vector<32x48xf32>, vector<8x48xf32> -> vector<8x48xf32>
    %224 = vector.extract_strided_slice %223 {offsets = [0, 0], sizes = [8, 16], strides = [1, 1]} : vector<8x48xf32> to vector<8x16xf32>
    %225 = vector.extract_strided_slice %223 {offsets = [0, 16], sizes = [8, 16], strides = [1, 1]} : vector<8x48xf32> to vector<8x16xf32>
    %226 = vector.extract_strided_slice %223 {offsets = [0, 32], sizes = [8, 16], strides = [1, 1]} : vector<8x48xf32> to vector<8x16xf32>
    %227 = vector.extract_strided_slice %224 {offsets = [0, 0], sizes = [8, 8], strides = [1, 1]} : vector<8x16xf32> to vector<8x8xf32>
    %228 = vector.extract_strided_slice %225 {offsets = [0, 0], sizes = [8, 8], strides = [1, 1]} : vector<8x16xf32> to vector<8x8xf32>
    %229 = vector.extract_strided_slice %226 {offsets = [0, 0], sizes = [8, 8], strides = [1, 1]} : vector<8x16xf32> to vector<8x8xf32>
    %cst_93 = arith.constant dense<0.000000e+00> : vector<8x8xf32>
    %230 = tpu.matmul %227, %228, %cst_93 {dimension_numbers = #tpu.dot_dimension_numbers<[1], [1], [0], [0], [0, 0, 1, 0], [], []>} : vector<8x8xf32>, vector<8x8xf32>, vector<8x8xf32> -> vector<8x8xf32>
    %cst_94 = arith.constant 0.353553385 : f32
    %231 = vector.broadcast %cst_94 : f32 to vector<8x8xf32>
    %232 = arith.mulf %230, %231 : vector<8x8xf32>
    %233 = arith.addf %232, %31 : vector<8x8xf32>
    %cst_95 = arith.constant dense<0xFF800000> : vector<8xf32>
    %234 = vector.multi_reduction <maximumf>, %233, %cst_95 [1] : vector<8x8xf32> to vector<8xf32>
    %235 = vector.shape_cast %234 : vector<8xf32> to vector<8x1xf32>
    %236 = vector.broadcast %235 : vector<8x1xf32> to vector<8x8xf32>
    %237 = arith.subf %233, %236 : vector<8x8xf32>
    %238 = math.exp %237 : vector<8x8xf32>
    %cst_96 = arith.constant dense<0.000000e+00> : vector<8xf32>
    %239 = vector.multi_reduction <add>, %238, %cst_96 [1] : vector<8x8xf32> to vector<8xf32>
    %240 = vector.shape_cast %239 : vector<8xf32> to vector<8x1xf32>
    %241 = tpu.reciprocal %240 {approx = true} : vector<8x1xf32> -> vector<8x1xf32>
    %242 = vector.broadcast %241 : vector<8x1xf32> to vector<8x8xf32>
    %243 = arith.mulf %238, %242 : vector<8x8xf32>
    %cst_97 = arith.constant dense<0.000000e+00> : vector<8x8xf32>
    %244 = tpu.matmul %243, %229, %cst_97 {dimension_numbers = #tpu.dot_dimension_numbers<[1], [0], [0], [1], [0, 0, 1, 1], [], []>} : vector<8x8xf32>, vector<8x8xf32>, vector<8x8xf32> -> vector<8x8xf32>
    %245 = vector.extract_strided_slice %224 {offsets = [0, 8], sizes = [8, 8], strides = [1, 1]} : vector<8x16xf32> to vector<8x8xf32>
    %246 = vector.extract_strided_slice %225 {offsets = [0, 8], sizes = [8, 8], strides = [1, 1]} : vector<8x16xf32> to vector<8x8xf32>
    %247 = vector.extract_strided_slice %226 {offsets = [0, 8], sizes = [8, 8], strides = [1, 1]} : vector<8x16xf32> to vector<8x8xf32>
    %cst_98 = arith.constant dense<0.000000e+00> : vector<8x8xf32>
    %248 = tpu.matmul %245, %246, %cst_98 {dimension_numbers = #tpu.dot_dimension_numbers<[1], [1], [0], [0], [0, 0, 1, 0], [], []>} : vector<8x8xf32>, vector<8x8xf32>, vector<8x8xf32> -> vector<8x8xf32>
    %cst_99 = arith.constant 0.353553385 : f32
    %249 = vector.broadcast %cst_99 : f32 to vector<8x8xf32>
    %250 = arith.mulf %248, %249 : vector<8x8xf32>
    %251 = arith.addf %250, %31 : vector<8x8xf32>
    %cst_100 = arith.constant dense<0xFF800000> : vector<8xf32>
    %252 = vector.multi_reduction <maximumf>, %251, %cst_100 [1] : vector<8x8xf32> to vector<8xf32>
    %253 = vector.shape_cast %252 : vector<8xf32> to vector<8x1xf32>
    %254 = vector.broadcast %253 : vector<8x1xf32> to vector<8x8xf32>
    %255 = arith.subf %251, %254 : vector<8x8xf32>
    %256 = math.exp %255 : vector<8x8xf32>
    %cst_101 = arith.constant dense<0.000000e+00> : vector<8xf32>
    %257 = vector.multi_reduction <add>, %256, %cst_101 [1] : vector<8x8xf32> to vector<8xf32>
    %258 = vector.shape_cast %257 : vector<8xf32> to vector<8x1xf32>
    %259 = tpu.reciprocal %258 {approx = true} : vector<8x1xf32> -> vector<8x1xf32>
    %260 = vector.broadcast %259 : vector<8x1xf32> to vector<8x8xf32>
    %261 = arith.mulf %256, %260 : vector<8x8xf32>
    %cst_102 = arith.constant dense<0.000000e+00> : vector<8x8xf32>
    %262 = tpu.matmul %261, %247, %cst_102 {dimension_numbers = #tpu.dot_dimension_numbers<[1], [0], [0], [1], [0, 0, 1, 1], [], []>} : vector<8x8xf32>, vector<8x8xf32>, vector<8x8xf32> -> vector<8x8xf32>
    %263 = tpu.concatenate %244, %262 in 1 : vector<8x8xf32>, vector<8x8xf32> -> vector<8x16xf32>
    %c2 = arith.constant 2 : index
    %c0_103 = arith.constant 0 : index
    %c0_104 = arith.constant 0 : index
    %264 = vector.load %arg6[%c2, %c0_103, %c0_104] : memref<6x16x32xf32, #tpu.memory_space<vmem>>, vector<1x16x32xf32>
    %265 = vector.shape_cast %264 : vector<1x16x32xf32> to vector<16x32xf32>
    %cst_105 = arith.constant dense<0.000000e+00> : vector<8x32xf32>
    %266 = tpu.matmul %263, %265, %cst_105 {dimension_numbers = #tpu.dot_dimension_numbers<[1], [0], [0], [1], [0, 0, 1, 1], [], []>} : vector<8x16xf32>, vector<16x32xf32>, vector<8x32xf32> -> vector<8x32xf32>
    %267 = arith.addf %200, %266 : vector<8x32xf32>
    %268 = vector.shape_cast %267 : vector<8x32xf32> to vector<1x8x32xf32>
    %cst_106 = arith.constant dense<0.000000e+00> : vector<1xf32>
    %269 = vector.multi_reduction <add>, %268, %cst_106 [1, 2] : vector<1x8x32xf32> to vector<1xf32>
    %270 = vector.shape_cast %269 : vector<1xf32> to vector<1x1x1xf32>
    %271 = vector.extract %270[0, 0, 0] : f32 from vector<1x1x1xf32>
    %cst_107 = arith.constant 2.560000e+02 : f32
    %272 = arith.divf %271, %cst_107 : f32
    %273 = arith.mulf %267, %267 : vector<8x32xf32>
    %274 = vector.shape_cast %273 : vector<8x32xf32> to vector<1x8x32xf32>
    %cst_108 = arith.constant dense<0.000000e+00> : vector<1xf32>
    %275 = vector.multi_reduction <add>, %274, %cst_108 [1, 2] : vector<1x8x32xf32> to vector<1xf32>
    %276 = vector.shape_cast %275 : vector<1xf32> to vector<1x1x1xf32>
    %277 = vector.extract %276[0, 0, 0] : f32 from vector<1x1x1xf32>
    %cst_109 = arith.constant 2.560000e+02 : f32
    %278 = arith.divf %277, %cst_109 : f32
    %279 = arith.mulf %272, %272 : f32
    %280 = arith.subf %278, %279 : f32
    %cst_110 = arith.constant 0.000000e+00 : f32
    %281 = arith.maximumf %280, %cst_110 : f32
    %282 = vector.broadcast %272 : f32 to vector<8x32xf32>
    %283 = arith.subf %267, %282 : vector<8x32xf32>
    %cst_111 = arith.constant 9.99999974E-6 : f32
    %284 = arith.addf %281, %cst_111 : f32
    %285 = math.rsqrt %284 : f32
    %286 = vector.broadcast %285 : f32 to vector<8x32xf32>
    %287 = arith.mulf %283, %286 : vector<8x32xf32>
    %c1_112 = arith.constant 1 : index
    %c0_113 = arith.constant 0 : index
    %c0_114 = arith.constant 0 : index
    %288 = vector.load %arg4[%c1_112, %c0_113, %c0_114] : memref<3x32x16xf32, #tpu.memory_space<vmem>>, vector<1x32x16xf32>
    %289 = vector.shape_cast %288 : vector<1x32x16xf32> to vector<32x16xf32>
    %cst_115 = arith.constant dense<0.000000e+00> : vector<8x16xf32>
    %290 = tpu.matmul %287, %289, %cst_115 {dimension_numbers = #tpu.dot_dimension_numbers<[1], [0], [0], [1], [0, 0, 1, 1], [], []>} : vector<8x32xf32>, vector<32x16xf32>, vector<8x16xf32> -> vector<8x16xf32>
    %291 = vector.extract_strided_slice %25 {offsets = [0, 32], sizes = [8, 32], strides = [1, 1]} : vector<8x96xf32> to vector<8x32xf32>
    %292 = vector.extract_strided_slice %291 {offsets = [0, 0], sizes = [8, 16], strides = [1, 1]} : vector<8x32xf32> to vector<8x16xf32>
    %293 = vector.extract_strided_slice %291 {offsets = [0, 16], sizes = [8, 16], strides = [1, 1]} : vector<8x32xf32> to vector<8x16xf32>
    %294 = vector.extract_strided_slice %290 {offsets = [0, 0], sizes = [8, 8], strides = [1, 1]} : vector<8x16xf32> to vector<8x8xf32>
    %295 = vector.extract_strided_slice %292 {offsets = [0, 0], sizes = [8, 8], strides = [1, 1]} : vector<8x16xf32> to vector<8x8xf32>
    %296 = vector.extract_strided_slice %293 {offsets = [0, 0], sizes = [8, 8], strides = [1, 1]} : vector<8x16xf32> to vector<8x8xf32>
    %cst_116 = arith.constant dense<0.000000e+00> : vector<8x8xf32>
    %297 = tpu.matmul %294, %295, %cst_116 {dimension_numbers = #tpu.dot_dimension_numbers<[1], [1], [0], [0], [0, 0, 1, 0], [], []>} : vector<8x8xf32>, vector<8x8xf32>, vector<8x8xf32> -> vector<8x8xf32>
    %cst_117 = arith.constant 0.353553385 : f32
    %298 = vector.broadcast %cst_117 : f32 to vector<8x8xf32>
    %299 = arith.mulf %297, %298 : vector<8x8xf32>
    %cst_118 = arith.constant dense<0xFF800000> : vector<8xf32>
    %300 = vector.multi_reduction <maximumf>, %299, %cst_118 [1] : vector<8x8xf32> to vector<8xf32>
    %301 = vector.shape_cast %300 : vector<8xf32> to vector<8x1xf32>
    %302 = vector.broadcast %301 : vector<8x1xf32> to vector<8x8xf32>
    %303 = arith.subf %299, %302 : vector<8x8xf32>
    %304 = math.exp %303 : vector<8x8xf32>
    %cst_119 = arith.constant dense<0.000000e+00> : vector<8xf32>
    %305 = vector.multi_reduction <add>, %304, %cst_119 [1] : vector<8x8xf32> to vector<8xf32>
    %306 = vector.shape_cast %305 : vector<8xf32> to vector<8x1xf32>
    %307 = tpu.reciprocal %306 {approx = true} : vector<8x1xf32> -> vector<8x1xf32>
    %308 = vector.broadcast %307 : vector<8x1xf32> to vector<8x8xf32>
    %309 = arith.mulf %304, %308 : vector<8x8xf32>
    %cst_120 = arith.constant dense<0.000000e+00> : vector<8x8xf32>
    %310 = tpu.matmul %309, %296, %cst_120 {dimension_numbers = #tpu.dot_dimension_numbers<[1], [0], [0], [1], [0, 0, 1, 1], [], []>} : vector<8x8xf32>, vector<8x8xf32>, vector<8x8xf32> -> vector<8x8xf32>
    %311 = vector.extract_strided_slice %290 {offsets = [0, 8], sizes = [8, 8], strides = [1, 1]} : vector<8x16xf32> to vector<8x8xf32>
    %312 = vector.extract_strided_slice %292 {offsets = [0, 8], sizes = [8, 8], strides = [1, 1]} : vector<8x16xf32> to vector<8x8xf32>
    %313 = vector.extract_strided_slice %293 {offsets = [0, 8], sizes = [8, 8], strides = [1, 1]} : vector<8x16xf32> to vector<8x8xf32>
    %cst_121 = arith.constant dense<0.000000e+00> : vector<8x8xf32>
    %314 = tpu.matmul %311, %312, %cst_121 {dimension_numbers = #tpu.dot_dimension_numbers<[1], [1], [0], [0], [0, 0, 1, 0], [], []>} : vector<8x8xf32>, vector<8x8xf32>, vector<8x8xf32> -> vector<8x8xf32>
    %cst_122 = arith.constant 0.353553385 : f32
    %315 = vector.broadcast %cst_122 : f32 to vector<8x8xf32>
    %316 = arith.mulf %314, %315 : vector<8x8xf32>
    %cst_123 = arith.constant dense<0xFF800000> : vector<8xf32>
    %317 = vector.multi_reduction <maximumf>, %316, %cst_123 [1] : vector<8x8xf32> to vector<8xf32>
    %318 = vector.shape_cast %317 : vector<8xf32> to vector<8x1xf32>
    %319 = vector.broadcast %318 : vector<8x1xf32> to vector<8x8xf32>
    %320 = arith.subf %316, %319 : vector<8x8xf32>
    %321 = math.exp %320 : vector<8x8xf32>
    %cst_124 = arith.constant dense<0.000000e+00> : vector<8xf32>
    %322 = vector.multi_reduction <add>, %321, %cst_124 [1] : vector<8x8xf32> to vector<8xf32>
    %323 = vector.shape_cast %322 : vector<8xf32> to vector<8x1xf32>
    %324 = tpu.reciprocal %323 {approx = true} : vector<8x1xf32> -> vector<8x1xf32>
    %325 = vector.broadcast %324 : vector<8x1xf32> to vector<8x8xf32>
    %326 = arith.mulf %321, %325 : vector<8x8xf32>
    %cst_125 = arith.constant dense<0.000000e+00> : vector<8x8xf32>
    %327 = tpu.matmul %326, %313, %cst_125 {dimension_numbers = #tpu.dot_dimension_numbers<[1], [0], [0], [1], [0, 0, 1, 1], [], []>} : vector<8x8xf32>, vector<8x8xf32>, vector<8x8xf32> -> vector<8x8xf32>
    %328 = tpu.concatenate %310, %327 in 1 : vector<8x8xf32>, vector<8x8xf32> -> vector<8x16xf32>
    %c3 = arith.constant 3 : index
    %c0_126 = arith.constant 0 : index
    %c0_127 = arith.constant 0 : index
    %329 = vector.load %arg6[%c3, %c0_126, %c0_127] : memref<6x16x32xf32, #tpu.memory_space<vmem>>, vector<1x16x32xf32>
    %330 = vector.shape_cast %329 : vector<1x16x32xf32> to vector<16x32xf32>
    %cst_128 = arith.constant dense<0.000000e+00> : vector<8x32xf32>
    %331 = tpu.matmul %328, %330, %cst_128 {dimension_numbers = #tpu.dot_dimension_numbers<[1], [0], [0], [1], [0, 0, 1, 1], [], []>} : vector<8x16xf32>, vector<16x32xf32>, vector<8x32xf32> -> vector<8x32xf32>
    %332 = arith.addf %267, %331 : vector<8x32xf32>
    %333 = vector.shape_cast %332 : vector<8x32xf32> to vector<1x8x32xf32>
    %cst_129 = arith.constant dense<0.000000e+00> : vector<1xf32>
    %334 = vector.multi_reduction <add>, %333, %cst_129 [1, 2] : vector<1x8x32xf32> to vector<1xf32>
    %335 = vector.shape_cast %334 : vector<1xf32> to vector<1x1x1xf32>
    %336 = vector.extract %335[0, 0, 0] : f32 from vector<1x1x1xf32>
    %cst_130 = arith.constant 2.560000e+02 : f32
    %337 = arith.divf %336, %cst_130 : f32
    %338 = arith.mulf %332, %332 : vector<8x32xf32>
    %339 = vector.shape_cast %338 : vector<8x32xf32> to vector<1x8x32xf32>
    %cst_131 = arith.constant dense<0.000000e+00> : vector<1xf32>
    %340 = vector.multi_reduction <add>, %339, %cst_131 [1, 2] : vector<1x8x32xf32> to vector<1xf32>
    %341 = vector.shape_cast %340 : vector<1xf32> to vector<1x1x1xf32>
    %342 = vector.extract %341[0, 0, 0] : f32 from vector<1x1x1xf32>
    %cst_132 = arith.constant 2.560000e+02 : f32
    %343 = arith.divf %342, %cst_132 : f32
    %344 = arith.mulf %337, %337 : f32
    %345 = arith.subf %343, %344 : f32
    %cst_133 = arith.constant 0.000000e+00 : f32
    %346 = arith.maximumf %345, %cst_133 : f32
    %347 = vector.broadcast %337 : f32 to vector<8x32xf32>
    %348 = arith.subf %332, %347 : vector<8x32xf32>
    %cst_134 = arith.constant 9.99999974E-6 : f32
    %349 = arith.addf %346, %cst_134 : f32
    %350 = math.rsqrt %349 : f32
    %351 = vector.broadcast %350 : f32 to vector<8x32xf32>
    %352 = arith.mulf %348, %351 : vector<8x32xf32>
    %c1_135 = arith.constant 1 : index
    %c0_136 = arith.constant 0 : index
    %c0_137 = arith.constant 0 : index
    %353 = vector.load %arg7[%c1_135, %c0_136, %c0_137] : memref<3x32x64xf32, #tpu.memory_space<vmem>>, vector<1x32x64xf32>
    %354 = vector.shape_cast %353 : vector<1x32x64xf32> to vector<32x64xf32>
    %cst_138 = arith.constant dense<0.000000e+00> : vector<8x64xf32>
    %355 = tpu.matmul %352, %354, %cst_138 {dimension_numbers = #tpu.dot_dimension_numbers<[1], [0], [0], [1], [0, 0, 1, 1], [], []>} : vector<8x32xf32>, vector<32x64xf32>, vector<8x64xf32> -> vector<8x64xf32>
    %c1_139 = arith.constant 1 : index
    %c0_140 = arith.constant 0 : index
    %c0_141 = arith.constant 0 : index
    %356 = vector.load %arg8[%c1_139, %c0_140, %c0_141] : memref<3x1x64xf32, #tpu.memory_space<vmem>>, vector<1x1x64xf32>
    %357 = vector.shape_cast %356 : vector<1x1x64xf32> to vector<1x64xf32>
    %358 = vector.broadcast %357 : vector<1x64xf32> to vector<8x64xf32>
    %359 = arith.addf %355, %358 : vector<8x64xf32>
    %cst_142 = arith.constant 0.000000e+00 : f32
    %360 = vector.broadcast %cst_142 : f32 to vector<8x64xf32>
    %361 = arith.maximumf %359, %360 : vector<8x64xf32>
    %c1_143 = arith.constant 1 : index
    %c0_144 = arith.constant 0 : index
    %c0_145 = arith.constant 0 : index
    %362 = vector.load %arg9[%c1_143, %c0_144, %c0_145] : memref<3x64x32xf32, #tpu.memory_space<vmem>>, vector<1x64x32xf32>
    %363 = vector.shape_cast %362 : vector<1x64x32xf32> to vector<64x32xf32>
    %cst_146 = arith.constant dense<0.000000e+00> : vector<8x32xf32>
    %364 = tpu.matmul %361, %363, %cst_146 {dimension_numbers = #tpu.dot_dimension_numbers<[1], [0], [0], [1], [0, 0, 1, 1], [], []>} : vector<8x64xf32>, vector<64x32xf32>, vector<8x32xf32> -> vector<8x32xf32>
    %c1_147 = arith.constant 1 : index
    %c0_148 = arith.constant 0 : index
    %c0_149 = arith.constant 0 : index
    %365 = vector.load %arg10[%c1_147, %c0_148, %c0_149] : memref<3x1x32xf32, #tpu.memory_space<vmem>>, vector<1x1x32xf32>
    %366 = vector.shape_cast %365 : vector<1x1x32xf32> to vector<1x32xf32>
    %367 = vector.broadcast %366 : vector<1x32xf32> to vector<8x32xf32>
    %368 = arith.addf %364, %367 : vector<8x32xf32>
    %369 = arith.addf %332, %368 : vector<8x32xf32>
    %370 = vector.shape_cast %369 : vector<8x32xf32> to vector<1x8x32xf32>
    %cst_150 = arith.constant dense<0.000000e+00> : vector<1xf32>
    %371 = vector.multi_reduction <add>, %370, %cst_150 [1, 2] : vector<1x8x32xf32> to vector<1xf32>
    %372 = vector.shape_cast %371 : vector<1xf32> to vector<1x1x1xf32>
    %373 = vector.extract %372[0, 0, 0] : f32 from vector<1x1x1xf32>
    %cst_151 = arith.constant 2.560000e+02 : f32
    %374 = arith.divf %373, %cst_151 : f32
    %375 = arith.mulf %369, %369 : vector<8x32xf32>
    %376 = vector.shape_cast %375 : vector<8x32xf32> to vector<1x8x32xf32>
    %cst_152 = arith.constant dense<0.000000e+00> : vector<1xf32>
    %377 = vector.multi_reduction <add>, %376, %cst_152 [1, 2] : vector<1x8x32xf32> to vector<1xf32>
    %378 = vector.shape_cast %377 : vector<1xf32> to vector<1x1x1xf32>
    %379 = vector.extract %378[0, 0, 0] : f32 from vector<1x1x1xf32>
    %cst_153 = arith.constant 2.560000e+02 : f32
    %380 = arith.divf %379, %cst_153 : f32
    %381 = arith.mulf %374, %374 : f32
    %382 = arith.subf %380, %381 : f32
    %cst_154 = arith.constant 0.000000e+00 : f32
    %383 = arith.maximumf %382, %cst_154 : f32
    %384 = vector.broadcast %374 : f32 to vector<8x32xf32>
    %385 = arith.subf %369, %384 : vector<8x32xf32>
    %cst_155 = arith.constant 9.99999974E-6 : f32
    %386 = arith.addf %383, %cst_155 : f32
    %387 = math.rsqrt %386 : f32
    %388 = vector.broadcast %387 : f32 to vector<8x32xf32>
    %389 = arith.mulf %385, %388 : vector<8x32xf32>
    %c2_156 = arith.constant 2 : index
    %c0_157 = arith.constant 0 : index
    %c0_158 = arith.constant 0 : index
    %390 = vector.load %arg3[%c2_156, %c0_157, %c0_158] : memref<3x32x48xf32, #tpu.memory_space<vmem>>, vector<1x32x48xf32>
    %391 = vector.shape_cast %390 : vector<1x32x48xf32> to vector<32x48xf32>
    %cst_159 = arith.constant dense<0.000000e+00> : vector<8x48xf32>
    %392 = tpu.matmul %389, %391, %cst_159 {dimension_numbers = #tpu.dot_dimension_numbers<[1], [0], [0], [1], [0, 0, 1, 1], [], []>} : vector<8x32xf32>, vector<32x48xf32>, vector<8x48xf32> -> vector<8x48xf32>
    %393 = vector.extract_strided_slice %392 {offsets = [0, 0], sizes = [8, 16], strides = [1, 1]} : vector<8x48xf32> to vector<8x16xf32>
    %394 = vector.extract_strided_slice %392 {offsets = [0, 16], sizes = [8, 16], strides = [1, 1]} : vector<8x48xf32> to vector<8x16xf32>
    %395 = vector.extract_strided_slice %392 {offsets = [0, 32], sizes = [8, 16], strides = [1, 1]} : vector<8x48xf32> to vector<8x16xf32>
    %396 = vector.extract_strided_slice %393 {offsets = [0, 0], sizes = [8, 8], strides = [1, 1]} : vector<8x16xf32> to vector<8x8xf32>
    %397 = vector.extract_strided_slice %394 {offsets = [0, 0], sizes = [8, 8], strides = [1, 1]} : vector<8x16xf32> to vector<8x8xf32>
    %398 = vector.extract_strided_slice %395 {offsets = [0, 0], sizes = [8, 8], strides = [1, 1]} : vector<8x16xf32> to vector<8x8xf32>
    %cst_160 = arith.constant dense<0.000000e+00> : vector<8x8xf32>
    %399 = tpu.matmul %396, %397, %cst_160 {dimension_numbers = #tpu.dot_dimension_numbers<[1], [1], [0], [0], [0, 0, 1, 0], [], []>} : vector<8x8xf32>, vector<8x8xf32>, vector<8x8xf32> -> vector<8x8xf32>
    %cst_161 = arith.constant 0.353553385 : f32
    %400 = vector.broadcast %cst_161 : f32 to vector<8x8xf32>
    %401 = arith.mulf %399, %400 : vector<8x8xf32>
    %402 = arith.addf %401, %31 : vector<8x8xf32>
    %cst_162 = arith.constant dense<0xFF800000> : vector<8xf32>
    %403 = vector.multi_reduction <maximumf>, %402, %cst_162 [1] : vector<8x8xf32> to vector<8xf32>
    %404 = vector.shape_cast %403 : vector<8xf32> to vector<8x1xf32>
    %405 = vector.broadcast %404 : vector<8x1xf32> to vector<8x8xf32>
    %406 = arith.subf %402, %405 : vector<8x8xf32>
    %407 = math.exp %406 : vector<8x8xf32>
    %cst_163 = arith.constant dense<0.000000e+00> : vector<8xf32>
    %408 = vector.multi_reduction <add>, %407, %cst_163 [1] : vector<8x8xf32> to vector<8xf32>
    %409 = vector.shape_cast %408 : vector<8xf32> to vector<8x1xf32>
    %410 = tpu.reciprocal %409 {approx = true} : vector<8x1xf32> -> vector<8x1xf32>
    %411 = vector.broadcast %410 : vector<8x1xf32> to vector<8x8xf32>
    %412 = arith.mulf %407, %411 : vector<8x8xf32>
    %cst_164 = arith.constant dense<0.000000e+00> : vector<8x8xf32>
    %413 = tpu.matmul %412, %398, %cst_164 {dimension_numbers = #tpu.dot_dimension_numbers<[1], [0], [0], [1], [0, 0, 1, 1], [], []>} : vector<8x8xf32>, vector<8x8xf32>, vector<8x8xf32> -> vector<8x8xf32>
    %414 = vector.extract_strided_slice %393 {offsets = [0, 8], sizes = [8, 8], strides = [1, 1]} : vector<8x16xf32> to vector<8x8xf32>
    %415 = vector.extract_strided_slice %394 {offsets = [0, 8], sizes = [8, 8], strides = [1, 1]} : vector<8x16xf32> to vector<8x8xf32>
    %416 = vector.extract_strided_slice %395 {offsets = [0, 8], sizes = [8, 8], strides = [1, 1]} : vector<8x16xf32> to vector<8x8xf32>
    %cst_165 = arith.constant dense<0.000000e+00> : vector<8x8xf32>
    %417 = tpu.matmul %414, %415, %cst_165 {dimension_numbers = #tpu.dot_dimension_numbers<[1], [1], [0], [0], [0, 0, 1, 0], [], []>} : vector<8x8xf32>, vector<8x8xf32>, vector<8x8xf32> -> vector<8x8xf32>
    %cst_166 = arith.constant 0.353553385 : f32
    %418 = vector.broadcast %cst_166 : f32 to vector<8x8xf32>
    %419 = arith.mulf %417, %418 : vector<8x8xf32>
    %420 = arith.addf %419, %31 : vector<8x8xf32>
    %cst_167 = arith.constant dense<0xFF800000> : vector<8xf32>
    %421 = vector.multi_reduction <maximumf>, %420, %cst_167 [1] : vector<8x8xf32> to vector<8xf32>
    %422 = vector.shape_cast %421 : vector<8xf32> to vector<8x1xf32>
    %423 = vector.broadcast %422 : vector<8x1xf32> to vector<8x8xf32>
    %424 = arith.subf %420, %423 : vector<8x8xf32>
    %425 = math.exp %424 : vector<8x8xf32>
    %cst_168 = arith.constant dense<0.000000e+00> : vector<8xf32>
    %426 = vector.multi_reduction <add>, %425, %cst_168 [1] : vector<8x8xf32> to vector<8xf32>
    %427 = vector.shape_cast %426 : vector<8xf32> to vector<8x1xf32>
    %428 = tpu.reciprocal %427 {approx = true} : vector<8x1xf32> -> vector<8x1xf32>
    %429 = vector.broadcast %428 : vector<8x1xf32> to vector<8x8xf32>
    %430 = arith.mulf %425, %429 : vector<8x8xf32>
    %cst_169 = arith.constant dense<0.000000e+00> : vector<8x8xf32>
    %431 = tpu.matmul %430, %416, %cst_169 {dimension_numbers = #tpu.dot_dimension_numbers<[1], [0], [0], [1], [0, 0, 1, 1], [], []>} : vector<8x8xf32>, vector<8x8xf32>, vector<8x8xf32> -> vector<8x8xf32>
    %432 = tpu.concatenate %413, %431 in 1 : vector<8x8xf32>, vector<8x8xf32> -> vector<8x16xf32>
    %c4 = arith.constant 4 : index
    %c0_170 = arith.constant 0 : index
    %c0_171 = arith.constant 0 : index
    %433 = vector.load %arg6[%c4, %c0_170, %c0_171] : memref<6x16x32xf32, #tpu.memory_space<vmem>>, vector<1x16x32xf32>
    %434 = vector.shape_cast %433 : vector<1x16x32xf32> to vector<16x32xf32>
    %cst_172 = arith.constant dense<0.000000e+00> : vector<8x32xf32>
    %435 = tpu.matmul %432, %434, %cst_172 {dimension_numbers = #tpu.dot_dimension_numbers<[1], [0], [0], [1], [0, 0, 1, 1], [], []>} : vector<8x16xf32>, vector<16x32xf32>, vector<8x32xf32> -> vector<8x32xf32>
    %436 = arith.addf %369, %435 : vector<8x32xf32>
    %437 = vector.shape_cast %436 : vector<8x32xf32> to vector<1x8x32xf32>
    %cst_173 = arith.constant dense<0.000000e+00> : vector<1xf32>
    %438 = vector.multi_reduction <add>, %437, %cst_173 [1, 2] : vector<1x8x32xf32> to vector<1xf32>
    %439 = vector.shape_cast %438 : vector<1xf32> to vector<1x1x1xf32>
    %440 = vector.extract %439[0, 0, 0] : f32 from vector<1x1x1xf32>
    %cst_174 = arith.constant 2.560000e+02 : f32
    %441 = arith.divf %440, %cst_174 : f32
    %442 = arith.mulf %436, %436 : vector<8x32xf32>
    %443 = vector.shape_cast %442 : vector<8x32xf32> to vector<1x8x32xf32>
    %cst_175 = arith.constant dense<0.000000e+00> : vector<1xf32>
    %444 = vector.multi_reduction <add>, %443, %cst_175 [1, 2] : vector<1x8x32xf32> to vector<1xf32>
    %445 = vector.shape_cast %444 : vector<1xf32> to vector<1x1x1xf32>
    %446 = vector.extract %445[0, 0, 0] : f32 from vector<1x1x1xf32>
    %cst_176 = arith.constant 2.560000e+02 : f32
    %447 = arith.divf %446, %cst_176 : f32
    %448 = arith.mulf %441, %441 : f32
    %449 = arith.subf %447, %448 : f32
    %cst_177 = arith.constant 0.000000e+00 : f32
    %450 = arith.maximumf %449, %cst_177 : f32
    %451 = vector.broadcast %441 : f32 to vector<8x32xf32>
    %452 = arith.subf %436, %451 : vector<8x32xf32>
    %cst_178 = arith.constant 9.99999974E-6 : f32
    %453 = arith.addf %450, %cst_178 : f32
    %454 = math.rsqrt %453 : f32
    %455 = vector.broadcast %454 : f32 to vector<8x32xf32>
    %456 = arith.mulf %452, %455 : vector<8x32xf32>
    %c2_179 = arith.constant 2 : index
    %c0_180 = arith.constant 0 : index
    %c0_181 = arith.constant 0 : index
    %457 = vector.load %arg4[%c2_179, %c0_180, %c0_181] : memref<3x32x16xf32, #tpu.memory_space<vmem>>, vector<1x32x16xf32>
    %458 = vector.shape_cast %457 : vector<1x32x16xf32> to vector<32x16xf32>
    %cst_182 = arith.constant dense<0.000000e+00> : vector<8x16xf32>
    %459 = tpu.matmul %456, %458, %cst_182 {dimension_numbers = #tpu.dot_dimension_numbers<[1], [0], [0], [1], [0, 0, 1, 1], [], []>} : vector<8x32xf32>, vector<32x16xf32>, vector<8x16xf32> -> vector<8x16xf32>
    %460 = vector.extract_strided_slice %25 {offsets = [0, 64], sizes = [8, 32], strides = [1, 1]} : vector<8x96xf32> to vector<8x32xf32>
    %461 = vector.extract_strided_slice %460 {offsets = [0, 0], sizes = [8, 16], strides = [1, 1]} : vector<8x32xf32> to vector<8x16xf32>
    %462 = vector.extract_strided_slice %460 {offsets = [0, 16], sizes = [8, 16], strides = [1, 1]} : vector<8x32xf32> to vector<8x16xf32>
    %463 = vector.extract_strided_slice %459 {offsets = [0, 0], sizes = [8, 8], strides = [1, 1]} : vector<8x16xf32> to vector<8x8xf32>
    %464 = vector.extract_strided_slice %461 {offsets = [0, 0], sizes = [8, 8], strides = [1, 1]} : vector<8x16xf32> to vector<8x8xf32>
    %465 = vector.extract_strided_slice %462 {offsets = [0, 0], sizes = [8, 8], strides = [1, 1]} : vector<8x16xf32> to vector<8x8xf32>
    %cst_183 = arith.constant dense<0.000000e+00> : vector<8x8xf32>
    %466 = tpu.matmul %463, %464, %cst_183 {dimension_numbers = #tpu.dot_dimension_numbers<[1], [1], [0], [0], [0, 0, 1, 0], [], []>} : vector<8x8xf32>, vector<8x8xf32>, vector<8x8xf32> -> vector<8x8xf32>
    %cst_184 = arith.constant 0.353553385 : f32
    %467 = vector.broadcast %cst_184 : f32 to vector<8x8xf32>
    %468 = arith.mulf %466, %467 : vector<8x8xf32>
    %cst_185 = arith.constant dense<0xFF800000> : vector<8xf32>
    %469 = vector.multi_reduction <maximumf>, %468, %cst_185 [1] : vector<8x8xf32> to vector<8xf32>
    %470 = vector.shape_cast %469 : vector<8xf32> to vector<8x1xf32>
    %471 = vector.broadcast %470 : vector<8x1xf32> to vector<8x8xf32>
    %472 = arith.subf %468, %471 : vector<8x8xf32>
    %473 = math.exp %472 : vector<8x8xf32>
    %cst_186 = arith.constant dense<0.000000e+00> : vector<8xf32>
    %474 = vector.multi_reduction <add>, %473, %cst_186 [1] : vector<8x8xf32> to vector<8xf32>
    %475 = vector.shape_cast %474 : vector<8xf32> to vector<8x1xf32>
    %476 = tpu.reciprocal %475 {approx = true} : vector<8x1xf32> -> vector<8x1xf32>
    %477 = vector.broadcast %476 : vector<8x1xf32> to vector<8x8xf32>
    %478 = arith.mulf %473, %477 : vector<8x8xf32>
    %cst_187 = arith.constant dense<0.000000e+00> : vector<8x8xf32>
    %479 = tpu.matmul %478, %465, %cst_187 {dimension_numbers = #tpu.dot_dimension_numbers<[1], [0], [0], [1], [0, 0, 1, 1], [], []>} : vector<8x8xf32>, vector<8x8xf32>, vector<8x8xf32> -> vector<8x8xf32>
    %480 = vector.extract_strided_slice %459 {offsets = [0, 8], sizes = [8, 8], strides = [1, 1]} : vector<8x16xf32> to vector<8x8xf32>
    %481 = vector.extract_strided_slice %461 {offsets = [0, 8], sizes = [8, 8], strides = [1, 1]} : vector<8x16xf32> to vector<8x8xf32>
    %482 = vector.extract_strided_slice %462 {offsets = [0, 8], sizes = [8, 8], strides = [1, 1]} : vector<8x16xf32> to vector<8x8xf32>
    %cst_188 = arith.constant dense<0.000000e+00> : vector<8x8xf32>
    %483 = tpu.matmul %480, %481, %cst_188 {dimension_numbers = #tpu.dot_dimension_numbers<[1], [1], [0], [0], [0, 0, 1, 0], [], []>} : vector<8x8xf32>, vector<8x8xf32>, vector<8x8xf32> -> vector<8x8xf32>
    %cst_189 = arith.constant 0.353553385 : f32
    %484 = vector.broadcast %cst_189 : f32 to vector<8x8xf32>
    %485 = arith.mulf %483, %484 : vector<8x8xf32>
    %cst_190 = arith.constant dense<0xFF800000> : vector<8xf32>
    %486 = vector.multi_reduction <maximumf>, %485, %cst_190 [1] : vector<8x8xf32> to vector<8xf32>
    %487 = vector.shape_cast %486 : vector<8xf32> to vector<8x1xf32>
    %488 = vector.broadcast %487 : vector<8x1xf32> to vector<8x8xf32>
    %489 = arith.subf %485, %488 : vector<8x8xf32>
    %490 = math.exp %489 : vector<8x8xf32>
    %cst_191 = arith.constant dense<0.000000e+00> : vector<8xf32>
    %491 = vector.multi_reduction <add>, %490, %cst_191 [1] : vector<8x8xf32> to vector<8xf32>
    %492 = vector.shape_cast %491 : vector<8xf32> to vector<8x1xf32>
    %493 = tpu.reciprocal %492 {approx = true} : vector<8x1xf32> -> vector<8x1xf32>
    %494 = vector.broadcast %493 : vector<8x1xf32> to vector<8x8xf32>
    %495 = arith.mulf %490, %494 : vector<8x8xf32>
    %cst_192 = arith.constant dense<0.000000e+00> : vector<8x8xf32>
    %496 = tpu.matmul %495, %482, %cst_192 {dimension_numbers = #tpu.dot_dimension_numbers<[1], [0], [0], [1], [0, 0, 1, 1], [], []>} : vector<8x8xf32>, vector<8x8xf32>, vector<8x8xf32> -> vector<8x8xf32>
    %497 = tpu.concatenate %479, %496 in 1 : vector<8x8xf32>, vector<8x8xf32> -> vector<8x16xf32>
    %c5 = arith.constant 5 : index
    %c0_193 = arith.constant 0 : index
    %c0_194 = arith.constant 0 : index
    %498 = vector.load %arg6[%c5, %c0_193, %c0_194] : memref<6x16x32xf32, #tpu.memory_space<vmem>>, vector<1x16x32xf32>
    %499 = vector.shape_cast %498 : vector<1x16x32xf32> to vector<16x32xf32>
    %cst_195 = arith.constant dense<0.000000e+00> : vector<8x32xf32>
    %500 = tpu.matmul %497, %499, %cst_195 {dimension_numbers = #tpu.dot_dimension_numbers<[1], [0], [0], [1], [0, 0, 1, 1], [], []>} : vector<8x16xf32>, vector<16x32xf32>, vector<8x32xf32> -> vector<8x32xf32>
    %501 = arith.addf %436, %500 : vector<8x32xf32>
    %502 = vector.shape_cast %501 : vector<8x32xf32> to vector<1x8x32xf32>
    %cst_196 = arith.constant dense<0.000000e+00> : vector<1xf32>
    %503 = vector.multi_reduction <add>, %502, %cst_196 [1, 2] : vector<1x8x32xf32> to vector<1xf32>
    %504 = vector.shape_cast %503 : vector<1xf32> to vector<1x1x1xf32>
    %505 = vector.extract %504[0, 0, 0] : f32 from vector<1x1x1xf32>
    %cst_197 = arith.constant 2.560000e+02 : f32
    %506 = arith.divf %505, %cst_197 : f32
    %507 = arith.mulf %501, %501 : vector<8x32xf32>
    %508 = vector.shape_cast %507 : vector<8x32xf32> to vector<1x8x32xf32>
    %cst_198 = arith.constant dense<0.000000e+00> : vector<1xf32>
    %509 = vector.multi_reduction <add>, %508, %cst_198 [1, 2] : vector<1x8x32xf32> to vector<1xf32>
    %510 = vector.shape_cast %509 : vector<1xf32> to vector<1x1x1xf32>
    %511 = vector.extract %510[0, 0, 0] : f32 from vector<1x1x1xf32>
    %cst_199 = arith.constant 2.560000e+02 : f32
    %512 = arith.divf %511, %cst_199 : f32
    %513 = arith.mulf %506, %506 : f32
    %514 = arith.subf %512, %513 : f32
    %cst_200 = arith.constant 0.000000e+00 : f32
    %515 = arith.maximumf %514, %cst_200 : f32
    %516 = vector.broadcast %506 : f32 to vector<8x32xf32>
    %517 = arith.subf %501, %516 : vector<8x32xf32>
    %cst_201 = arith.constant 9.99999974E-6 : f32
    %518 = arith.addf %515, %cst_201 : f32
    %519 = math.rsqrt %518 : f32
    %520 = vector.broadcast %519 : f32 to vector<8x32xf32>
    %521 = arith.mulf %517, %520 : vector<8x32xf32>
    %c2_202 = arith.constant 2 : index
    %c0_203 = arith.constant 0 : index
    %c0_204 = arith.constant 0 : index
    %522 = vector.load %arg7[%c2_202, %c0_203, %c0_204] : memref<3x32x64xf32, #tpu.memory_space<vmem>>, vector<1x32x64xf32>
    %523 = vector.shape_cast %522 : vector<1x32x64xf32> to vector<32x64xf32>
    %cst_205 = arith.constant dense<0.000000e+00> : vector<8x64xf32>
    %524 = tpu.matmul %521, %523, %cst_205 {dimension_numbers = #tpu.dot_dimension_numbers<[1], [0], [0], [1], [0, 0, 1, 1], [], []>} : vector<8x32xf32>, vector<32x64xf32>, vector<8x64xf32> -> vector<8x64xf32>
    %c2_206 = arith.constant 2 : index
    %c0_207 = arith.constant 0 : index
    %c0_208 = arith.constant 0 : index
    %525 = vector.load %arg8[%c2_206, %c0_207, %c0_208] : memref<3x1x64xf32, #tpu.memory_space<vmem>>, vector<1x1x64xf32>
    %526 = vector.shape_cast %525 : vector<1x1x64xf32> to vector<1x64xf32>
    %527 = vector.broadcast %526 : vector<1x64xf32> to vector<8x64xf32>
    %528 = arith.addf %524, %527 : vector<8x64xf32>
    %cst_209 = arith.constant 0.000000e+00 : f32
    %529 = vector.broadcast %cst_209 : f32 to vector<8x64xf32>
    %530 = arith.maximumf %528, %529 : vector<8x64xf32>
    %c2_210 = arith.constant 2 : index
    %c0_211 = arith.constant 0 : index
    %c0_212 = arith.constant 0 : index
    %531 = vector.load %arg9[%c2_210, %c0_211, %c0_212] : memref<3x64x32xf32, #tpu.memory_space<vmem>>, vector<1x64x32xf32>
    %532 = vector.shape_cast %531 : vector<1x64x32xf32> to vector<64x32xf32>
    %cst_213 = arith.constant dense<0.000000e+00> : vector<8x32xf32>
    %533 = tpu.matmul %530, %532, %cst_213 {dimension_numbers = #tpu.dot_dimension_numbers<[1], [0], [0], [1], [0, 0, 1, 1], [], []>} : vector<8x64xf32>, vector<64x32xf32>, vector<8x32xf32> -> vector<8x32xf32>
    %c2_214 = arith.constant 2 : index
    %c0_215 = arith.constant 0 : index
    %c0_216 = arith.constant 0 : index
    %534 = vector.load %arg10[%c2_214, %c0_215, %c0_216] : memref<3x1x32xf32, #tpu.memory_space<vmem>>, vector<1x1x32xf32>
    %535 = vector.shape_cast %534 : vector<1x1x32xf32> to vector<1x32xf32>
    %536 = vector.broadcast %535 : vector<1x32xf32> to vector<8x32xf32>
    %537 = arith.addf %533, %536 : vector<8x32xf32>
    %538 = arith.addf %501, %537 : vector<8x32xf32>
    %c0_217 = arith.constant 0 : index
    %c0_218 = arith.constant 0 : index
    %c0_219 = arith.constant 0 : index
    %539 = vector.load %arg11[%c0_217, %c0_218, %c0_219] : memref<1x8x32xf32, #tpu.memory_space<vmem>>, vector<1x8x32xf32>
    %540 = vector.shape_cast %539 : vector<1x8x32xf32> to vector<8x32xf32>
    %541 = vector.shape_cast %538 : vector<8x32xf32> to vector<1x8x32xf32>
    tpu.vector_store %arg11[%c0_217, %c0_218, %c0_219], %541 {strides = array<i32>} : memref<1x8x32xf32, #tpu.memory_space<vmem>>, vector<1x8x32xf32>,
    return
  }
  func.func @transform_0(%arg0: i32) -> (i32, i32, i32) {
    %c0_i32 = arith.constant 0 : i32
    %c0_i32_0 = arith.constant 0 : i32
    %c0_i32_1 = arith.constant 0 : i32
    return %arg0, %c0_i32, %c0_i32_0 : i32, i32, i32
  }
  func.func @transform_1(%arg0: i32) -> (i32, i32, i32) {
    %c0_i32 = arith.constant 0 : i32
    %c0_i32_0 = arith.constant 0 : i32
    %c0_i32_1 = arith.constant 0 : i32
    return %arg0, %c0_i32, %c0_i32_0 : i32, i32, i32
  }
  func.func @transform_2(%arg0: i32) -> (i32, i32, i32) {
    %c0_i32 = arith.constant 0 : i32
    %c0_i32_0 = arith.constant 0 : i32
    %c0_i32_1 = arith.constant 0 : i32
    %c0_i32_2 = arith.constant 0 : i32
    return %c0_i32, %c0_i32_0, %c0_i32_1 : i32, i32, i32
  }
  func.func @transform_3(%arg0: i32) -> (i32, i32, i32) {
    %c0_i32 = arith.constant 0 : i32
    %c0_i32_0 = arith.constant 0 : i32
    %c0_i32_1 = arith.constant 0 : i32
    %c0_i32_2 = arith.constant 0 : i32
    return %c0_i32, %c0_i32_0, %c0_i32_1 : i32, i32, i32
  }
  func.func @transform_4(%arg0: i32) -> (i32, i32) {
    %c0_i32 = arith.constant 0 : i32
    %c0_i32_0 = arith.constant 0 : i32
    %c0_i32_1 = arith.constant 0 : i32
    return %c0_i32, %c0_i32_0 : i32, i32
  }
  func.func @transform_5(%arg0: i32) -> (i32, i32, i32) {
    %c0_i32 = arith.constant 0 : i32
    %c0_i32_0 = arith.constant 0 : i32
    %c0_i32_1 = arith.constant 0 : i32
    %c0_i32_2 = arith.constant 0 : i32
    return %c0_i32, %c0_i32_0, %c0_i32_1 : i32, i32, i32
  }
  func.func @transform_6(%arg0: i32) -> (i32, i32, i32) {
    %c0_i32 = arith.constant 0 : i32
    %c0_i32_0 = arith.constant 0 : i32
    %c0_i32_1 = arith.constant 0 : i32
    %c0_i32_2 = arith.constant 0 : i32
    return %c0_i32, %c0_i32_0, %c0_i32_1 : i32, i32, i32
  }
  func.func @transform_7(%arg0: i32) -> (i32, i32, i32) {
    %c0_i32 = arith.constant 0 : i32
    %c0_i32_0 = arith.constant 0 : i32
    %c0_i32_1 = arith.constant 0 : i32
    %c0_i32_2 = arith.constant 0 : i32
    return %c0_i32, %c0_i32_0, %c0_i32_1 : i32, i32, i32
  }
  func.func @transform_8(%arg0: i32) -> (i32, i32, i32) {
    %c0_i32 = arith.constant 0 : i32
    %c0_i32_0 = arith.constant 0 : i32
    %c0_i32_1 = arith.constant 0 : i32
    %c0_i32_2 = arith.constant 0 : i32
    return %c0_i32, %c0_i32_0, %c0_i32_1 : i32, i32, i32
  }
  func.func @transform_9(%arg0: i32) -> (i32, i32, i32) {
    %c0_i32 = arith.constant 0 : i32
    %c0_i32_0 = arith.constant 0 : i32
    %c0_i32_1 = arith.constant 0 : i32
    %c0_i32_2 = arith.constant 0 : i32
    return %c0_i32, %c0_i32_0, %c0_i32_1 : i32, i32, i32
  }
  func.func @transform_10(%arg0: i32) -> (i32, i32, i32) {
    %c0_i32 = arith.constant 0 : i32
    %c0_i32_0 = arith.constant 0 : i32
    %c0_i32_1 = arith.constant 0 : i32
    return %arg0, %c0_i32, %c0_i32_0 : i32, i32, i32
  }
}

</mosaic_0001>

<llo_original>
// kernel: decoder_fwd.1
$region0: #{decoder_fwd.1}
  #allocation0 [shape = 'u32[]', space=smem, size = 0x4, offset = 0x4, fixed_abs, tag = 'smem constant byte address 0x4 - core index']
  #allocation1 [shape = 'u32[144,128]{1,0:T(1,128)}', space=vmem, size = 0x12000, scoped, tag = 'internal scratch']
  %s0 = inlined_call_operand.vmem [shape: f32[2,8,32], index: 0, kind: input, shape index: {}]
  %s1 = inlined_call_operand.vmem [shape: f32[2,8,32], index: 1, kind: input, shape index: {}]
  %s2 = inlined_call_operand.vmem [shape: f32[3,32,48], index: 2, kind: input, shape index: {}]
  %s3 = inlined_call_operand.vmem [shape: f32[3,32,16], index: 3, kind: input, shape index: {}]
  %s4 = inlined_call_operand.vmem [shape: f32[32,96], index: 4, kind: input, shape index: {}]
  %s5 = inlined_call_operand.vmem [shape: f32[6,16,32], index: 5, kind: input, shape index: {}]
  %s6 = inlined_call_operand.vmem [shape: f32[3,32,64], index: 6, kind: input, shape index: {}]
  %s7 = inlined_call_operand.vmem [shape: f32[3,1,64], index: 7, kind: input, shape index: {}]
  %s8 = inlined_call_operand.vmem [shape: f32[3,64,32], index: 8, kind: input, shape index: {}]
  %s9 = inlined_call_operand.vmem [shape: f32[3,1,32], index: 9, kind: input, shape index: {}]
  %s10 = inlined_call_operand.hbm [shape: f32[2,8,32], index: 10, kind: output, shape index: {}]
  %s11 = sld [smem:[#allocation0]]
  $region73: #{decoder_fwd.1} parent=0
    _
  %s13 = ssub.s32 1, %s11
  %s14 = scalar_select 0, %s13, %s11
  $region1: #{decoder_fwd.1} parent=0
    #allocation2 [shape = 'u8[8192]{0}', space=vmem, size = 0x2000, scoped, tag = 'output window, operand 0']
    #allocation3 [shape = 's32[2]{0}', space=sflag, size = 0x8, scoped, tag = 'scoped memory for decoder_fwd.1']
    %15 = vsyncpa [#allocation3], 0
    %s16 = scalar_lea.sflag [#allocation3], 1
    %17 = vsyncpa %s16, 0
    loop: start=0, step=1, limit=4
    $region2: #{decoder_fwd.1} parent=1 // loop_pre_header
      _
    $region3: #{decoder_fwd.1} parent=1 // loop_header
      %s19 = sphi 0, %s23
      %p20 = scmp.ge.s32.totalorder %s19, 4
      %s29 = sphi 0, %s31
      %s32 = sphi 0, %s29
      %s33 = sphi 0, %s32
      %s49 = sphi 0, %s33
      %s55 = sphi 0, %s57
      %s58 = sphi 0, %s55
      %s59 = sphi 0, %s58
      %s75 = sphi 0, %s59
      %s79 = sphi 0, %s79
      %s81 = sphi 0, %s79
      %s82 = sphi 0, %s81
      %s96 = sphi 0, %s82
      %s100 = sphi 0, %s100
      %s102 = sphi 0, %s100
      %s103 = sphi 0, %s102
      %s117 = sphi 0, %s103
      %s121 = sphi 0, %s121
      %s123 = sphi 0, %s121
      %s124 = sphi 0, %s123
      %s138 = sphi 0, %s124
      %s142 = sphi 0, %s142
      %s144 = sphi 0, %s142
      %s145 = sphi 0, %s144
      %s159 = sphi 0, %s145
      %s163 = sphi 0, %s163
      %s165 = sphi 0, %s163
      %s166 = sphi 0, %s165
      %s180 = sphi 0, %s166
      %s184 = sphi 0, %s184
      %s186 = sphi 0, %s184
      %s187 = sphi 0, %s186
      %s201 = sphi 0, %s187
      %s205 = sphi 0, %s205
      %s207 = sphi 0, %s205
      %s208 = sphi 0, %s207
      %s222 = sphi 0, %s208
      %s226 = sphi 0, %s226
      %s228 = sphi 0, %s226
      %s229 = sphi 0, %s228
      %s243 = sphi 0, %s229
      %s249 = sphi 0, %s251
      %s252 = sphi 0, %s249
      %s253 = sphi 0, %s252
      %s269 = sphi 0, %s253
    $region4: #{decoder_fwd.1} parent=1 // loop_header_branch
      %22 = sbr.rel (%p20) target = $region8
    $region5: #{decoder_fwd.1} parent=1 // loop_body
      %s24 = ssub.s32 %s19, 1
      %s25 = ssub.s32 %s19, 2
      %s26 = sadd.s32 %s19, 1
      %s27 = ssub.s32 %s19, %s26
      %p28 = scmp.eq.s32.totalorder %s27, 0
      %s30 = sadd.s32 %s29, 1
      %s31 = scalar_select %p28, %s29, %s30
      %p34 = pneg %p28
      %p35 = scmp.eq.s32.totalorder %s19, 1
      %p36 = por %p34, %p35
      %p37 = scmp.ne.s32.totalorder %s29, %s32
      %p38 = scmp.eq.s32.totalorder %s19, 0
      %p39 = por %p37, %p38
      %p40 = scmp.ne.s32.totalorder %s29, %s32
      %p41 = scmp.eq.s32.totalorder %s24, 1
      %p42 = por %p40, %p41
      %p43 = scmp.ne.s32.totalorder %s32, %s33
      %p44 = scmp.eq.s32.totalorder %s24, 0
      %p45 = por %p43, %p44
      %p46 = scmp.ne.s32.totalorder %s32, %s33
      %p47 = scmp.eq.s32.totalorder %s25, 1
      %p48 = por %p46, %p47
      %p50 = scmp.ne.s32.totalorder %s33, %s49
      %p51 = scmp.eq.s32.totalorder %s25, 0
      %p52 = por %p50, %p51
      %s53 = ssub.s32 %s19, %s26
      %p54 = scmp.eq.s32.totalorder %s53, 0
      %s56 = sadd.s32 %s55, 1
      %s57 = scalar_select %p54, %s55, %s56
      %p60 = pneg %p54
      %p61 = scmp.eq.s32.totalorder %s19, 1
      %p62 = por %p60, %p61
      %p63 = scmp.ne.s32.totalorder %s55, %s58
      %p64 = scmp.eq.s32.totalorder %s19, 0
      %p65 = por %p63, %p64
      %p66 = scmp.ne.s32.totalorder %s55, %s58
      %p67 = scmp.eq.s32.totalorder %s24, 1
      %p68 = por %p66, %p67
      %p69 = scmp.ne.s32.totalorder %s58, %s59
      %p70 = scmp.eq.s32.totalorder %s24, 0
      %p71 = por %p69, %p70
      %p72 = scmp.ne.s32.totalorder %s58, %s59
      %p73 = scmp.eq.s32.totalorder %s25, 1
      %p74 = por %p72, %p73
      %p76 = scmp.ne.s32.totalorder %s59, %s75
      %p77 = scmp.eq.s32.totalorder %s25, 0
      %p78 = por %p76, %p77
      %s80 = sadd.s32 %s79, 1
      %p83 = scmp.eq.s32.totalorder %s19, 1
      %p84 = scmp.ne.s32.totalorder %s79, %s81
      %p85 = scmp.eq.s32.totalorder %s19, 0
      %p86 = por %p84, %p85
      %p87 = scmp.ne.s32.totalorder %s79, %s81
      %p88 = scmp.eq.s32.totalorder %s24, 1
      %p89 = por %p87, %p88
      %p90 = scmp.ne.s32.totalorder %s81, %s82
      %p91 = scmp.eq.s32.totalorder %s24, 0
      %p92 = por %p90, %p91
      %p93 = scmp.ne.s32.totalorder %s81, %s82
      %p94 = scmp.eq.s32.totalorder %s25, 1
      %p95 = por %p93, %p94
      %p97 = scmp.ne.s32.totalorder %s82, %s96
      %p98 = scmp.eq.s32.totalorder %s25, 0
      %p99 = por %p97, %p98
      %s101 = sadd.s32 %s100, 1
      %p104 = scmp.eq.s32.totalorder %s19, 1
      %p105 = scmp.ne.s32.totalorder %s100, %s102
      %p106 = scmp.eq.s32.totalorder %s19, 0
      %p107 = por %p105, %p106
      %p108 = scmp.ne.s32.totalorder %s100, %s102
      %p109 = scmp.eq.s32.totalorder %s24, 1
      %p110 = por %p108, %p109
      %p111 = scmp.ne.s32.totalorder %s102, %s103
      %p112 = scmp.eq.s32.totalorder %s24, 0
      %p113 = por %p111, %p112
      %p114 = scmp.ne.s32.totalorder %s102, %s103
      %p115 = scmp.eq.s32.totalorder %s25, 1
      %p116 = por %p114, %p115
      %p118 = scmp.ne.s32.totalorder %s103, %s117
      %p119 = scmp.eq.s32.totalorder %s25, 0
      %p120 = por %p118, %p119
      %s122 = sadd.s32 %s121, 1
      %p125 = scmp.eq.s32.totalorder %s19, 1
      %p126 = scmp.ne.s32.totalorder %s121, %s123
      %p127 = scmp.eq.s32.totalorder %s19, 0
      %p128 = por %p126, %p127
      %p129 = scmp.ne.s32.totalorder %s121, %s123
      %p130 = scmp.eq.s32.totalorder %s24, 1
      %p131 = por %p129, %p130
      %p132 = scmp.ne.s32.totalorder %s123, %s124
      %p133 = scmp.eq.s32.totalorder %s24, 0
      %p134 = por %p132, %p133
      %p135 = scmp.ne.s32.totalorder %s123, %s124
      %p136 = scmp.eq.s32.totalorder %s25, 1
      %p137 = por %p135, %p136
      %p139 = scmp.ne.s32.totalorder %s124, %s138
      %p140 = scmp.eq.s32.totalorder %s25, 0
      %p141 = por %p139, %p140
      %s143 = sadd.s32 %s142, 1
      %p146 = scmp.eq.s32.totalorder %s19, 1
      %p147 = scmp.ne.s32.totalorder %s142, %s144
      %p148 = scmp.eq.s32.totalorder %s19, 0
      %p149 = por %p147, %p148
      %p150 = scmp.ne.s32.totalorder %s142, %s144
      %p151 = scmp.eq.s32.totalorder %s24, 1
      %p152 = por %p150, %p151
      %p153 = scmp.ne.s32.totalorder %s144, %s145
      %p154 = scmp.eq.s32.totalorder %s24, 0
      %p155 = por %p153, %p154
      %p156 = scmp.ne.s32.totalorder %s144, %s145
      %p157 = scmp.eq.s32.totalorder %s25, 1
      %p158 = por %p156, %p157
      %p160 = scmp.ne.s32.totalorder %s145, %s159
      %p161 = scmp.eq.s32.totalorder %s25, 0
      %p162 = por %p160, %p161
      %s164 = sadd.s32 %s163, 1
      %p167 = scmp.eq.s32.totalorder %s19, 1
      %p168 = scmp.ne.s32.totalorder %s163, %s165
      %p169 = scmp.eq.s32.totalorder %s19, 0
      %p170 = por %p168, %p169
      %p171 = scmp.ne.s32.totalorder %s163, %s165
      %p172 = scmp.eq.s32.totalorder %s24, 1
      %p173 = por %p171, %p172
      %p174 = scmp.ne.s32.totalorder %s165, %s166
      %p175 = scmp.eq.s32.totalorder %s24, 0
      %p176 = por %p174, %p175
      %p177 = scmp.ne.s32.totalorder %s165, %s166
      %p178 = scmp.eq.s32.totalorder %s25, 1
      %p179 = por %p177, %p178
      %p181 = scmp.ne.s32.totalorder %s166, %s180
      %p182 = scmp.eq.s32.totalorder %s25, 0
      %p183 = por %p181, %p182
      %s185 = sadd.s32 %s184, 1
      %p188 = scmp.eq.s32.totalorder %s19, 1
      %p189 = scmp.ne.s32.totalorder %s184, %s186
      %p190 = scmp.eq.s32.totalorder %s19, 0
      %p191 = por %p189, %p190
      %p192 = scmp.ne.s32.totalorder %s184, %s186
      %p193 = scmp.eq.s32.totalorder %s24, 1
      %p194 = por %p192, %p193
      %p195 = scmp.ne.s32.totalorder %s186, %s187
      %p196 = scmp.eq.s32.totalorder %s24, 0
      %p197 = por %p195, %p196
      %p198 = scmp.ne.s32.totalorder %s186, %s187
      %p199 = scmp.eq.s32.totalorder %s25, 1
      %p200 = por %p198, %p199
      %p202 = scmp.ne.s32.totalorder %s187, %s201
      %p203 = scmp.eq.s32.totalorder %s25, 0
      %p204 = por %p202, %p203
      %s206 = sadd.s32 %s205, 1
      %p209 = scmp.eq.s32.totalorder %s19, 1
      %p210 = scmp.ne.s32.totalorder %s205, %s207
      %p211 = scmp.eq.s32.totalorder %s19, 0
      %p212 = por %p210, %p211
      %p213 = scmp.ne.s32.totalorder %s205, %s207
      %p214 = scmp.eq.s32.totalorder %s24, 1
      %p215 = por %p213, %p214
      %p216 = scmp.ne.s32.totalorder %s207, %s208
      %p217 = scmp.eq.s32.totalorder %s24, 0
      %p218 = por %p216, %p217
      %p219 = scmp.ne.s32.totalorder %s207, %s208
      %p220 = scmp.eq.s32.totalorder %s25, 1
      %p221 = por %p219, %p220
      %p223 = scmp.ne.s32.totalorder %s208, %s222
      %p224 = scmp.eq.s32.totalorder %s25, 0
      %p225 = por %p223, %p224
      %s227 = sadd.s32 %s226, 1
      %p230 = scmp.eq.s32.totalorder %s19, 1
      %p231 = scmp.ne.s32.totalorder %s226, %s228
      %p232 = scmp.eq.s32.totalorder %s19, 0
      %p233 = por %p231, %p232
      %p234 = scmp.ne.s32.totalorder %s226, %s228
      %p235 = scmp.eq.s32.totalorder %s24, 1
      %p236 = por %p234, %p235
      %p237 = scmp.ne.s32.totalorder %s228, %s229
      %p238 = scmp.eq.s32.totalorder %s24, 0
      %p239 = por %p237, %p238
      %p240 = scmp.ne.s32.totalorder %s228, %s229
      %p241 = scmp.eq.s32.totalorder %s25, 1
      %p242 = por %p240, %p241
      %p244 = scmp.ne.s32.totalorder %s229, %s243
      %p245 = scmp.eq.s32.totalorder %s25, 0
      %p246 = por %p244, %p245
      %s247 = ssub.s32 %s19, %s26
      %p248 = scmp.eq.s32.totalorder %s247, 0
      %s250 = sadd.s32 %s249, 1
      %s251 = scalar_select %p248, %s249, %s250
      %p254 = pneg %p248
      %p255 = scmp.eq.s32.totalorder %s19, 1
      %p256 = por %p254, %p255
      %p257 = scmp.ne.s32.totalorder %s249, %s252
      %p258 = scmp.eq.s32.totalorder %s19, 0
      %p259 = por %p257, %p258
      %p260 = scmp.ne.s32.totalorder %s249, %s252
      %p261 = scmp.eq.s32.totalorder %s24, 1
      %p262 = por %p260, %p261
      %p263 = scmp.ne.s32.totalorder %s252, %s253
      %p264 = scmp.eq.s32.totalorder %s24, 0
      %p265 = por %p263, %p264
      %p266 = scmp.ne.s32.totalorder %s252, %s253
      %p267 = scmp.eq.s32.totalorder %s25, 1
      %p268 = por %p266, %p267
      %p270 = scmp.ne.s32.totalorder %s253, %s269
      %p271 = scmp.eq.s32.totalorder %s25, 0
      %p272 = por %p270, %p271
      %p273 = scmp.le.s32.totalorder 1, %s19
      %p274 = scmp.lt.s32.totalorder %s19, 3
      %p275 = pnand %p273, %p274
      %p276 = pneg %p275
      // Predicated region
      $region9: #{decoder_fwd.1} parent=5 // pred_check
        _
      $region10: #{decoder_fwd.1} parent=5 // pred_check_branch
        %278 = sbr.rel (%p275) target = $region12
      $region11: #{decoder_fwd.1} parent=5 // pred_region
        %s279 = ssub.s32 %s19, 1
        // Predicated region
        $region13: #{decoder_fwd.1} parent=11 // pred_check
          %p280 = pneg %p92
        $region14: #{decoder_fwd.1} parent=11 // pred_check_branch
          %282 = sbr.rel (%p280) target = $region16
        $region15: #{decoder_fwd.1} parent=11 // pred_region
          _
        $region16: #{decoder_fwd.1} parent=11 // pred_fallthru
          _
        // Predicated region
        $region17: #{decoder_fwd.1} parent=11 // pred_check
          %p283 = pneg %p113
        $region18: #{decoder_fwd.1} parent=11 // pred_check_branch
          %285 = sbr.rel (%p283) target = $region20
        $region19: #{decoder_fwd.1} parent=11 // pred_region
          _
        $region20: #{decoder_fwd.1} parent=11 // pred_fallthru
          _
        // Predicated region
        $region21: #{decoder_fwd.1} parent=11 // pred_check
          %p286 = pneg %p134
        $region22: #{decoder_fwd.1} parent=11 // pred_check_branch
          %288 = sbr.rel (%p286) target = $region24
        $region23: #{decoder_fwd.1} parent=11 // pred_region
          _
        $region24: #{decoder_fwd.1} parent=11 // pred_fallthru
          _
        // Predicated region
        $region25: #{decoder_fwd.1} parent=11 // pred_check
          %p289 = pneg %p155
        $region26: #{decoder_fwd.1} parent=11 // pred_check_branch
          %291 = sbr.rel (%p289) target = $region28
        $region27: #{decoder_fwd.1} parent=11 // pred_region
          _
        $region28: #{decoder_fwd.1} parent=11 // pred_fallthru
          _
        // Predicated region
        $region29: #{decoder_fwd.1} parent=11 // pred_check
          %p292 = pneg %p176
        $region30: #{decoder_fwd.1} parent=11 // pred_check_branch
          %294 = sbr.rel (%p292) target = $region32
        $region31: #{decoder_fwd.1} parent=11 // pred_region
          _
        $region32: #{decoder_fwd.1} parent=11 // pred_fallthru
          _
        // Predicated region
        $region33: #{decoder_fwd.1} parent=11 // pred_check
          %p295 = pneg %p197
        $region34: #{decoder_fwd.1} parent=11 // pred_check_branch
          %297 = sbr.rel (%p295) target = $region36
        $region35: #{decoder_fwd.1} parent=11 // pred_region
          _
        $region36: #{decoder_fwd.1} parent=11 // pred_fallthru
          _
        // Predicated region
        $region37: #{decoder_fwd.1} parent=11 // pred_check
          %p298 = pneg %p218
        $region38: #{decoder_fwd.1} parent=11 // pred_check_branch
          %300 = sbr.rel (%p298) target = $region40
        $region39: #{decoder_fwd.1} parent=11 // pred_region
          _
        $region40: #{decoder_fwd.1} parent=11 // pred_fallthru
          _
        // Predicated region
        $region41: #{decoder_fwd.1} parent=11 // pred_check
          %p301 = pneg %p239
        $region42: #{decoder_fwd.1} parent=11 // pred_check_branch
          %303 = sbr.rel (%p301) target = $region44
        $region43: #{decoder_fwd.1} parent=11 // pred_region
          _
        $region44: #{decoder_fwd.1} parent=11 // pred_fallthru
          _
      $region12: #{decoder_fwd.1} parent=5 // pred_fallthru
        _
      %p304 = scmp.lt.s32.totalorder %s19, 2
      // Predicated region
      $region45: #{decoder_fwd.1} parent=5 // pred_check
        %p305 = pneg %p304
      $region46: #{decoder_fwd.1} parent=5 // pred_check_branch
        %307 = sbr.rel (%p305) target = $region48
      $region47: #{decoder_fwd.1} parent=5 // pred_region
        // Predicated region
        $region49: #{decoder_fwd.1} parent=47 // pred_check
          %p308 = pneg %p39
        $region50: #{decoder_fwd.1} parent=47 // pred_check_branch
          %310 = sbr.rel (%p308) target = $region52
        $region51: #{decoder_fwd.1} parent=47 // pred_region
          %p311 = scmp.lt.s32.totalorder %s19, 1
          %s312 = scalar_select %p311, %s19, 1
          %s313 = smul.addr %s312, 8
          %s314 = scalar_lea.vmem %s0, %s313
        $region52: #{decoder_fwd.1} parent=47 // pred_fallthru
          _
        // Predicated region
        $region53: #{decoder_fwd.1} parent=47 // pred_check
          %p315 = pneg %p65
        $region54: #{decoder_fwd.1} parent=47 // pred_check_branch
          %317 = sbr.rel (%p315) target = $region56
        $region55: #{decoder_fwd.1} parent=47 // pred_region
          %p318 = scmp.lt.s32.totalorder %s19, 1
          %s319 = scalar_select %p318, %s19, 1
          %s320 = smul.addr %s319, 8
          %s321 = scalar_lea.vmem %s1, %s320
        $region56: #{decoder_fwd.1} parent=47 // pred_fallthru
          _
      $region48: #{decoder_fwd.1} parent=5 // pred_fallthru
        _
      %p322 = scmp.le.s32.totalorder 1, %s19
      %p323 = scmp.lt.s32.totalorder %s19, 3
      %p324 = pnand %p322, %p323
      %p325 = pneg %p324
      // Predicated region
      $region57: #{decoder_fwd.1} parent=5 // pred_check
        _
      $region58: #{decoder_fwd.1} parent=5 // pred_check_branch
        %327 = sbr.rel (%p324) target = $region60
      $region59: #{decoder_fwd.1} parent=5 // pred_region
        %s328 = ssub.s32 %s19, 1
        %p329 = scmp.lt.s32.totalorder %s24, 1
        %s330 = scalar_select %p329, %s24, 1
        %s331 = smul.addr %s330, 8
        %s332 = scalar_lea.vmem %s0, %s331
        %p333 = pneg %p45
        %p334 = pneg %p42
        %p335 = scmp.lt.s32.totalorder %s24, 1
        %s336 = scalar_select %p335, %s24, 1
        %s337 = smul.addr %s336, 8
        %s338 = scalar_lea.vmem %s1, %s337
        %p339 = pneg %p71
        %p340 = pneg %p68
        %p341 = pneg %p92
        %p342 = pneg %p89
        %p343 = pneg %p113
        %p344 = pneg %p110
        %p345 = pneg %p134
        %p346 = pneg %p131
        %p347 = pneg %p155
        %p348 = pneg %p152
        %p349 = pneg %p176
        %p350 = pneg %p173
        %p351 = pneg %p197
        %p352 = pneg %p194
        %p353 = pneg %p218
        %p354 = pneg %p215
        %p355 = pneg %p239
        %p356 = pneg %p236
        %p357 = pneg %p265
        %p358 = pneg %p262
        %s359 = sand.u32 %s252, 1
        %s360 = scalar_lea.sflag [#allocation3], %s359
        %s361 = sand.u32 %s252, 1
        %s362 = smul.addr %s361, 8
        %s363 = scalar_lea.vmem [#allocation2], %s362
        %p364 = scmp.lt.s32.totalorder %s24, 1
        %s365 = scalar_select %p364, %s24, 1
        %s366 = smul.addr %s365, 8
        %s367 = scalar_lea.vmem %s0, %s366
        %p368 = scmp.lt.s32.totalorder %s24, 1
        %s369 = scalar_select %p368, %s24, 1
        %s370 = smul.addr %s369, 8
        %s371 = scalar_lea.vmem %s1, %s370
        %v372 = vld [vmem:[%s367] sm:$0xff]
        %v373 = vld [vmem:[%s371] sm:$0xff]
        %vm374 = vcmask 261120
        %v375 = vsel %vm374, %v372, 0.0
        %376 = vadd.xlane.f32.xlu0 %v375
        %v377 = vpop.xlane.xlu0 %376
        %v378 = vrot.slane %v377, 4
        %v379 = vadd.f32 %v377, %v378
        %v380 = vrot.slane %v379, 2
        %v381 = vadd.f32 %v379, %v380
        %v382 = vrot.slane %v381, 1
        %v383 = vadd.f32 %v381, %v382
        %s384 = vtos %v383
        %v385 = vrcp.pop 256.0
        %s386 = vtos %v385
        %s387 = smul.f32 %s384, %s386
        %v388 = vmul.f32 %v372, %v372
        %v389 = vsel %vm374, %v388, 0.0
        %390 = vadd.xlane.f32.xlu0 %v389
        %v391 = vpop.xlane.xlu0 %390
        %v392 = vrot.slane %v391, 4
        %v393 = vadd.f32 %v391, %v392
        %v394 = vrot.slane %v393, 2
        %v395 = vadd.f32 %v393, %v394
        %v396 = vrot.slane %v395, 1
        %v397 = vadd.f32 %v395, %v396
        %s398 = vtos %v397
        %v399 = vrcp.pop 256.0
        %s400 = vtos %v399
        %s401 = smul.f32 %s398, %s400
        %s402 = smul.f32 %s387, %s387
        %s403 = ssub.f32 %s401, %s402
        %s404 = smax.f32 %s403, 0.0
        %v405 = vstv %s387
        %v406 = vsub.f32 %v372, %v405
        %s407 = sadd.f32 %s404, 1e-05
        %v408 = vstv %s407
        %v409 = vrsqrt.pop %v408
        %s410 = vtos %v409
        %v411 = vstv %s410
        %v412 = vmul.f32 %v406, %v411
        %v413 = vld [vmem:[%s4] sm:$0xff]
        %v414 = vld [vmem:[%s4 + $0x8] sm:$0xff]
        %v415 = vld [vmem:[%s4 + $0x10] sm:$0xff]
        %v416 = vld [vmem:[%s4 + $0x18] sm:$0xff]
        %v418 = vsel %vm374, %v412, 0
        %420 = vmatprep.subr.mxu0 0.0
        %421 = vmatpush1.msra.mxu0 %v413
        %422 = vmatprep.subr.mxu0 0.0
        %423 = vmatpush1.msra.mxu0 %v414
        %424 = vmatprep.subr.mxu0 0.0
        %425 = vmatpush1.msra.mxu0 %v415
        %426 = vmatprep.subr.mxu0 0.0
        %427 = vmatpush1.msra.mxu0 %v416
        %428 = vmatprep.subr.mxu0 0.0
        %429 = vmatpush1.msra.mxu0 0.0
        %430 = vmatprep.subr.mxu0 0.0
        %431 = vmatpush1.msra.mxu0 0.0
        %432 = vmatprep.subr.mxu0 0.0
        %433 = vmatpush1.msra.mxu0 0.0
        %434 = vmatprep.subr.mxu0 0.0
        %435 = vmatpush1.msra.mxu0 0.0
        %436 = vmatprep.subr.mxu0 0.0
        %437 = vmatpush1.msra.mxu0 0.0
        %438 = vmatprep.subr.mxu0 0.0
        %439 = vmatpush1.msra.mxu0 0.0
        %440 = vmatprep.subr.mxu0 0.0
        %441 = vmatpush1.msra.mxu0 0.0
        %442 = vmatprep.subr.mxu0 0.0
        %443 = vmatpush1.msra.mxu0 0.0
        %444 = vmatprep.subr.mxu0 0.0
        %445 = vmatpush1.msra.mxu0 0.0
        %446 = vmatprep.subr.mxu0 0.0
        %447 = vmatpush1.msra.mxu0 0.0
        %448 = vmatprep.subr.mxu0 0.0
        %449 = vmatpush1.msra.mxu0 0.0
        %450 = vmatprep.subr.mxu0 0.0
        %451 = vmatpush1.msra.mxu0 0.0
        %452 = vmatprep.subr.mxu0 0.0
        %453 = vmatpush1.msra.mxu0 0.0
        %454 = vmatprep.subr.mxu0 0.0
        %455 = vmatpush1.msra.mxu0 0.0
        %456 = vmatprep.subr.mxu0 0.0
        %457 = vmatpush1.msra.mxu0 0.0
        %458 = vmatprep.subr.mxu0 0.0
        %459 = vmatpush1.msra.mxu0 0.0
        %460 = vmatprep.subr.mxu0 0.0
        %461 = vmatpush1.msra.mxu0 0.0
        %462 = vmatprep.subr.mxu0 0.0
        %463 = vmatpush1.msra.mxu0 0.0
        %464 = vmatprep.subr.mxu0 0.0
        %465 = vmatpush1.msra.mxu0 0.0
        %466 = vmatprep.subr.mxu0 0.0
        %467 = vmatpush1.msra.mxu0 0.0
        %468 = vmatprep.subr.mxu0 0.0
        %469 = vmatpush1.msra.mxu0 0.0
        %470 = vmatprep.subr.mxu0 0.0
        %471 = vmatpush1.msra.mxu0 0.0
        %472 = vmatprep.subr.mxu0 0.0
        %473 = vmatpush1.msra.mxu0 0.0
        %474 = vmatprep.subr.mxu0 0.0
        %475 = vmatpush1.msra.mxu0 0.0
        %476 = vmatprep.subr.mxu0 0.0
        %477 = vmatpush1.msra.mxu0 0.0
        %478 = vmatprep.subr.mxu0 0.0
        %479 = vmatpush1.msra.mxu0 0.0
        %480 = vmatprep.subr.mxu0 0.0
        %481 = vmatpush1.msra.mxu0 0.0
        %482 = vmatprep.subr.mxu0 0.0
        %483 = vmatpush1.msra.mxu0 0.0
        %484 = vmatprep.mubr.f32.mxu0 0.0
        %485 = vmatmul.mubr.f32.gmra.mrb[0].mxu0 %v418
        %v486 = vpop.f32.mrb[0].mxu0
        %v487 = vadd.f32 0.0, %v486
        %v488 = vpop.f32.mrb[0].mxu0
        %489 = vdwg.mxu0
        %v490 = vlaneseq
        %v491 = vshrl.u32 %v490, 7
        %v492 = vlaneseq
        %v493 = vand.u32 %v492, 127
        %vm494 = vcmp.gt.s32.totalorder %v493, %v491
        %v495 = vsel %vm494, -inf, 0.0
        %v496 = vsel %vm374, %v373, 0.0
        %497 = vadd.xlane.f32.xlu0 %v496
        %v498 = vpop.xlane.xlu0 %497
        %v499 = vrot.slane %v498, 4
        %v500 = vadd.f32 %v498, %v499
        %v501 = vrot.slane %v500, 2
        %v502 = vadd.f32 %v500, %v501
        %v503 = vrot.slane %v502, 1
        %v504 = vadd.f32 %v502, %v503
        %s505 = vtos %v504
        %v506 = vrcp.pop 256.0
        %s507 = vtos %v506
        %s508 = smul.f32 %s505, %s507
        %v509 = vmul.f32 %v373, %v373
        %v510 = vsel %vm374, %v509, 0.0
        %511 = vadd.xlane.f32.xlu0 %v510
        %v512 = vpop.xlane.xlu0 %511
        %v513 = vrot.slane %v512, 4
        %v514 = vadd.f32 %v512, %v513
        %v515 = vrot.slane %v514, 2
        %v516 = vadd.f32 %v514, %v515
        %v517 = vrot.slane %v516, 1
        %v518 = vadd.f32 %v516, %v517
        %s519 = vtos %v518
        %v520 = vrcp.pop 256.0
        %s521 = vtos %v520
        %s522 = smul.f32 %s519, %s521
        %s523 = smul.f32 %s508, %s508
        %s524 = ssub.f32 %s522, %s523
        %s525 = smax.f32 %s524, 0.0
        %v526 = vstv %s508
        %v527 = vsub.f32 %v373, %v526
        %s528 = sadd.f32 %s525, 1e-05
        %v529 = vstv %s528
        %v530 = vrsqrt.pop %v529
        %s531 = vtos %v530
        %v532 = vstv %s531
        %v533 = vmul.f32 %v527, %v532
        %v534 = vld [vmem:[%s2] sm:$0xff]
        %v535 = vld [vmem:[%s2 + $0x8] sm:$0xff]
        %v536 = vld [vmem:[%s2 + $0x10] sm:$0xff]
        %v537 = vld [vmem:[%s2 + $0x18] sm:$0xff]
        %v539 = vsel %vm374, %v533, 0
        %541 = vmatprep.subr.mxu0 0.0
        %542 = vmatpush1.msra.mxu0 %v534
        %543 = vmatprep.subr.mxu0 0.0
        %544 = vmatpush1.msra.mxu0 %v535
        %545 = vmatprep.subr.mxu0 0.0
        %546 = vmatpush1.msra.mxu0 %v536
        %547 = vmatprep.subr.mxu0 0.0
        %548 = vmatpush1.msra.mxu0 %v537
        %549 = vmatprep.subr.mxu0 0.0
        %550 = vmatpush1.msra.mxu0 0.0
        %551 = vmatprep.subr.mxu0 0.0
        %552 = vmatpush1.msra.mxu0 0.0
        %553 = vmatprep.subr.mxu0 0.0
        %554 = vmatpush1.msra.mxu0 0.0
        %555 = vmatprep.subr.mxu0 0.0
        %556 = vmatpush1.msra.mxu0 0.0
        %557 = vmatprep.subr.mxu0 0.0
        %558 = vmatpush1.msra.mxu0 0.0
        %559 = vmatprep.subr.mxu0 0.0
        %560 = vmatpush1.msra.mxu0 0.0
        %561 = vmatprep.subr.mxu0 0.0
        %562 = vmatpush1.msra.mxu0 0.0
        %563 = vmatprep.subr.mxu0 0.0
        %564 = vmatpush1.msra.mxu0 0.0
        %565 = vmatprep.subr.mxu0 0.0
        %566 = vmatpush1.msra.mxu0 0.0
        %567 = vmatprep.subr.mxu0 0.0
        %568 = vmatpush1.msra.mxu0 0.0
        %569 = vmatprep.subr.mxu0 0.0
        %570 = vmatpush1.msra.mxu0 0.0
        %571 = vmatprep.subr.mxu0 0.0
        %572 = vmatpush1.msra.mxu0 0.0
        %573 = vmatprep.subr.mxu0 0.0
        %574 = vmatpush1.msra.mxu0 0.0
        %575 = vmatprep.subr.mxu0 0.0
        %576 = vmatpush1.msra.mxu0 0.0
        %577 = vmatprep.subr.mxu0 0.0
        %578 = vmatpush1.msra.mxu0 0.0
        %579 = vmatprep.subr.mxu0 0.0
        %580 = vmatpush1.msra.mxu0 0.0
        %581 = vmatprep.subr.mxu0 0.0
        %582 = vmatpush1.msra.mxu0 0.0
        %583 = vmatprep.subr.mxu0 0.0
        %584 = vmatpush1.msra.mxu0 0.0
        %585 = vmatprep.subr.mxu0 0.0
        %586 = vmatpush1.msra.mxu0 0.0
        %587 = vmatprep.subr.mxu0 0.0
        %588 = vmatpush1.msra.mxu0 0.0
        %589 = vmatprep.subr.mxu0 0.0
        %590 = vmatpush1.msra.mxu0 0.0
        %591 = vmatprep.subr.mxu0 0.0
        %592 = vmatpush1.msra.mxu0 0.0
        %593 = vmatprep.subr.mxu0 0.0
        %594 = vmatpush1.msra.mxu0 0.0
        %595 = vmatprep.subr.mxu0 0.0
        %596 = vmatpush1.msra.mxu0 0.0
        %597 = vmatprep.subr.mxu0 0.0
        %598 = vmatpush1.msra.mxu0 0.0
        %599 = vmatprep.subr.mxu0 0.0
        %600 = vmatpush1.msra.mxu0 0.0
        %601 = vmatprep.subr.mxu0 0.0
        %602 = vmatpush1.msra.mxu0 0.0
        %603 = vmatprep.subr.mxu0 0.0
        %604 = vmatpush1.msra.mxu0 0.0
        %605 = vmatprep.mubr.f32.mxu0 0.0
        %606 = vmatmul.mubr.f32.gmra.mrb[0].mxu0 %v539
        %v607 = vpop.f32.mrb[0].mxu0
        %v608 = vadd.f32 0.0, %v607
        %v609 = vpop.f32.mrb[0].mxu0
        %610 = vdwg.mxu0
        %612 = vrot.lane.b32.xlu0 %v608, 112
        %v613 = vpop.permute.xlu0 %612
        %vm614 = vcmask 64512
        %v615 = vsel %vm614, %v608, 0
        %v617 = vsel %vm614, %v613, 0
        %619 = vmatprep.subr.mxu0 0.0
        %620 = vmatpush1.xpose.msra.mxu0 %v617
        %621 = vmatprep.subr.mxu0 0.0
        %622 = vmatpush1.xpose.msra.mxu0 0.0
        %623 = vmatprep.subr.mxu0 0.0
        %624 = vmatpush1.xpose.msra.mxu0 0.0
        %625 = vmatprep.subr.mxu0 0.0
        %626 = vmatpush1.xpose.msra.mxu0 0.0
        %627 = vmatprep.subr.mxu0 0.0
        %628 = vmatpush1.xpose.msra.mxu0 0.0
        %629 = vmatprep.subr.mxu0 0.0
        %630 = vmatpush1.xpose.msra.mxu0 0.0
        %631 = vmatprep.subr.mxu0 0.0
        %632 = vmatpush1.xpose.msra.mxu0 0.0
        %633 = vmatprep.subr.mxu0 0.0
        %634 = vmatpush1.xpose.msra.mxu0 0.0
        %635 = vmatprep.subr.mxu0 0.0
        %636 = vmatpush1.xpose.msra.mxu0 0.0
        %637 = vmatprep.subr.mxu0 0.0
        %638 = vmatpush1.xpose.msra.mxu0 0.0
        %639 = vmatprep.subr.mxu0 0.0
        %640 = vmatpush1.xpose.msra.mxu0 0.0
        %641 = vmatprep.subr.mxu0 0.0
        %642 = vmatpush1.xpose.msra.mxu0 0.0
        %643 = vmatprep.subr.mxu0 0.0
        %644 = vmatpush1.xpose.msra.mxu0 0.0
        %645 = vmatprep.subr.mxu0 0.0
        %646 = vmatpush1.xpose.msra.mxu0 0.0
        %647 = vmatprep.subr.mxu0 0.0
        %648 = vmatpush1.xpose.msra.mxu0 0.0
        %649 = vmatprep.subr.mxu0 0.0
        %650 = vmatpush1.xpose.msra.mxu0 0.0
        %651 = vmatprep.subr.mxu0 0.0
        %652 = vmatpush1.xpose.msra.mxu0 0.0
        %653 = vmatprep.subr.mxu0 0.0
        %654 = vmatpush1.xpose.msra.mxu0 0.0
        %655 = vmatprep.subr.mxu0 0.0
        %656 = vmatpush1.xpose.msra.mxu0 0.0
        %657 = vmatprep.subr.mxu0 0.0
        %658 = vmatpush1.xpose.msra.mxu0 0.0
        %659 = vmatprep.subr.mxu0 0.0
        %660 = vmatpush1.xpose.msra.mxu0 0.0
        %661 = vmatprep.subr.mxu0 0.0
        %662 = vmatpush1.xpose.msra.mxu0 0.0
        %663 = vmatprep.subr.mxu0 0.0
        %664 = vmatpush1.xpose.msra.mxu0 0.0
        %665 = vmatprep.subr.mxu0 0.0
        %666 = vmatpush1.xpose.msra.mxu0 0.0
        %667 = vmatprep.subr.mxu0 0.0
        %668 = vmatpush1.xpose.msra.mxu0 0.0
        %669 = vmatprep.subr.mxu0 0.0
        %670 = vmatpush1.xpose.msra.mxu0 0.0
        %671 = vmatprep.subr.mxu0 0.0
        %672 = vmatpush1.xpose.msra.mxu0 0.0
        %673 = vmatprep.subr.mxu0 0.0
        %674 = vmatpush1.xpose.msra.mxu0 0.0
        %675 = vmatprep.subr.mxu0 0.0
        %676 = vmatpush1.xpose.msra.mxu0 0.0
        %677 = vmatprep.subr.mxu0 0.0
        %678 = vmatpush1.xpose.msra.mxu0 0.0
        %679 = vmatprep.subr.mxu0 0.0
        %680 = vmatpush1.xpose.msra.mxu0 0.0
        %681 = vmatprep.subr.mxu0 0.0
        %682 = vmatpush1.xpose.msra.mxu0 0.0
        %683 = vmatprep.mubr.f32.mxu0 0.0
        %684 = vmatmul.mubr.f32.gmra.mrb[0].mxu0 %v615
        %v685 = vpop.f32.mrb[0].mxu0
        %v686 = vadd.f32 0.0, %v685
        %v687 = vpop.f32.mrb[0].mxu0
        %688 = vdwg.mxu0
        %v689 = vmul.f32 %v686, 0.35355338
        %v690 = vadd.f32 %v689, %v495
        %v691 = vsel %vm614, %v690, -inf
        %692 = vmax.xlane.f32.xlu0 %v691
        %v693 = vpop.xlane.xlu0 %692
        %v694 = vsub.f32 %v690, %v693
        %v695 = vmul.f32 %v694, 1.442695
        %v696 = vpow.pop %v695
        %v697 = vsel %vm614, %v696, 0.0
        %698 = vadd.xlane.f32.xlu0 %v697
        %v699 = vpop.xlane.xlu0 %698
        %v700 = vrcp.pop %v699
        %v701 = vmul.f32 %v696, %v700
        %702 = vrot.lane.b32.xlu0 %v608, 96
        %v703 = vpop.permute.xlu0 %702
        %v706 = vsel %vm614, %v701, 0
        %708 = vmatprep.subr.mxu0 0.0
        %709 = vmatpush1.msra.mxu0 %v703
        %710 = vmatprep.subr.mxu0 0.0
        %711 = vmatpush1.msra.mxu0 0.0
        %712 = vmatprep.subr.mxu0 0.0
        %713 = vmatpush1.msra.mxu0 0.0
        %714 = vmatprep.subr.mxu0 0.0
        %715 = vmatpush1.msra.mxu0 0.0
        %716 = vmatprep.subr.mxu0 0.0
        %717 = vmatpush1.msra.mxu0 0.0
        %718 = vmatprep.subr.mxu0 0.0
        %719 = vmatpush1.msra.mxu0 0.0
        %720 = vmatprep.subr.mxu0 0.0
        %721 = vmatpush1.msra.mxu0 0.0
        %722 = vmatprep.subr.mxu0 0.0
        %723 = vmatpush1.msra.mxu0 0.0
        %724 = vmatprep.subr.mxu0 0.0
        %725 = vmatpush1.msra.mxu0 0.0
        %726 = vmatprep.subr.mxu0 0.0
        %727 = vmatpush1.msra.mxu0 0.0
        %728 = vmatprep.subr.mxu0 0.0
        %729 = vmatpush1.msra.mxu0 0.0
        %730 = vmatprep.subr.mxu0 0.0
        %731 = vmatpush1.msra.mxu0 0.0
        %732 = vmatprep.subr.mxu0 0.0
        %733 = vmatpush1.msra.mxu0 0.0
        %734 = vmatprep.subr.mxu0 0.0
        %735 = vmatpush1.msra.mxu0 0.0
        %736 = vmatprep.subr.mxu0 0.0
        %737 = vmatpush1.msra.mxu0 0.0
        %738 = vmatprep.subr.mxu0 0.0
        %739 = vmatpush1.msra.mxu0 0.0
        %740 = vmatprep.subr.mxu0 0.0
        %741 = vmatpush1.msra.mxu0 0.0
        %742 = vmatprep.subr.mxu0 0.0
        %743 = vmatpush1.msra.mxu0 0.0
        %744 = vmatprep.subr.mxu0 0.0
        %745 = vmatpush1.msra.mxu0 0.0
        %746 = vmatprep.subr.mxu0 0.0
        %747 = vmatpush1.msra.mxu0 0.0
        %748 = vmatprep.subr.mxu0 0.0
        %749 = vmatpush1.msra.mxu0 0.0
        %750 = vmatprep.subr.mxu0 0.0
        %751 = vmatpush1.msra.mxu0 0.0
        %752 = vmatprep.subr.mxu0 0.0
        %753 = vmatpush1.msra.mxu0 0.0
        %754 = vmatprep.subr.mxu0 0.0
        %755 = vmatpush1.msra.mxu0 0.0
        %756 = vmatprep.subr.mxu0 0.0
        %757 = vmatpush1.msra.mxu0 0.0
        %758 = vmatprep.subr.mxu0 0.0
        %759 = vmatpush1.msra.mxu0 0.0
        %760 = vmatprep.subr.mxu0 0.0
        %761 = vmatpush1.msra.mxu0 0.0
        %762 = vmatprep.subr.mxu0 0.0
        %763 = vmatpush1.msra.mxu0 0.0
        %764 = vmatprep.subr.mxu0 0.0
        %765 = vmatpush1.msra.mxu0 0.0
        %766 = vmatprep.subr.mxu0 0.0
        %767 = vmatpush1.msra.mxu0 0.0
        %768 = vmatprep.subr.mxu0 0.0
        %769 = vmatpush1.msra.mxu0 0.0
        %770 = vmatprep.subr.mxu0 0.0
        %771 = vmatpush1.msra.mxu0 0.0
        %772 = vmatprep.mubr.f32.mxu0 0.0
        %773 = vmatmul.mubr.f32.gmra.mrb[0].mxu0 %v706
        %v774 = vpop.f32.mrb[0].mxu0
        %v775 = vadd.f32 0.0, %v774
        %v776 = vpop.f32.mrb[0].mxu0
        %777 = vdwg.mxu0
        %778 = vrot.lane.b32.xlu0 %v608, 120
        %v779 = vpop.permute.xlu0 %778
        %780 = vrot.lane.b32.xlu0 %v608, 104
        %v781 = vpop.permute.xlu0 %780
        %v782 = vsel %vm614, %v779, 0
        %v784 = vsel %vm614, %v781, 0
        %786 = vmatprep.subr.mxu0 0.0
        %787 = vmatpush1.xpose.msra.mxu0 %v784
        %788 = vmatprep.subr.mxu0 0.0
        %789 = vmatpush1.xpose.msra.mxu0 0.0
        %790 = vmatprep.subr.mxu0 0.0
        %791 = vmatpush1.xpose.msra.mxu0 0.0
        %792 = vmatprep.subr.mxu0 0.0
        %793 = vmatpush1.xpose.msra.mxu0 0.0
        %794 = vmatprep.subr.mxu0 0.0
        %795 = vmatpush1.xpose.msra.mxu0 0.0
        %796 = vmatprep.subr.mxu0 0.0
        %797 = vmatpush1.xpose.msra.mxu0 0.0
        %798 = vmatprep.subr.mxu0 0.0
        %799 = vmatpush1.xpose.msra.mxu0 0.0
        %800 = vmatprep.subr.mxu0 0.0
        %801 = vmatpush1.xpose.msra.mxu0 0.0
        %802 = vmatprep.subr.mxu0 0.0
        %803 = vmatpush1.xpose.msra.mxu0 0.0
        %804 = vmatprep.subr.mxu0 0.0
        %805 = vmatpush1.xpose.msra.mxu0 0.0
        %806 = vmatprep.subr.mxu0 0.0
        %807 = vmatpush1.xpose.msra.mxu0 0.0
        %808 = vmatprep.subr.mxu0 0.0
        %809 = vmatpush1.xpose.msra.mxu0 0.0
        %810 = vmatprep.subr.mxu0 0.0
        %811 = vmatpush1.xpose.msra.mxu0 0.0
        %812 = vmatprep.subr.mxu0 0.0
        %813 = vmatpush1.xpose.msra.mxu0 0.0
        %814 = vmatprep.subr.mxu0 0.0
        %815 = vmatpush1.xpose.msra.mxu0 0.0
        %816 = vmatprep.subr.mxu0 0.0
        %817 = vmatpush1.xpose.msra.mxu0 0.0
        %818 = vmatprep.subr.mxu0 0.0
        %819 = vmatpush1.xpose.msra.mxu0 0.0
        %820 = vmatprep.subr.mxu0 0.0
        %821 = vmatpush1.xpose.msra.mxu0 0.0
        %822 = vmatprep.subr.mxu0 0.0
        %823 = vmatpush1.xpose.msra.mxu0 0.0
        %824 = vmatprep.subr.mxu0 0.0
        %825 = vmatpush1.xpose.msra.mxu0 0.0
        %826 = vmatprep.subr.mxu0 0.0
        %827 = vmatpush1.xpose.msra.mxu0 0.0
        %828 = vmatprep.subr.mxu0 0.0
        %829 = vmatpush1.xpose.msra.mxu0 0.0
        %830 = vmatprep.subr.mxu0 0.0
        %831 = vmatpush1.xpose.msra.mxu0 0.0
        %832 = vmatprep.subr.mxu0 0.0
        %833 = vmatpush1.xpose.msra.mxu0 0.0
        %834 = vmatprep.subr.mxu0 0.0
        %835 = vmatpush1.xpose.msra.mxu0 0.0
        %836 = vmatprep.subr.mxu0 0.0
        %837 = vmatpush1.xpose.msra.mxu0 0.0
        %838 = vmatprep.subr.mxu0 0.0
        %839 = vmatpush1.xpose.msra.mxu0 0.0
        %840 = vmatprep.subr.mxu0 0.0
        %841 = vmatpush1.xpose.msra.mxu0 0.0
        %842 = vmatprep.subr.mxu0 0.0
        %843 = vmatpush1.xpose.msra.mxu0 0.0
        %844 = vmatprep.subr.mxu0 0.0
        %845 = vmatpush1.xpose.msra.mxu0 0.0
        %846 = vmatprep.subr.mxu0 0.0
        %847 = vmatpush1.xpose.msra.mxu0 0.0
        %848 = vmatprep.subr.mxu0 0.0
        %849 = vmatpush1.xpose.msra.mxu0 0.0
        %850 = vmatprep.mubr.f32.mxu0 0.0
        %851 = vmatmul.mubr.f32.gmra.mrb[0].mxu0 %v782
        %v852 = vpop.f32.mrb[0].mxu0
        %v853 = vadd.f32 0.0, %v852
        %v854 = vpop.f32.mrb[0].mxu0
        %855 = vdwg.mxu0
        %v856 = vmul.f32 %v853, 0.35355338
        %v857 = vadd.f32 %v856, %v495
        %v858 = vsel %vm614, %v857, -inf
        %859 = vmax.xlane.f32.xlu0 %v858
        %v860 = vpop.xlane.xlu0 %859
        %v861 = vsub.f32 %v857, %v860
        %v862 = vmul.f32 %v861, 1.442695
        %v863 = vpow.pop %v862
        %v864 = vsel %vm614, %v863, 0.0
        %865 = vadd.xlane.f32.xlu0 %v864
        %v866 = vpop.xlane.xlu0 %865
        %v867 = vrcp.pop %v866
        %v868 = vmul.f32 %v863, %v867
        %869 = vrot.lane.b32.xlu0 %v608, 88
        %v870 = vpop.permute.xlu0 %869
        %v873 = vsel %vm614, %v868, 0
        %875 = vmatprep.subr.mxu0 0.0
        %876 = vmatpush1.msra.mxu0 %v870
        %877 = vmatprep.subr.mxu0 0.0
        %878 = vmatpush1.msra.mxu0 0.0
        %879 = vmatprep.subr.mxu0 0.0
        %880 = vmatpush1.msra.mxu0 0.0
        %881 = vmatprep.subr.mxu0 0.0
        %882 = vmatpush1.msra.mxu0 0.0
        %883 = vmatprep.subr.mxu0 0.0
        %884 = vmatpush1.msra.mxu0 0.0
        %885 = vmatprep.subr.mxu0 0.0
        %886 = vmatpush1.msra.mxu0 0.0
        %887 = vmatprep.subr.mxu0 0.0
        %888 = vmatpush1.msra.mxu0 0.0
        %889 = vmatprep.subr.mxu0 0.0
        %890 = vmatpush1.msra.mxu0 0.0
        %891 = vmatprep.subr.mxu0 0.0
        %892 = vmatpush1.msra.mxu0 0.0
        %893 = vmatprep.subr.mxu0 0.0
        %894 = vmatpush1.msra.mxu0 0.0
        %895 = vmatprep.subr.mxu0 0.0
        %896 = vmatpush1.msra.mxu0 0.0
        %897 = vmatprep.subr.mxu0 0.0
        %898 = vmatpush1.msra.mxu0 0.0
        %899 = vmatprep.subr.mxu0 0.0
        %900 = vmatpush1.msra.mxu0 0.0
        %901 = vmatprep.subr.mxu0 0.0
        %902 = vmatpush1.msra.mxu0 0.0
        %903 = vmatprep.subr.mxu0 0.0
        %904 = vmatpush1.msra.mxu0 0.0
        %905 = vmatprep.subr.mxu0 0.0
        %906 = vmatpush1.msra.mxu0 0.0
        %907 = vmatprep.subr.mxu0 0.0
        %908 = vmatpush1.msra.mxu0 0.0
        %909 = vmatprep.subr.mxu0 0.0
        %910 = vmatpush1.msra.mxu0 0.0
        %911 = vmatprep.subr.mxu0 0.0
        %912 = vmatpush1.msra.mxu0 0.0
        %913 = vmatprep.subr.mxu0 0.0
        %914 = vmatpush1.msra.mxu0 0.0
        %915 = vmatprep.subr.mxu0 0.0
        %916 = vmatpush1.msra.mxu0 0.0
        %917 = vmatprep.subr.mxu0 0.0
        %918 = vmatpush1.msra.mxu0 0.0
        %919 = vmatprep.subr.mxu0 0.0
        %920 = vmatpush1.msra.mxu0 0.0
        %921 = vmatprep.subr.mxu0 0.0
        %922 = vmatpush1.msra.mxu0 0.0
        %923 = vmatprep.subr.mxu0 0.0
        %924 = vmatpush1.msra.mxu0 0.0
        %925 = vmatprep.subr.mxu0 0.0
        %926 = vmatpush1.msra.mxu0 0.0
        %927 = vmatprep.subr.mxu0 0.0
        %928 = vmatpush1.msra.mxu0 0.0
        %929 = vmatprep.subr.mxu0 0.0
        %930 = vmatpush1.msra.mxu0 0.0
        %931 = vmatprep.subr.mxu0 0.0
        %932 = vmatpush1.msra.mxu0 0.0
        %933 = vmatprep.subr.mxu0 0.0
        %934 = vmatpush1.msra.mxu0 0.0
        %935 = vmatprep.subr.mxu0 0.0
        %936 = vmatpush1.msra.mxu0 0.0
        %937 = vmatprep.subr.mxu0 0.0
        %938 = vmatpush1.msra.mxu0 0.0
        %939 = vmatprep.mubr.f32.mxu0 0.0
        %940 = vmatmul.mubr.f32.gmra.mrb[0].mxu0 %v873
        %v941 = vpop.f32.mrb[0].mxu0
        %v942 = vadd.f32 0.0, %v941
        %v943 = vpop.f32.mrb[0].mxu0
        %944 = vdwg.mxu0
        %946 = vrot.lane.b32.xlu0 %v942, 8
        %v947 = vpop.permute.xlu0 %946
        %v949 = vsel %vm614, %v775, %v947
        %v950 = vld [vmem:[%s5] sm:$0xff]
        %v951 = vld [vmem:[%s5 + $0x8] sm:$0xff]
        %vm952 = vcmask 130048
        %v954 = vsel %vm952, %v949, 0
        %956 = vmatprep.subr.mxu0 0.0
        %957 = vmatpush1.msra.mxu0 %v950
        %958 = vmatprep.subr.mxu0 0.0
        %959 = vmatpush1.msra.mxu0 %v951
        %960 = vmatprep.subr.mxu0 0.0
        %961 = vmatpush1.msra.mxu0 0.0
        %962 = vmatprep.subr.mxu0 0.0
        %963 = vmatpush1.msra.mxu0 0.0
        %964 = vmatprep.subr.mxu0 0.0
        %965 = vmatpush1.msra.mxu0 0.0
        %966 = vmatprep.subr.mxu0 0.0
        %967 = vmatpush1.msra.mxu0 0.0
        %968 = vmatprep.subr.mxu0 0.0
        %969 = vmatpush1.msra.mxu0 0.0
        %970 = vmatprep.subr.mxu0 0.0
        %971 = vmatpush1.msra.mxu0 0.0
        %972 = vmatprep.subr.mxu0 0.0
        %973 = vmatpush1.msra.mxu0 0.0
        %974 = vmatprep.subr.mxu0 0.0
        %975 = vmatpush1.msra.mxu0 0.0
        %976 = vmatprep.subr.mxu0 0.0
        %977 = vmatpush1.msra.mxu0 0.0
        %978 = vmatprep.subr.mxu0 0.0
        %979 = vmatpush1.msra.mxu0 0.0
        %980 = vmatprep.subr.mxu0 0.0
        %981 = vmatpush1.msra.mxu0 0.0
        %982 = vmatprep.subr.mxu0 0.0
        %983 = vmatpush1.msra.mxu0 0.0
        %984 = vmatprep.subr.mxu0 0.0
        %985 = vmatpush1.msra.mxu0 0.0
        %986 = vmatprep.subr.mxu0 0.0
        %987 = vmatpush1.msra.mxu0 0.0
        %988 = vmatprep.subr.mxu0 0.0
        %989 = vmatpush1.msra.mxu0 0.0
        %990 = vmatprep.subr.mxu0 0.0
        %991 = vmatpush1.msra.mxu0 0.0
        %992 = vmatprep.subr.mxu0 0.0
        %993 = vmatpush1.msra.mxu0 0.0
        %994 = vmatprep.subr.mxu0 0.0
        %995 = vmatpush1.msra.mxu0 0.0
        %996 = vmatprep.subr.mxu0 0.0
        %997 = vmatpush1.msra.mxu0 0.0
        %998 = vmatprep.subr.mxu0 0.0
        %999 = vmatpush1.msra.mxu0 0.0
        %1000 = vmatprep.subr.mxu0 0.0
        %1001 = vmatpush1.msra.mxu0 0.0
        %1002 = vmatprep.subr.mxu0 0.0
        %1003 = vmatpush1.msra.mxu0 0.0
        %1004 = vmatprep.subr.mxu0 0.0
        %1005 = vmatpush1.msra.mxu0 0.0
        %1006 = vmatprep.subr.mxu0 0.0
        %1007 = vmatpush1.msra.mxu0 0.0
        %1008 = vmatprep.subr.mxu0 0.0
        %1009 = vmatpush1.msra.mxu0 0.0
        %1010 = vmatprep.subr.mxu0 0.0
        %1011 = vmatpush1.msra.mxu0 0.0
        %1012 = vmatprep.subr.mxu0 0.0
        %1013 = vmatpush1.msra.mxu0 0.0
        %1014 = vmatprep.subr.mxu0 0.0
        %1015 = vmatpush1.msra.mxu0 0.0
        %1016 = vmatprep.subr.mxu0 0.0
        %1017 = vmatpush1.msra.mxu0 0.0
        %1018 = vmatprep.subr.mxu0 0.0
        %1019 = vmatpush1.msra.mxu0 0.0
        %1020 = vmatprep.mubr.f32.mxu0 0.0
        %1021 = vmatmul.mubr.f32.gmra.mrb[0].mxu0 %v954
        %v1022 = vpop.f32.mrb[0].mxu0
        %v1023 = vadd.f32 0.0, %v1022
        %v1024 = vpop.f32.mrb[0].mxu0
        %1025 = vdwg.mxu0
        %v1026 = vadd.f32 %v373, %v1023
        %v1027 = vsel %vm374, %v1026, 0.0
        %1028 = vadd.xlane.f32.xlu0 %v1027
        %v1029 = vpop.xlane.xlu0 %1028
        %v1030 = vrot.slane %v1029, 4
        %v1031 = vadd.f32 %v1029, %v1030
        %v1032 = vrot.slane %v1031, 2
        %v1033 = vadd.f32 %v1031, %v1032
        %v1034 = vrot.slane %v1033, 1
        %v1035 = vadd.f32 %v1033, %v1034
        %s1036 = vtos %v1035
        %v1037 = vrcp.pop 256.0
        %s1038 = vtos %v1037
        %s1039 = smul.f32 %s1036, %s1038
        %v1040 = vmul.f32 %v1026, %v1026
        %v1041 = vsel %vm374, %v1040, 0.0
        %1042 = vadd.xlane.f32.xlu0 %v1041
        %v1043 = vpop.xlane.xlu0 %1042
        %v1044 = vrot.slane %v1043, 4
        %v1045 = vadd.f32 %v1043, %v1044
        %v1046 = vrot.slane %v1045, 2
        %v1047 = vadd.f32 %v1045, %v1046
        %v1048 = vrot.slane %v1047, 1
        %v1049 = vadd.f32 %v1047, %v1048
        %s1050 = vtos %v1049
        %v1051 = vrcp.pop 256.0
        %s1052 = vtos %v1051
        %s1053 = smul.f32 %s1050, %s1052
        %s1054 = smul.f32 %s1039, %s1039
        %s1055 = ssub.f32 %s1053, %s1054
        %s1056 = smax.f32 %s1055, 0.0
        %v1057 = vstv %s1039
        %v1058 = vsub.f32 %v1026, %v1057
        %s1059 = sadd.f32 %s1056, 1e-05
        %v1060 = vstv %s1059
        %v1061 = vrsqrt.pop %v1060
        %s1062 = vtos %v1061
        %v1063 = vstv %s1062
        %v1064 = vmul.f32 %v1058, %v1063
        %v1065 = vld [vmem:[%s3] sm:$0xff]
        %v1066 = vld [vmem:[%s3 + $0x8] sm:$0xff]
        %v1067 = vld [vmem:[%s3 + $0x10] sm:$0xff]
        %v1068 = vld [vmem:[%s3 + $0x18] sm:$0xff]
        %v1070 = vsel %vm374, %v1064, 0
        %1072 = vmatprep.subr.mxu0 0.0
        %1073 = vmatpush1.msra.mxu0 %v1065
        %1074 = vmatprep.subr.mxu0 0.0
        %1075 = vmatpush1.msra.mxu0 %v1066
        %1076 = vmatprep.subr.mxu0 0.0
        %1077 = vmatpush1.msra.mxu0 %v1067
        %1078 = vmatprep.subr.mxu0 0.0
        %1079 = vmatpush1.msra.mxu0 %v1068
        %1080 = vmatprep.subr.mxu0 0.0
        %1081 = vmatpush1.msra.mxu0 0.0
        %1082 = vmatprep.subr.mxu0 0.0
        %1083 = vmatpush1.msra.mxu0 0.0
        %1084 = vmatprep.subr.mxu0 0.0
        %1085 = vmatpush1.msra.mxu0 0.0
        %1086 = vmatprep.subr.mxu0 0.0
        %1087 = vmatpush1.msra.mxu0 0.0
        %1088 = vmatprep.subr.mxu0 0.0
        %1089 = vmatpush1.msra.mxu0 0.0
        %1090 = vmatprep.subr.mxu0 0.0
        %1091 = vmatpush1.msra.mxu0 0.0
        %1092 = vmatprep.subr.mxu0 0.0
        %1093 = vmatpush1.msra.mxu0 0.0
        %1094 = vmatprep.subr.mxu0 0.0
        %1095 = vmatpush1.msra.mxu0 0.0
        %1096 = vmatprep.subr.mxu0 0.0
        %1097 = vmatpush1.msra.mxu0 0.0
        %1098 = vmatprep.subr.mxu0 0.0
        %1099 = vmatpush1.msra.mxu0 0.0
        %1100 = vmatprep.subr.mxu0 0.0
        %1101 = vmatpush1.msra.mxu0 0.0
        %1102 = vmatprep.subr.mxu0 0.0
        %1103 = vmatpush1.msra.mxu0 0.0
        %1104 = vmatprep.subr.mxu0 0.0
        %1105 = vmatpush1.msra.mxu0 0.0
        %1106 = vmatprep.subr.mxu0 0.0
        %1107 = vmatpush1.msra.mxu0 0.0
        %1108 = vmatprep.subr.mxu0 0.0
        %1109 = vmatpush1.msra.mxu0 0.0
        %1110 = vmatprep.subr.mxu0 0.0
        %1111 = vmatpush1.msra.mxu0 0.0
        %1112 = vmatprep.subr.mxu0 0.0
        %1113 = vmatpush1.msra.mxu0 0.0
        %1114 = vmatprep.subr.mxu0 0.0
        %1115 = vmatpush1.msra.mxu0 0.0
        %1116 = vmatprep.subr.mxu0 0.0
        %1117 = vmatpush1.msra.mxu0 0.0
        %1118 = vmatprep.subr.mxu0 0.0
        %1119 = vmatpush1.msra.mxu0 0.0
        %1120 = vmatprep.subr.mxu0 0.0
        %1121 = vmatpush1.msra.mxu0 0.0
        %1122 = vmatprep.subr.mxu0 0.0
        %1123 = vmatpush1.msra.mxu0 0.0
        %1124 = vmatprep.subr.mxu0 0.0
        %1125 = vmatpush1.msra.mxu0 0.0
        %1126 = vmatprep.subr.mxu0 0.0
        %1127 = vmatpush1.msra.mxu0 0.0
        %1128 = vmatprep.subr.mxu0 0.0
        %1129 = vmatpush1.msra.mxu0 0.0
        %1130 = vmatprep.subr.mxu0 0.0
        %1131 = vmatpush1.msra.mxu0 0.0
        %1132 = vmatprep.subr.mxu0 0.0
        %1133 = vmatpush1.msra.mxu0 0.0
        %1134 = vmatprep.subr.mxu0 0.0
        %1135 = vmatpush1.msra.mxu0 0.0
        %1136 = vmatprep.mubr.f32.mxu0 0.0
        %1137 = vmatmul.mubr.f32.gmra.mrb[0].mxu0 %v1070
        %v1138 = vpop.f32.mrb[0].mxu0
        %v1139 = vadd.f32 0.0, %v1138
        %v1140 = vpop.f32.mrb[0].mxu0
        %1141 = vdwg.mxu0
        %v1143 = vsel %vm614, %v1139, 0
        %v1146 = vsel %vm614, %v487, 0
        %1148 = vmatprep.subr.mxu0 0.0
        %1149 = vmatpush1.xpose.msra.mxu0 %v1146
        %1150 = vmatprep.subr.mxu0 0.0
        %1151 = vmatpush1.xpose.msra.mxu0 0.0
        %1152 = vmatprep.subr.mxu0 0.0
        %1153 = vmatpush1.xpose.msra.mxu0 0.0
        %1154 = vmatprep.subr.mxu0 0.0
        %1155 = vmatpush1.xpose.msra.mxu0 0.0
        %1156 = vmatprep.subr.mxu0 0.0
        %1157 = vmatpush1.xpose.msra.mxu0 0.0
        %1158 = vmatprep.subr.mxu0 0.0
        %1159 = vmatpush1.xpose.msra.mxu0 0.0
        %1160 = vmatprep.subr.mxu0 0.0
        %1161 = vmatpush1.xpose.msra.mxu0 0.0
        %1162 = vmatprep.subr.mxu0 0.0
        %1163 = vmatpush1.xpose.msra.mxu0 0.0
        %1164 = vmatprep.subr.mxu0 0.0
        %1165 = vmatpush1.xpose.msra.mxu0 0.0
        %1166 = vmatprep.subr.mxu0 0.0
        %1167 = vmatpush1.xpose.msra.mxu0 0.0
        %1168 = vmatprep.subr.mxu0 0.0
        %1169 = vmatpush1.xpose.msra.mxu0 0.0
        %1170 = vmatprep.subr.mxu0 0.0
        %1171 = vmatpush1.xpose.msra.mxu0 0.0
        %1172 = vmatprep.subr.mxu0 0.0
        %1173 = vmatpush1.xpose.msra.mxu0 0.0
        %1174 = vmatprep.subr.mxu0 0.0
        %1175 = vmatpush1.xpose.msra.mxu0 0.0
        %1176 = vmatprep.subr.mxu0 0.0
        %1177 = vmatpush1.xpose.msra.mxu0 0.0
        %1178 = vmatprep.subr.mxu0 0.0
        %1179 = vmatpush1.xpose.msra.mxu0 0.0
        %1180 = vmatprep.subr.mxu0 0.0
        %1181 = vmatpush1.xpose.msra.mxu0 0.0
        %1182 = vmatprep.subr.mxu0 0.0
        %1183 = vmatpush1.xpose.msra.mxu0 0.0
        %1184 = vmatprep.subr.mxu0 0.0
        %1185 = vmatpush1.xpose.msra.mxu0 0.0
        %1186 = vmatprep.subr.mxu0 0.0
        %1187 = vmatpush1.xpose.msra.mxu0 0.0
        %1188 = vmatprep.subr.mxu0 0.0
        %1189 = vmatpush1.xpose.msra.mxu0 0.0
        %1190 = vmatprep.subr.mxu0 0.0
        %1191 = vmatpush1.xpose.msra.mxu0 0.0
        %1192 = vmatprep.subr.mxu0 0.0
        %1193 = vmatpush1.xpose.msra.mxu0 0.0
        %1194 = vmatprep.subr.mxu0 0.0
        %1195 = vmatpush1.xpose.msra.mxu0 0.0
        %1196 = vmatprep.subr.mxu0 0.0
        %1197 = vmatpush1.xpose.msra.mxu0 0.0
        %1198 = vmatprep.subr.mxu0 0.0
        %1199 = vmatpush1.xpose.msra.mxu0 0.0
        %1200 = vmatprep.subr.mxu0 0.0
        %1201 = vmatpush1.xpose.msra.mxu0 0.0
        %1202 = vmatprep.subr.mxu0 0.0
        %1203 = vmatpush1.xpose.msra.mxu0 0.0
        %1204 = vmatprep.subr.mxu0 0.0
        %1205 = vmatpush1.xpose.msra.mxu0 0.0
        %1206 = vmatprep.subr.mxu0 0.0
        %1207 = vmatpush1.xpose.msra.mxu0 0.0
        %1208 = vmatprep.subr.mxu0 0.0
        %1209 = vmatpush1.xpose.msra.mxu0 0.0
        %1210 = vmatprep.subr.mxu0 0.0
        %1211 = vmatpush1.xpose.msra.mxu0 0.0
        %1212 = vmatprep.mubr.f32.mxu0 0.0
        %1213 = vmatmul.mubr.f32.gmra.mrb[0].mxu0 %v1143
        %v1214 = vpop.f32.mrb[0].mxu0
        %v1215 = vadd.f32 0.0, %v1214
        %v1216 = vpop.f32.mrb[0].mxu0
        %1217 = vdwg.mxu0
        %v1218 = vmul.f32 %v1215, 0.35355338
        %v1219 = vsel %vm614, %v1218, -inf
        %1220 = vmax.xlane.f32.xlu0 %v1219
        %v1221 = vpop.xlane.xlu0 %1220
        %v1222 = vsub.f32 %v1218, %v1221
        %v1223 = vmul.f32 %v1222, 1.442695
        %v1224 = vpow.pop %v1223
        %v1225 = vsel %vm614, %v1224, 0.0
        %1226 = vadd.xlane.f32.xlu0 %v1225
        %v1227 = vpop.xlane.xlu0 %1226
        %v1228 = vrcp.pop %v1227
        %v1229 = vmul.f32 %v1224, %v1228
        %1230 = vrot.lane.b32.xlu0 %v487, 112
        %v1231 = vpop.permute.xlu0 %1230
        %v1234 = vsel %vm614, %v1229, 0
        %1236 = vmatprep.subr.mxu0 0.0
        %1237 = vmatpush1.msra.mxu0 %v1231
        %1238 = vmatprep.subr.mxu0 0.0
        %1239 = vmatpush1.msra.mxu0 0.0
        %1240 = vmatprep.subr.mxu0 0.0
        %1241 = vmatpush1.msra.mxu0 0.0
        %1242 = vmatprep.subr.mxu0 0.0
        %1243 = vmatpush1.msra.mxu0 0.0
        %1244 = vmatprep.subr.mxu0 0.0
        %1245 = vmatpush1.msra.mxu0 0.0
        %1246 = vmatprep.subr.mxu0 0.0
        %1247 = vmatpush1.msra.mxu0 0.0
        %1248 = vmatprep.subr.mxu0 0.0
        %1249 = vmatpush1.msra.mxu0 0.0
        %1250 = vmatprep.subr.mxu0 0.0
        %1251 = vmatpush1.msra.mxu0 0.0
        %1252 = vmatprep.subr.mxu0 0.0
        %1253 = vmatpush1.msra.mxu0 0.0
        %1254 = vmatprep.subr.mxu0 0.0
        %1255 = vmatpush1.msra.mxu0 0.0
        %1256 = vmatprep.subr.mxu0 0.0
        %1257 = vmatpush1.msra.mxu0 0.0
        %1258 = vmatprep.subr.mxu0 0.0
        %1259 = vmatpush1.msra.mxu0 0.0
        %1260 = vmatprep.subr.mxu0 0.0
        %1261 = vmatpush1.msra.mxu0 0.0
        %1262 = vmatprep.subr.mxu0 0.0
        %1263 = vmatpush1.msra.mxu0 0.0
        %1264 = vmatprep.subr.mxu0 0.0
        %1265 = vmatpush1.msra.mxu0 0.0
        %1266 = vmatprep.subr.mxu0 0.0
        %1267 = vmatpush1.msra.mxu0 0.0
        %1268 = vmatprep.subr.mxu0 0.0
        %1269 = vmatpush1.msra.mxu0 0.0
        %1270 = vmatprep.subr.mxu0 0.0
        %1271 = vmatpush1.msra.mxu0 0.0
        %1272 = vmatprep.subr.mxu0 0.0
        %1273 = vmatpush1.msra.mxu0 0.0
        %1274 = vmatprep.subr.mxu0 0.0
        %1275 = vmatpush1.msra.mxu0 0.0
        %1276 = vmatprep.subr.mxu0 0.0
        %1277 = vmatpush1.msra.mxu0 0.0
        %1278 = vmatprep.subr.mxu0 0.0
        %1279 = vmatpush1.msra.mxu0 0.0
        %1280 = vmatprep.subr.mxu0 0.0
        %1281 = vmatpush1.msra.mxu0 0.0
        %1282 = vmatprep.subr.mxu0 0.0
        %1283 = vmatpush1.msra.mxu0 0.0
        %1284 = vmatprep.subr.mxu0 0.0
        %1285 = vmatpush1.msra.mxu0 0.0
        %1286 = vmatprep.subr.mxu0 0.0
        %1287 = vmatpush1.msra.mxu0 0.0
        %1288 = vmatprep.subr.mxu0 0.0
        %1289 = vmatpush1.msra.mxu0 0.0
        %1290 = vmatprep.subr.mxu0 0.0
        %1291 = vmatpush1.msra.mxu0 0.0
        %1292 = vmatprep.subr.mxu0 0.0
        %1293 = vmatpush1.msra.mxu0 0.0
        %1294 = vmatprep.subr.mxu0 0.0
        %1295 = vmatpush1.msra.mxu0 0.0
        %1296 = vmatprep.subr.mxu0 0.0
        %1297 = vmatpush1.msra.mxu0 0.0
        %1298 = vmatprep.subr.mxu0 0.0
        %1299 = vmatpush1.msra.mxu0 0.0
        %1300 = vmatprep.mubr.f32.mxu0 0.0
        %1301 = vmatmul.mubr.f32.gmra.mrb[0].mxu0 %v1234
        %v1302 = vpop.f32.mrb[0].mxu0
        %v1303 = vadd.f32 0.0, %v1302
        %v1304 = vpop.f32.mrb[0].mxu0
        %1305 = vdwg.mxu0
        %1306 = vrot.lane.b32.xlu0 %v1139, 120
        %v1307 = vpop.permute.xlu0 %1306
        %1308 = vrot.lane.b32.xlu0 %v487, 120
        %v1309 = vpop.permute.xlu0 %1308
        %v1310 = vsel %vm614, %v1307, 0
        %v1312 = vsel %vm614, %v1309, 0
        %1314 = vmatprep.subr.mxu0 0.0
        %1315 = vmatpush1.xpose.msra.mxu0 %v1312
        %1316 = vmatprep.subr.mxu0 0.0
        %1317 = vmatpush1.xpose.msra.mxu0 0.0
        %1318 = vmatprep.subr.mxu0 0.0
        %1319 = vmatpush1.xpose.msra.mxu0 0.0
        %1320 = vmatprep.subr.mxu0 0.0
        %1321 = vmatpush1.xpose.msra.mxu0 0.0
        %1322 = vmatprep.subr.mxu0 0.0
        %1323 = vmatpush1.xpose.msra.mxu0 0.0
        %1324 = vmatprep.subr.mxu0 0.0
        %1325 = vmatpush1.xpose.msra.mxu0 0.0
        %1326 = vmatprep.subr.mxu0 0.0
        %1327 = vmatpush1.xpose.msra.mxu0 0.0
        %1328 = vmatprep.subr.mxu0 0.0
        %1329 = vmatpush1.xpose.msra.mxu0 0.0
        %1330 = vmatprep.subr.mxu0 0.0
        %1331 = vmatpush1.xpose.msra.mxu0 0.0
        %1332 = vmatprep.subr.mxu0 0.0
        %1333 = vmatpush1.xpose.msra.mxu0 0.0
        %1334 = vmatprep.subr.mxu0 0.0
        %1335 = vmatpush1.xpose.msra.mxu0 0.0
        %1336 = vmatprep.subr.mxu0 0.0
        %1337 = vmatpush1.xpose.msra.mxu0 0.0
        %1338 = vmatprep.subr.mxu0 0.0
        %1339 = vmatpush1.xpose.msra.mxu0 0.0
        %1340 = vmatprep.subr.mxu0 0.0
        %1341 = vmatpush1.xpose.msra.mxu0 0.0
        %1342 = vmatprep.subr.mxu0 0.0
        %1343 = vmatpush1.xpose.msra.mxu0 0.0
        %1344 = vmatprep.subr.mxu0 0.0
        %1345 = vmatpush1.xpose.msra.mxu0 0.0
        %1346 = vmatprep.subr.mxu0 0.0
        %1347 = vmatpush1.xpose.msra.mxu0 0.0
        %1348 = vmatprep.subr.mxu0 0.0
        %1349 = vmatpush1.xpose.msra.mxu0 0.0
        %1350 = vmatprep.subr.mxu0 0.0
        %1351 = vmatpush1.xpose.msra.mxu0 0.0
        %1352 = vmatprep.subr.mxu0 0.0
        %1353 = vmatpush1.xpose.msra.mxu0 0.0
        %1354 = vmatprep.subr.mxu0 0.0
        %1355 = vmatpush1.xpose.msra.mxu0 0.0
        %1356 = vmatprep.subr.mxu0 0.0
        %1357 = vmatpush1.xpose.msra.mxu0 0.0
        %1358 = vmatprep.subr.mxu0 0.0
        %1359 = vmatpush1.xpose.msra.mxu0 0.0
        %1360 = vmatprep.subr.mxu0 0.0
        %1361 = vmatpush1.xpose.msra.mxu0 0.0
        %1362 = vmatprep.subr.mxu0 0.0
        %1363 = vmatpush1.xpose.msra.mxu0 0.0
        %1364 = vmatprep.subr.mxu0 0.0
        %1365 = vmatpush1.xpose.msra.mxu0 0.0
        %1366 = vmatprep.subr.mxu0 0.0
        %1367 = vmatpush1.xpose.msra.mxu0 0.0
        %1368 = vmatprep.subr.mxu0 0.0
        %1369 = vmatpush1.xpose.msra.mxu0 0.0
        %1370 = vmatprep.subr.mxu0 0.0
        %1371 = vmatpush1.xpose.msra.mxu0 0.0
        %1372 = vmatprep.subr.mxu0 0.0
        %1373 = vmatpush1.xpose.msra.mxu0 0.0
        %1374 = vmatprep.subr.mxu0 0.0
        %1375 = vmatpush1.xpose.msra.mxu0 0.0
        %1376 = vmatprep.subr.mxu0 0.0
        %1377 = vmatpush1.xpose.msra.mxu0 0.0
        %1378 = vmatprep.mubr.f32.mxu0 0.0
        %1379 = vmatmul.mubr.f32.gmra.mrb[0].mxu0 %v1310
        %v1380 = vpop.f32.mrb[0].mxu0
        %v1381 = vadd.f32 0.0, %v1380
        %v1382 = vpop.f32.mrb[0].mxu0
        %1383 = vdwg.mxu0
        %v1384 = vmul.f32 %v1381, 0.35355338
        %v1385 = vsel %vm614, %v1384, -inf
        %1386 = vmax.xlane.f32.xlu0 %v1385
        %v1387 = vpop.xlane.xlu0 %1386
        %v1388 = vsub.f32 %v1384, %v1387
        %v1389 = vmul.f32 %v1388, 1.442695
        %v1390 = vpow.pop %v1389
        %v1391 = vsel %vm614, %v1390, 0.0
        %1392 = vadd.xlane.f32.xlu0 %v1391
        %v1393 = vpop.xlane.xlu0 %1392
        %v1394 = vrcp.pop %v1393
        %v1395 = vmul.f32 %v1390, %v1394
        %1396 = vrot.lane.b32.xlu0 %v487, 104
        %v1397 = vpop.permute.xlu0 %1396
        %v1400 = vsel %vm614, %v1395, 0
        %1402 = vmatprep.subr.mxu0 0.0
        %1403 = vmatpush1.msra.mxu0 %v1397
        %1404 = vmatprep.subr.mxu0 0.0
        %1405 = vmatpush1.msra.mxu0 0.0
        %1406 = vmatprep.subr.mxu0 0.0
        %1407 = vmatpush1.msra.mxu0 0.0
        %1408 = vmatprep.subr.mxu0 0.0
        %1409 = vmatpush1.msra.mxu0 0.0
        %1410 = vmatprep.subr.mxu0 0.0
        %1411 = vmatpush1.msra.mxu0 0.0
        %1412 = vmatprep.subr.mxu0 0.0
        %1413 = vmatpush1.msra.mxu0 0.0
        %1414 = vmatprep.subr.mxu0 0.0
        %1415 = vmatpush1.msra.mxu0 0.0
        %1416 = vmatprep.subr.mxu0 0.0
        %1417 = vmatpush1.msra.mxu0 0.0
        %1418 = vmatprep.subr.mxu0 0.0
        %1419 = vmatpush1.msra.mxu0 0.0
        %1420 = vmatprep.subr.mxu0 0.0
        %1421 = vmatpush1.msra.mxu0 0.0
        %1422 = vmatprep.subr.mxu0 0.0
        %1423 = vmatpush1.msra.mxu0 0.0
        %1424 = vmatprep.subr.mxu0 0.0
        %1425 = vmatpush1.msra.mxu0 0.0
        %1426 = vmatprep.subr.mxu0 0.0
        %1427 = vmatpush1.msra.mxu0 0.0
        %1428 = vmatprep.subr.mxu0 0.0
        %1429 = vmatpush1.msra.mxu0 0.0
        %1430 = vmatprep.subr.mxu0 0.0
        %1431 = vmatpush1.msra.mxu0 0.0
        %1432 = vmatprep.subr.mxu0 0.0
        %1433 = vmatpush1.msra.mxu0 0.0
        %1434 = vmatprep.subr.mxu0 0.0
        %1435 = vmatpush1.msra.mxu0 0.0
        %1436 = vmatprep.subr.mxu0 0.0
        %1437 = vmatpush1.msra.mxu0 0.0
        %1438 = vmatprep.subr.mxu0 0.0
        %1439 = vmatpush1.msra.mxu0 0.0
        %1440 = vmatprep.subr.mxu0 0.0
        %1441 = vmatpush1.msra.mxu0 0.0
        %1442 = vmatprep.subr.mxu0 0.0
        %1443 = vmatpush1.msra.mxu0 0.0
        %1444 = vmatprep.subr.mxu0 0.0
        %1445 = vmatpush1.msra.mxu0 0.0
        %1446 = vmatprep.subr.mxu0 0.0
        %1447 = vmatpush1.msra.mxu0 0.0
        %1448 = vmatprep.subr.mxu0 0.0
        %1449 = vmatpush1.msra.mxu0 0.0
        %1450 = vmatprep.subr.mxu0 0.0
        %1451 = vmatpush1.msra.mxu0 0.0
        %1452 = vmatprep.subr.mxu0 0.0
        %1453 = vmatpush1.msra.mxu0 0.0
        %1454 = vmatprep.subr.mxu0 0.0
        %1455 = vmatpush1.msra.mxu0 0.0
        %1456 = vmatprep.subr.mxu0 0.0
        %1457 = vmatpush1.msra.mxu0 0.0
        %1458 = vmatprep.subr.mxu0 0.0
        %1459 = vmatpush1.msra.mxu0 0.0
        %1460 = vmatprep.subr.mxu0 0.0
        %1461 = vmatpush1.msra.mxu0 0.0
        %1462 = vmatprep.subr.mxu0 0.0
        %1463 = vmatpush1.msra.mxu0 0.0
        %1464 = vmatprep.subr.mxu0 0.0
        %1465 = vmatpush1.msra.mxu0 0.0
        %1466 = vmatprep.mubr.f32.mxu0 0.0
        %1467 = vmatmul.mubr.f32.gmra.mrb[0].mxu0 %v1400
        %v1468 = vpop.f32.mrb[0].mxu0
        %v1469 = vadd.f32 0.0, %v1468
        %v1470 = vpop.f32.mrb[0].mxu0
        %1471 = vdwg.mxu0
        %1473 = vrot.lane.b32.xlu0 %v1469, 8
        %v1474 = vpop.permute.xlu0 %1473
        %v1476 = vsel %vm614, %v1303, %v1474
        %s1477 = scalar_lea.vmem %s5, 16
        %v1478 = vld [vmem:[%s1477] sm:$0xff]
        %v1479 = vld [vmem:[%s1477 + $0x8] sm:$0xff]
        %v1481 = vsel %vm952, %v1476, 0
        %1483 = vmatprep.subr.mxu0 0.0
        %1484 = vmatpush1.msra.mxu0 %v1478
        %1485 = vmatprep.subr.mxu0 0.0
        %1486 = vmatpush1.msra.mxu0 %v1479
        %1487 = vmatprep.subr.mxu0 0.0
        %1488 = vmatpush1.msra.mxu0 0.0
        %1489 = vmatprep.subr.mxu0 0.0
        %1490 = vmatpush1.msra.mxu0 0.0
        %1491 = vmatprep.subr.mxu0 0.0
        %1492 = vmatpush1.msra.mxu0 0.0
        %1493 = vmatprep.subr.mxu0 0.0
        %1494 = vmatpush1.msra.mxu0 0.0
        %1495 = vmatprep.subr.mxu0 0.0
        %1496 = vmatpush1.msra.mxu0 0.0
        %1497 = vmatprep.subr.mxu0 0.0
        %1498 = vmatpush1.msra.mxu0 0.0
        %1499 = vmatprep.subr.mxu0 0.0
        %1500 = vmatpush1.msra.mxu0 0.0
        %1501 = vmatprep.subr.mxu0 0.0
        %1502 = vmatpush1.msra.mxu0 0.0
        %1503 = vmatprep.subr.mxu0 0.0
        %1504 = vmatpush1.msra.mxu0 0.0
        %1505 = vmatprep.subr.mxu0 0.0
        %1506 = vmatpush1.msra.mxu0 0.0
        %1507 = vmatprep.subr.mxu0 0.0
        %1508 = vmatpush1.msra.mxu0 0.0
        %1509 = vmatprep.subr.mxu0 0.0
        %1510 = vmatpush1.msra.mxu0 0.0
        %1511 = vmatprep.subr.mxu0 0.0
        %1512 = vmatpush1.msra.mxu0 0.0
        %1513 = vmatprep.subr.mxu0 0.0
        %1514 = vmatpush1.msra.mxu0 0.0
        %1515 = vmatprep.subr.mxu0 0.0
        %1516 = vmatpush1.msra.mxu0 0.0
        %1517 = vmatprep.subr.mxu0 0.0
        %1518 = vmatpush1.msra.mxu0 0.0
        %1519 = vmatprep.subr.mxu0 0.0
        %1520 = vmatpush1.msra.mxu0 0.0
        %1521 = vmatprep.subr.mxu0 0.0
        %1522 = vmatpush1.msra.mxu0 0.0
        %1523 = vmatprep.subr.mxu0 0.0
        %1524 = vmatpush1.msra.mxu0 0.0
        %1525 = vmatprep.subr.mxu0 0.0
        %1526 = vmatpush1.msra.mxu0 0.0
        %1527 = vmatprep.subr.mxu0 0.0
        %1528 = vmatpush1.msra.mxu0 0.0
        %1529 = vmatprep.subr.mxu0 0.0
        %1530 = vmatpush1.msra.mxu0 0.0
        %1531 = vmatprep.subr.mxu0 0.0
        %1532 = vmatpush1.msra.mxu0 0.0
        %1533 = vmatprep.subr.mxu0 0.0
        %1534 = vmatpush1.msra.mxu0 0.0
        %1535 = vmatprep.subr.mxu0 0.0
        %1536 = vmatpush1.msra.mxu0 0.0
        %1537 = vmatprep.subr.mxu0 0.0
        %1538 = vmatpush1.msra.mxu0 0.0
        %1539 = vmatprep.subr.mxu0 0.0
        %1540 = vmatpush1.msra.mxu0 0.0
        %1541 = vmatprep.subr.mxu0 0.0
        %1542 = vmatpush1.msra.mxu0 0.0
        %1543 = vmatprep.subr.mxu0 0.0
        %1544 = vmatpush1.msra.mxu0 0.0
        %1545 = vmatprep.subr.mxu0 0.0
        %1546 = vmatpush1.msra.mxu0 0.0
        %1547 = vmatprep.mubr.f32.mxu0 0.0
        %1548 = vmatmul.mubr.f32.gmra.mrb[0].mxu0 %v1481
        %v1549 = vpop.f32.mrb[0].mxu0
        %v1550 = vadd.f32 0.0, %v1549
        %v1551 = vpop.f32.mrb[0].mxu0
        %1552 = vdwg.mxu0
        %v1553 = vadd.f32 %v1026, %v1550
        %v1554 = vsel %vm374, %v1553, 0.0
        %1555 = vadd.xlane.f32.xlu0 %v1554
        %v1556 = vpop.xlane.xlu0 %1555
        %v1557 = vrot.slane %v1556, 4
        %v1558 = vadd.f32 %v1556, %v1557
        %v1559 = vrot.slane %v1558, 2
        %v1560 = vadd.f32 %v1558, %v1559
        %v1561 = vrot.slane %v1560, 1
        %v1562 = vadd.f32 %v1560, %v1561
        %s1563 = vtos %v1562
        %v1564 = vrcp.pop 256.0
        %s1565 = vtos %v1564
        %s1566 = smul.f32 %s1563, %s1565
        %v1567 = vmul.f32 %v1553, %v1553
        %v1568 = vsel %vm374, %v1567, 0.0
        %1569 = vadd.xlane.f32.xlu0 %v1568
        %v1570 = vpop.xlane.xlu0 %1569
        %v1571 = vrot.slane %v1570, 4
        %v1572 = vadd.f32 %v1570, %v1571
        %v1573 = vrot.slane %v1572, 2
        %v1574 = vadd.f32 %v1572, %v1573
        %v1575 = vrot.slane %v1574, 1
        %v1576 = vadd.f32 %v1574, %v1575
        %s1577 = vtos %v1576
        %v1578 = vrcp.pop 256.0
        %s1579 = vtos %v1578
        %s1580 = smul.f32 %s1577, %s1579
        %s1581 = smul.f32 %s1566, %s1566
        %s1582 = ssub.f32 %s1580, %s1581
        %s1583 = smax.f32 %s1582, 0.0
        %v1584 = vstv %s1566
        %v1585 = vsub.f32 %v1553, %v1584
        %s1586 = sadd.f32 %s1583, 1e-05
        %v1587 = vstv %s1586
        %v1588 = vrsqrt.pop %v1587
        %s1589 = vtos %v1588
        %v1590 = vstv %s1589
        %v1591 = vmul.f32 %v1585, %v1590
        %v1592 = vld [vmem:[%s6] sm:$0xff]
        %v1593 = vld [vmem:[%s6 + $0x8] sm:$0xff]
        %v1594 = vld [vmem:[%s6 + $0x10] sm:$0xff]
        %v1595 = vld [vmem:[%s6 + $0x18] sm:$0xff]
        %v1596 = vld [vmem:[%s7] sm:$0x1]
        %v1598 = vlaneseq
        %v1599 = vshrl.u32 %v1598, 7
        %v1600 = vsub.s32 0, %v1599
        %v1601 = vrot.slane %v1596, %v1600
        %v1604 = vsel %vm374, %v1591, 0
        %1606 = vmatprep.subr.mxu0 0.0
        %1607 = vmatpush1.msra.mxu0 %v1592
        %1608 = vmatprep.subr.mxu0 0.0
        %1609 = vmatpush1.msra.mxu0 %v1593
        %1610 = vmatprep.subr.mxu0 0.0
        %1611 = vmatpush1.msra.mxu0 %v1594
        %1612 = vmatprep.subr.mxu0 0.0
        %1613 = vmatpush1.msra.mxu0 %v1595
        %1614 = vmatprep.subr.mxu0 0.0
        %1615 = vmatpush1.msra.mxu0 0.0
        %1616 = vmatprep.subr.mxu0 0.0
        %1617 = vmatpush1.msra.mxu0 0.0
        %1618 = vmatprep.subr.mxu0 0.0
        %1619 = vmatpush1.msra.mxu0 0.0
        %1620 = vmatprep.subr.mxu0 0.0
        %1621 = vmatpush1.msra.mxu0 0.0
        %1622 = vmatprep.subr.mxu0 0.0
        %1623 = vmatpush1.msra.mxu0 0.0
        %1624 = vmatprep.subr.mxu0 0.0
        %1625 = vmatpush1.msra.mxu0 0.0
        %1626 = vmatprep.subr.mxu0 0.0
        %1627 = vmatpush1.msra.mxu0 0.0
        %1628 = vmatprep.subr.mxu0 0.0
        %1629 = vmatpush1.msra.mxu0 0.0
        %1630 = vmatprep.subr.mxu0 0.0
        %1631 = vmatpush1.msra.mxu0 0.0
        %1632 = vmatprep.subr.mxu0 0.0
        %1633 = vmatpush1.msra.mxu0 0.0
        %1634 = vmatprep.subr.mxu0 0.0
        %1635 = vmatpush1.msra.mxu0 0.0
        %1636 = vmatprep.subr.mxu0 0.0
        %1637 = vmatpush1.msra.mxu0 0.0
        %1638 = vmatprep.subr.mxu0 0.0
        %1639 = vmatpush1.msra.mxu0 0.0
        %1640 = vmatprep.subr.mxu0 0.0
        %1641 = vmatpush1.msra.mxu0 0.0
        %1642 = vmatprep.subr.mxu0 0.0
        %1643 = vmatpush1.msra.mxu0 0.0
        %1644 = vmatprep.subr.mxu0 0.0
        %1645 = vmatpush1.msra.mxu0 0.0
        %1646 = vmatprep.subr.mxu0 0.0
        %1647 = vmatpush1.msra.mxu0 0.0
        %1648 = vmatprep.subr.mxu0 0.0
        %1649 = vmatpush1.msra.mxu0 0.0
        %1650 = vmatprep.subr.mxu0 0.0
        %1651 = vmatpush1.msra.mxu0 0.0
        %1652 = vmatprep.subr.mxu0 0.0
        %1653 = vmatpush1.msra.mxu0 0.0
        %1654 = vmatprep.subr.mxu0 0.0
        %1655 = vmatpush1.msra.mxu0 0.0
        %1656 = vmatprep.subr.mxu0 0.0
        %1657 = vmatpush1.msra.mxu0 0.0
        %1658 = vmatprep.subr.mxu0 0.0
        %1659 = vmatpush1.msra.mxu0 0.0
        %1660 = vmatprep.subr.mxu0 0.0
        %1661 = vmatpush1.msra.mxu0 0.0
        %1662 = vmatprep.subr.mxu0 0.0
        %1663 = vmatpush1.msra.mxu0 0.0
        %1664 = vmatprep.subr.mxu0 0.0
        %1665 = vmatpush1.msra.mxu0 0.0
        %1666 = vmatprep.subr.mxu0 0.0
        %1667 = vmatpush1.msra.mxu0 0.0
        %1668 = vmatprep.subr.mxu0 0.0
        %1669 = vmatpush1.msra.mxu0 0.0
        %1670 = vmatprep.mubr.f32.mxu0 0.0
        %1671 = vmatmul.mubr.f32.gmra.mrb[0].mxu0 %v1604
        %v1672 = vpop.f32.mrb[0].mxu0
        %v1673 = vadd.f32 %v1601, %v1672
        %v1674 = vpop.f32.mrb[0].mxu0
        %1675 = vdwg.mxu0
        %v1676 = vmax.f32 %v1673, 0.0
        %v1677 = vld [vmem:[%s8] sm:$0xff]
        %v1678 = vld [vmem:[%s8 + $0x8] sm:$0xff]
        %v1679 = vld [vmem:[%s8 + $0x10] sm:$0xff]
        %v1680 = vld [vmem:[%s8 + $0x18] sm:$0xff]
        %v1681 = vld [vmem:[%s8 + $0x20] sm:$0xff]
        %v1682 = vld [vmem:[%s8 + $0x28] sm:$0xff]
        %v1683 = vld [vmem:[%s8 + $0x30] sm:$0xff]
        %v1684 = vld [vmem:[%s8 + $0x38] sm:$0xff]
        %v1685 = vld [vmem:[%s9] sm:$0x1]
        %v1687 = vlaneseq
        %v1688 = vshrl.u32 %v1687, 7
        %v1689 = vsub.s32 0, %v1688
        %v1690 = vrot.slane %v1685, %v1689
        %vm1692 = vcmask 523264
        %v1694 = vsel %vm1692, %v1676, 0
        %1696 = vmatprep.subr.mxu0 0.0
        %1697 = vmatpush1.msra.mxu0 %v1677
        %1698 = vmatprep.subr.mxu0 0.0
        %1699 = vmatpush1.msra.mxu0 %v1678
        %1700 = vmatprep.subr.mxu0 0.0
        %1701 = vmatpush1.msra.mxu0 %v1679
        %1702 = vmatprep.subr.mxu0 0.0
        %1703 = vmatpush1.msra.mxu0 %v1680
        %1704 = vmatprep.subr.mxu0 0.0
        %1705 = vmatpush1.msra.mxu0 %v1681
        %1706 = vmatprep.subr.mxu0 0.0
        %1707 = vmatpush1.msra.mxu0 %v1682
        %1708 = vmatprep.subr.mxu0 0.0
        %1709 = vmatpush1.msra.mxu0 %v1683
        %1710 = vmatprep.subr.mxu0 0.0
        %1711 = vmatpush1.msra.mxu0 %v1684
        %1712 = vmatprep.subr.mxu0 0.0
        %1713 = vmatpush1.msra.mxu0 0.0
        %1714 = vmatprep.subr.mxu0 0.0
        %1715 = vmatpush1.msra.mxu0 0.0
        %1716 = vmatprep.subr.mxu0 0.0
        %1717 = vmatpush1.msra.mxu0 0.0
        %1718 = vmatprep.subr.mxu0 0.0
        %1719 = vmatpush1.msra.mxu0 0.0
        %1720 = vmatprep.subr.mxu0 0.0
        %1721 = vmatpush1.msra.mxu0 0.0
        %1722 = vmatprep.subr.mxu0 0.0
        %1723 = vmatpush1.msra.mxu0 0.0
        %1724 = vmatprep.subr.mxu0 0.0
        %1725 = vmatpush1.msra.mxu0 0.0
        %1726 = vmatprep.subr.mxu0 0.0
        %1727 = vmatpush1.msra.mxu0 0.0
        %1728 = vmatprep.subr.mxu0 0.0
        %1729 = vmatpush1.msra.mxu0 0.0
        %1730 = vmatprep.subr.mxu0 0.0
        %1731 = vmatpush1.msra.mxu0 0.0
        %1732 = vmatprep.subr.mxu0 0.0
        %1733 = vmatpush1.msra.mxu0 0.0
        %1734 = vmatprep.subr.mxu0 0.0
        %1735 = vmatpush1.msra.mxu0 0.0
        %1736 = vmatprep.subr.mxu0 0.0
        %1737 = vmatpush1.msra.mxu0 0.0
        %1738 = vmatprep.subr.mxu0 0.0
        %1739 = vmatpush1.msra.mxu0 0.0
        %1740 = vmatprep.subr.mxu0 0.0
        %1741 = vmatpush1.msra.mxu0 0.0
        %1742 = vmatprep.subr.mxu0 0.0
        %1743 = vmatpush1.msra.mxu0 0.0
        %1744 = vmatprep.subr.mxu0 0.0
        %1745 = vmatpush1.msra.mxu0 0.0
        %1746 = vmatprep.subr.mxu0 0.0
        %1747 = vmatpush1.msra.mxu0 0.0
        %1748 = vmatprep.subr.mxu0 0.0
        %1749 = vmatpush1.msra.mxu0 0.0
        %1750 = vmatprep.subr.mxu0 0.0
        %1751 = vmatpush1.msra.mxu0 0.0
        %1752 = vmatprep.subr.mxu0 0.0
        %1753 = vmatpush1.msra.mxu0 0.0
        %1754 = vmatprep.subr.mxu0 0.0
        %1755 = vmatpush1.msra.mxu0 0.0
        %1756 = vmatprep.subr.mxu0 0.0
        %1757 = vmatpush1.msra.mxu0 0.0
        %1758 = vmatprep.subr.mxu0 0.0
        %1759 = vmatpush1.msra.mxu0 0.0
        %1760 = vmatprep.mubr.f32.mxu0 0.0
        %1761 = vmatmul.mubr.f32.gmra.mrb[0].mxu0 %v1694
        %v1762 = vpop.f32.mrb[0].mxu0
        %v1763 = vadd.f32 %v1690, %v1762
        %v1764 = vpop.f32.mrb[0].mxu0
        %1765 = vdwg.mxu0
        %v1766 = vadd.f32 %v1553, %v1763
        %v1767 = vsel %vm374, %v1766, 0.0
        %1768 = vadd.xlane.f32.xlu0 %v1767
        %v1769 = vpop.xlane.xlu0 %1768
        %v1770 = vrot.slane %v1769, 4
        %v1771 = vadd.f32 %v1769, %v1770
        %v1772 = vrot.slane %v1771, 2
        %v1773 = vadd.f32 %v1771, %v1772
        %v1774 = vrot.slane %v1773, 1
        %v1775 = vadd.f32 %v1773, %v1774
        %s1776 = vtos %v1775
        %v1777 = vrcp.pop 256.0
        %s1778 = vtos %v1777
        %s1779 = smul.f32 %s1776, %s1778
        %v1780 = vmul.f32 %v1766, %v1766
        %v1781 = vsel %vm374, %v1780, 0.0
        %1782 = vadd.xlane.f32.xlu0 %v1781
        %v1783 = vpop.xlane.xlu0 %1782
        %v1784 = vrot.slane %v1783, 4
        %v1785 = vadd.f32 %v1783, %v1784
        %v1786 = vrot.slane %v1785, 2
        %v1787 = vadd.f32 %v1785, %v1786
        %v1788 = vrot.slane %v1787, 1
        %v1789 = vadd.f32 %v1787, %v1788
        %s1790 = vtos %v1789
        %v1791 = vrcp.pop 256.0
        %s1792 = vtos %v1791
        %s1793 = smul.f32 %s1790, %s1792
        %s1794 = smul.f32 %s1779, %s1779
        %s1795 = ssub.f32 %s1793, %s1794
        %s1796 = smax.f32 %s1795, 0.0
        %v1797 = vstv %s1779
        %v1798 = vsub.f32 %v1766, %v1797
        %s1799 = sadd.f32 %s1796, 1e-05
        %v1800 = vstv %s1799
        %v1801 = vrsqrt.pop %v1800
        %s1802 = vtos %v1801
        %v1803 = vstv %s1802
        %v1804 = vmul.f32 %v1798, %v1803
        %s1805 = scalar_lea.vmem %s2, 32
        %v1806 = vld [vmem:[%s1805] sm:$0xff]
        %v1807 = vld [vmem:[%s1805 + $0x8] sm:$0xff]
        %v1808 = vld [vmem:[%s1805 + $0x10] sm:$0xff]
        %v1809 = vld [vmem:[%s1805 + $0x18] sm:$0xff]
        %v1811 = vsel %vm374, %v1804, 0
        %1813 = vmatprep.subr.mxu0 0.0
        %1814 = vmatpush1.msra.mxu0 %v1806
        %1815 = vmatprep.subr.mxu0 0.0
        %1816 = vmatpush1.msra.mxu0 %v1807
        %1817 = vmatprep.subr.mxu0 0.0
        %1818 = vmatpush1.msra.mxu0 %v1808
        %1819 = vmatprep.subr.mxu0 0.0
        %1820 = vmatpush1.msra.mxu0 %v1809
        %1821 = vmatprep.subr.mxu0 0.0
        %1822 = vmatpush1.msra.mxu0 0.0
        %1823 = vmatprep.subr.mxu0 0.0
        %1824 = vmatpush1.msra.mxu0 0.0
        %1825 = vmatprep.subr.mxu0 0.0
        %1826 = vmatpush1.msra.mxu0 0.0
        %1827 = vmatprep.subr.mxu0 0.0
        %1828 = vmatpush1.msra.mxu0 0.0
        %1829 = vmatprep.subr.mxu0 0.0
        %1830 = vmatpush1.msra.mxu0 0.0
        %1831 = vmatprep.subr.mxu0 0.0
        %1832 = vmatpush1.msra.mxu0 0.0
        %1833 = vmatprep.subr.mxu0 0.0
        %1834 = vmatpush1.msra.mxu0 0.0
        %1835 = vmatprep.subr.mxu0 0.0
        %1836 = vmatpush1.msra.mxu0 0.0
        %1837 = vmatprep.subr.mxu0 0.0
        %1838 = vmatpush1.msra.mxu0 0.0
        %1839 = vmatprep.subr.mxu0 0.0
        %1840 = vmatpush1.msra.mxu0 0.0
        %1841 = vmatprep.subr.mxu0 0.0
        %1842 = vmatpush1.msra.mxu0 0.0
        %1843 = vmatprep.subr.mxu0 0.0
        %1844 = vmatpush1.msra.mxu0 0.0
        %1845 = vmatprep.subr.mxu0 0.0
        %1846 = vmatpush1.msra.mxu0 0.0
        %1847 = vmatprep.subr.mxu0 0.0
        %1848 = vmatpush1.msra.mxu0 0.0
        %1849 = vmatprep.subr.mxu0 0.0
        %1850 = vmatpush1.msra.mxu0 0.0
        %1851 = vmatprep.subr.mxu0 0.0
        %1852 = vmatpush1.msra.mxu0 0.0
        %1853 = vmatprep.subr.mxu0 0.0
        %1854 = vmatpush1.msra.mxu0 0.0
        %1855 = vmatprep.subr.mxu0 0.0
        %1856 = vmatpush1.msra.mxu0 0.0
        %1857 = vmatprep.subr.mxu0 0.0
        %1858 = vmatpush1.msra.mxu0 0.0
        %1859 = vmatprep.subr.mxu0 0.0
        %1860 = vmatpush1.msra.mxu0 0.0
        %1861 = vmatprep.subr.mxu0 0.0
        %1862 = vmatpush1.msra.mxu0 0.0
        %1863 = vmatprep.subr.mxu0 0.0
        %1864 = vmatpush1.msra.mxu0 0.0
        %1865 = vmatprep.subr.mxu0 0.0
        %1866 = vmatpush1.msra.mxu0 0.0
        %1867 = vmatprep.subr.mxu0 0.0
        %1868 = vmatpush1.msra.mxu0 0.0
        %1869 = vmatprep.subr.mxu0 0.0
        %1870 = vmatpush1.msra.mxu0 0.0
        %1871 = vmatprep.subr.mxu0 0.0
        %1872 = vmatpush1.msra.mxu0 0.0
        %1873 = vmatprep.subr.mxu0 0.0
        %1874 = vmatpush1.msra.mxu0 0.0
        %1875 = vmatprep.subr.mxu0 0.0
        %1876 = vmatpush1.msra.mxu0 0.0
        %1877 = vmatprep.mubr.f32.mxu0 0.0
        %1878 = vmatmul.mubr.f32.gmra.mrb[0].mxu0 %v1811
        %v1879 = vpop.f32.mrb[0].mxu0
        %v1880 = vadd.f32 0.0, %v1879
        %v1881 = vpop.f32.mrb[0].mxu0
        %1882 = vdwg.mxu0
        %1884 = vrot.lane.b32.xlu0 %v1880, 112
        %v1885 = vpop.permute.xlu0 %1884
        %v1886 = vsel %vm614, %v1880, 0
        %v1888 = vsel %vm614, %v1885, 0
        %1890 = vmatprep.subr.mxu0 0.0
        %1891 = vmatpush1.xpose.msra.mxu0 %v1888
        %1892 = vmatprep.subr.mxu0 0.0
        %1893 = vmatpush1.xpose.msra.mxu0 0.0
        %1894 = vmatprep.subr.mxu0 0.0
        %1895 = vmatpush1.xpose.msra.mxu0 0.0
        %1896 = vmatprep.subr.mxu0 0.0
        %1897 = vmatpush1.xpose.msra.mxu0 0.0
        %1898 = vmatprep.subr.mxu0 0.0
        %1899 = vmatpush1.xpose.msra.mxu0 0.0
        %1900 = vmatprep.subr.mxu0 0.0
        %1901 = vmatpush1.xpose.msra.mxu0 0.0
        %1902 = vmatprep.subr.mxu0 0.0
        %1903 = vmatpush1.xpose.msra.mxu0 0.0
        %1904 = vmatprep.subr.mxu0 0.0
        %1905 = vmatpush1.xpose.msra.mxu0 0.0
        %1906 = vmatprep.subr.mxu0 0.0
        %1907 = vmatpush1.xpose.msra.mxu0 0.0
        %1908 = vmatprep.subr.mxu0 0.0
        %1909 = vmatpush1.xpose.msra.mxu0 0.0
        %1910 = vmatprep.subr.mxu0 0.0
        %1911 = vmatpush1.xpose.msra.mxu0 0.0
        %1912 = vmatprep.subr.mxu0 0.0
        %1913 = vmatpush1.xpose.msra.mxu0 0.0
        %1914 = vmatprep.subr.mxu0 0.0
        %1915 = vmatpush1.xpose.msra.mxu0 0.0
        %1916 = vmatprep.subr.mxu0 0.0
        %1917 = vmatpush1.xpose.msra.mxu0 0.0
        %1918 = vmatprep.subr.mxu0 0.0
        %1919 = vmatpush1.xpose.msra.mxu0 0.0
        %1920 = vmatprep.subr.mxu0 0.0
        %1921 = vmatpush1.xpose.msra.mxu0 0.0
        %1922 = vmatprep.subr.mxu0 0.0
        %1923 = vmatpush1.xpose.msra.mxu0 0.0
        %1924 = vmatprep.subr.mxu0 0.0
        %1925 = vmatpush1.xpose.msra.mxu0 0.0
        %1926 = vmatprep.subr.mxu0 0.0
        %1927 = vmatpush1.xpose.msra.mxu0 0.0
        %1928 = vmatprep.subr.mxu0 0.0
        %1929 = vmatpush1.xpose.msra.mxu0 0.0
        %1930 = vmatprep.subr.mxu0 0.0
        %1931 = vmatpush1.xpose.msra.mxu0 0.0
        %1932 = vmatprep.subr.mxu0 0.0
        %1933 = vmatpush1.xpose.msra.mxu0 0.0
        %1934 = vmatprep.subr.mxu0 0.0
        %1935 = vmatpush1.xpose.msra.mxu0 0.0
        %1936 = vmatprep.subr.mxu0 0.0
        %1937 = vmatpush1.xpose.msra.mxu0 0.0
        %1938 = vmatprep.subr.mxu0 0.0
        %1939 = vmatpush1.xpose.msra.mxu0 0.0
        %1940 = vmatprep.subr.mxu0 0.0
        %1941 = vmatpush1.xpose.msra.mxu0 0.0
        %1942 = vmatprep.subr.mxu0 0.0
        %1943 = vmatpush1.xpose.msra.mxu0 0.0
        %1944 = vmatprep.subr.mxu0 0.0
        %1945 = vmatpush1.xpose.msra.mxu0 0.0
        %1946 = vmatprep.subr.mxu0 0.0
        %1947 = vmatpush1.xpose.msra.mxu0 0.0
        %1948 = vmatprep.subr.mxu0 0.0
        %1949 = vmatpush1.xpose.msra.mxu0 0.0
        %1950 = vmatprep.subr.mxu0 0.0
        %1951 = vmatpush1.xpose.msra.mxu0 0.0
        %1952 = vmatprep.subr.mxu0 0.0
        %1953 = vmatpush1.xpose.msra.mxu0 0.0
        %1954 = vmatprep.mubr.f32.mxu0 0.0
        %1955 = vmatmul.mubr.f32.gmra.mrb[0].mxu0 %v1886
        %v1956 = vpop.f32.mrb[0].mxu0
        %v1957 = vadd.f32 0.0, %v1956
        %v1958 = vpop.f32.mrb[0].mxu0
        %1959 = vdwg.mxu0
        %v1960 = vmul.f32 %v1957, 0.35355338
        %v1961 = vadd.f32 %v1960, %v495
        %v1962 = vsel %vm614, %v1961, -inf
        %1963 = vmax.xlane.f32.xlu0 %v1962
        %v1964 = vpop.xlane.xlu0 %1963
        %v1965 = vsub.f32 %v1961, %v1964
        %v1966 = vmul.f32 %v1965, 1.442695
        %v1967 = vpow.pop %v1966
        %v1968 = vsel %vm614, %v1967, 0.0
        %1969 = vadd.xlane.f32.xlu0 %v1968
        %v1970 = vpop.xlane.xlu0 %1969
        %v1971 = vrcp.pop %v1970
        %v1972 = vmul.f32 %v1967, %v1971
        %1973 = vrot.lane.b32.xlu0 %v1880, 96
        %v1974 = vpop.permute.xlu0 %1973
        %v1977 = vsel %vm614, %v1972, 0
        %1979 = vmatprep.subr.mxu0 0.0
        %1980 = vmatpush1.msra.mxu0 %v1974
        %1981 = vmatprep.subr.mxu0 0.0
        %1982 = vmatpush1.msra.mxu0 0.0
        %1983 = vmatprep.subr.mxu0 0.0
        %1984 = vmatpush1.msra.mxu0 0.0
        %1985 = vmatprep.subr.mxu0 0.0
        %1986 = vmatpush1.msra.mxu0 0.0
        %1987 = vmatprep.subr.mxu0 0.0
        %1988 = vmatpush1.msra.mxu0 0.0
        %1989 = vmatprep.subr.mxu0 0.0
        %1990 = vmatpush1.msra.mxu0 0.0
        %1991 = vmatprep.subr.mxu0 0.0
        %1992 = vmatpush1.msra.mxu0 0.0
        %1993 = vmatprep.subr.mxu0 0.0
        %1994 = vmatpush1.msra.mxu0 0.0
        %1995 = vmatprep.subr.mxu0 0.0
        %1996 = vmatpush1.msra.mxu0 0.0
        %1997 = vmatprep.subr.mxu0 0.0
        %1998 = vmatpush1.msra.mxu0 0.0
        %1999 = vmatprep.subr.mxu0 0.0
        %2000 = vmatpush1.msra.mxu0 0.0
        %2001 = vmatprep.subr.mxu0 0.0
        %2002 = vmatpush1.msra.mxu0 0.0
        %2003 = vmatprep.subr.mxu0 0.0
        %2004 = vmatpush1.msra.mxu0 0.0
        %2005 = vmatprep.subr.mxu0 0.0
        %2006 = vmatpush1.msra.mxu0 0.0
        %2007 = vmatprep.subr.mxu0 0.0
        %2008 = vmatpush1.msra.mxu0 0.0
        %2009 = vmatprep.subr.mxu0 0.0
        %2010 = vmatpush1.msra.mxu0 0.0
        %2011 = vmatprep.subr.mxu0 0.0
        %2012 = vmatpush1.msra.mxu0 0.0
        %2013 = vmatprep.subr.mxu0 0.0
        %2014 = vmatpush1.msra.mxu0 0.0
        %2015 = vmatprep.subr.mxu0 0.0
        %2016 = vmatpush1.msra.mxu0 0.0
        %2017 = vmatprep.subr.mxu0 0.0
        %2018 = vmatpush1.msra.mxu0 0.0
        %2019 = vmatprep.subr.mxu0 0.0
        %2020 = vmatpush1.msra.mxu0 0.0
        %2021 = vmatprep.subr.mxu0 0.0
        %2022 = vmatpush1.msra.mxu0 0.0
        %2023 = vmatprep.subr.mxu0 0.0
        %2024 = vmatpush1.msra.mxu0 0.0
        %2025 = vmatprep.subr.mxu0 0.0
        %2026 = vmatpush1.msra.mxu0 0.0
        %2027 = vmatprep.subr.mxu0 0.0
        %2028 = vmatpush1.msra.mxu0 0.0
        %2029 = vmatprep.subr.mxu0 0.0
        %2030 = vmatpush1.msra.mxu0 0.0
        %2031 = vmatprep.subr.mxu0 0.0
        %2032 = vmatpush1.msra.mxu0 0.0
        %2033 = vmatprep.subr.mxu0 0.0
        %2034 = vmatpush1.msra.mxu0 0.0
        %2035 = vmatprep.subr.mxu0 0.0
        %2036 = vmatpush1.msra.mxu0 0.0
        %2037 = vmatprep.subr.mxu0 0.0
        %2038 = vmatpush1.msra.mxu0 0.0
        %2039 = vmatprep.subr.mxu0 0.0
        %2040 = vmatpush1.msra.mxu0 0.0
        %2041 = vmatprep.subr.mxu0 0.0
        %2042 = vmatpush1.msra.mxu0 0.0
        %2043 = vmatprep.mubr.f32.mxu0 0.0
        %2044 = vmatmul.mubr.f32.gmra.mrb[0].mxu0 %v1977
        %v2045 = vpop.f32.mrb[0].mxu0
        %v2046 = vadd.f32 0.0, %v2045
        %v2047 = vpop.f32.mrb[0].mxu0
        %2048 = vdwg.mxu0
        %2049 = vrot.lane.b32.xlu0 %v1880, 120
        %v2050 = vpop.permute.xlu0 %2049
        %2051 = vrot.lane.b32.xlu0 %v1880, 104
        %v2052 = vpop.permute.xlu0 %2051
        %v2053 = vsel %vm614, %v2050, 0
        %v2055 = vsel %vm614, %v2052, 0
        %2057 = vmatprep.subr.mxu0 0.0
        %2058 = vmatpush1.xpose.msra.mxu0 %v2055
        %2059 = vmatprep.subr.mxu0 0.0
        %2060 = vmatpush1.xpose.msra.mxu0 0.0
        %2061 = vmatprep.subr.mxu0 0.0
        %2062 = vmatpush1.xpose.msra.mxu0 0.0
        %2063 = vmatprep.subr.mxu0 0.0
        %2064 = vmatpush1.xpose.msra.mxu0 0.0
        %2065 = vmatprep.subr.mxu0 0.0
        %2066 = vmatpush1.xpose.msra.mxu0 0.0
        %2067 = vmatprep.subr.mxu0 0.0
        %2068 = vmatpush1.xpose.msra.mxu0 0.0
        %2069 = vmatprep.subr.mxu0 0.0
        %2070 = vmatpush1.xpose.msra.mxu0 0.0
        %2071 = vmatprep.subr.mxu0 0.0
        %2072 = vmatpush1.xpose.msra.mxu0 0.0
        %2073 = vmatprep.subr.mxu0 0.0
        %2074 = vmatpush1.xpose.msra.mxu0 0.0
        %2075 = vmatprep.subr.mxu0 0.0
        %2076 = vmatpush1.xpose.msra.mxu0 0.0
        %2077 = vmatprep.subr.mxu0 0.0
        %2078 = vmatpush1.xpose.msra.mxu0 0.0
        %2079 = vmatprep.subr.mxu0 0.0
        %2080 = vmatpush1.xpose.msra.mxu0 0.0
        %2081 = vmatprep.subr.mxu0 0.0
        %2082 = vmatpush1.xpose.msra.mxu0 0.0
        %2083 = vmatprep.subr.mxu0 0.0
        %2084 = vmatpush1.xpose.msra.mxu0 0.0
        %2085 = vmatprep.subr.mxu0 0.0
        %2086 = vmatpush1.xpose.msra.mxu0 0.0
        %2087 = vmatprep.subr.mxu0 0.0
        %2088 = vmatpush1.xpose.msra.mxu0 0.0
        %2089 = vmatprep.subr.mxu0 0.0
        %2090 = vmatpush1.xpose.msra.mxu0 0.0
        %2091 = vmatprep.subr.mxu0 0.0
        %2092 = vmatpush1.xpose.msra.mxu0 0.0
        %2093 = vmatprep.subr.mxu0 0.0
        %2094 = vmatpush1.xpose.msra.mxu0 0.0
        %2095 = vmatprep.subr.mxu0 0.0
        %2096 = vmatpush1.xpose.msra.mxu0 0.0
        %2097 = vmatprep.subr.mxu0 0.0
        %2098 = vmatpush1.xpose.msra.mxu0 0.0
        %2099 = vmatprep.subr.mxu0 0.0
        %2100 = vmatpush1.xpose.msra.mxu0 0.0
        %2101 = vmatprep.subr.mxu0 0.0
        %2102 = vmatpush1.xpose.msra.mxu0 0.0
        %2103 = vmatprep.subr.mxu0 0.0
        %2104 = vmatpush1.xpose.msra.mxu0 0.0
        %2105 = vmatprep.subr.mxu0 0.0
        %2106 = vmatpush1.xpose.msra.mxu0 0.0
        %2107 = vmatprep.subr.mxu0 0.0
        %2108 = vmatpush1.xpose.msra.mxu0 0.0
        %2109 = vmatprep.subr.mxu0 0.0
        %2110 = vmatpush1.xpose.msra.mxu0 0.0
        %2111 = vmatprep.subr.mxu0 0.0
        %2112 = vmatpush1.xpose.msra.mxu0 0.0
        %2113 = vmatprep.subr.mxu0 0.0
        %2114 = vmatpush1.xpose.msra.mxu0 0.0
        %2115 = vmatprep.subr.mxu0 0.0
        %2116 = vmatpush1.xpose.msra.mxu0 0.0
        %2117 = vmatprep.subr.mxu0 0.0
        %2118 = vmatpush1.xpose.msra.mxu0 0.0
        %2119 = vmatprep.subr.mxu0 0.0
        %2120 = vmatpush1.xpose.msra.mxu0 0.0
        %2121 = vmatprep.mubr.f32.mxu0 0.0
        %2122 = vmatmul.mubr.f32.gmra.mrb[0].mxu0 %v2053
        %v2123 = vpop.f32.mrb[0].mxu0
        %v2124 = vadd.f32 0.0, %v2123
        %v2125 = vpop.f32.mrb[0].mxu0
        %2126 = vdwg.mxu0
        %v2127 = vmul.f32 %v2124, 0.35355338
        %v2128 = vadd.f32 %v2127, %v495
        %v2129 = vsel %vm614, %v2128, -inf
        %2130 = vmax.xlane.f32.xlu0 %v2129
        %v2131 = vpop.xlane.xlu0 %2130
        %v2132 = vsub.f32 %v2128, %v2131
        %v2133 = vmul.f32 %v2132, 1.442695
        %v2134 = vpow.pop %v2133
        %v2135 = vsel %vm614, %v2134, 0.0
        %2136 = vadd.xlane.f32.xlu0 %v2135
        %v2137 = vpop.xlane.xlu0 %2136
        %v2138 = vrcp.pop %v2137
        %v2139 = vmul.f32 %v2134, %v2138
        %2140 = vrot.lane.b32.xlu0 %v1880, 88
        %v2141 = vpop.permute.xlu0 %2140
        %v2144 = vsel %vm614, %v2139, 0
        %2146 = vmatprep.subr.mxu0 0.0
        %2147 = vmatpush1.msra.mxu0 %v2141
        %2148 = vmatprep.subr.mxu0 0.0
        %2149 = vmatpush1.msra.mxu0 0.0
        %2150 = vmatprep.subr.mxu0 0.0
        %2151 = vmatpush1.msra.mxu0 0.0
        %2152 = vmatprep.subr.mxu0 0.0
        %2153 = vmatpush1.msra.mxu0 0.0
        %2154 = vmatprep.subr.mxu0 0.0
        %2155 = vmatpush1.msra.mxu0 0.0
        %2156 = vmatprep.subr.mxu0 0.0
        %2157 = vmatpush1.msra.mxu0 0.0
        %2158 = vmatprep.subr.mxu0 0.0
        %2159 = vmatpush1.msra.mxu0 0.0
        %2160 = vmatprep.subr.mxu0 0.0
        %2161 = vmatpush1.msra.mxu0 0.0
        %2162 = vmatprep.subr.mxu0 0.0
        %2163 = vmatpush1.msra.mxu0 0.0
        %2164 = vmatprep.subr.mxu0 0.0
        %2165 = vmatpush1.msra.mxu0 0.0
        %2166 = vmatprep.subr.mxu0 0.0
        %2167 = vmatpush1.msra.mxu0 0.0
        %2168 = vmatprep.subr.mxu0 0.0
        %2169 = vmatpush1.msra.mxu0 0.0
        %2170 = vmatprep.subr.mxu0 0.0
        %2171 = vmatpush1.msra.mxu0 0.0
        %2172 = vmatprep.subr.mxu0 0.0
        %2173 = vmatpush1.msra.mxu0 0.0
        %2174 = vmatprep.subr.mxu0 0.0
        %2175 = vmatpush1.msra.mxu0 0.0
        %2176 = vmatprep.subr.mxu0 0.0
        %2177 = vmatpush1.msra.mxu0 0.0
        %2178 = vmatprep.subr.mxu0 0.0
        %2179 = vmatpush1.msra.mxu0 0.0
        %2180 = vmatprep.subr.mxu0 0.0
        %2181 = vmatpush1.msra.mxu0 0.0
        %2182 = vmatprep.subr.mxu0 0.0
        %2183 = vmatpush1.msra.mxu0 0.0
        %2184 = vmatprep.subr.mxu0 0.0
        %2185 = vmatpush1.msra.mxu0 0.0
        %2186 = vmatprep.subr.mxu0 0.0
        %2187 = vmatpush1.msra.mxu0 0.0
        %2188 = vmatprep.subr.mxu0 0.0
        %2189 = vmatpush1.msra.mxu0 0.0
        %2190 = vmatprep.subr.mxu0 0.0
        %2191 = vmatpush1.msra.mxu0 0.0
        %2192 = vmatprep.subr.mxu0 0.0
        %2193 = vmatpush1.msra.mxu0 0.0
        %2194 = vmatprep.subr.mxu0 0.0
        %2195 = vmatpush1.msra.mxu0 0.0
        %2196 = vmatprep.subr.mxu0 0.0
        %2197 = vmatpush1.msra.mxu0 0.0
        %2198 = vmatprep.subr.mxu0 0.0
        %2199 = vmatpush1.msra.mxu0 0.0
        %2200 = vmatprep.subr.mxu0 0.0
        %2201 = vmatpush1.msra.mxu0 0.0
        %2202 = vmatprep.subr.mxu0 0.0
        %2203 = vmatpush1.msra.mxu0 0.0
        %2204 = vmatprep.subr.mxu0 0.0
        %2205 = vmatpush1.msra.mxu0 0.0
        %2206 = vmatprep.subr.mxu0 0.0
        %2207 = vmatpush1.msra.mxu0 0.0
        %2208 = vmatprep.subr.mxu0 0.0
        %2209 = vmatpush1.msra.mxu0 0.0
        %2210 = vmatprep.mubr.f32.mxu0 0.0
        %2211 = vmatmul.mubr.f32.gmra.mrb[0].mxu0 %v2144
        %v2212 = vpop.f32.mrb[0].mxu0
        %v2213 = vadd.f32 0.0, %v2212
        %v2214 = vpop.f32.mrb[0].mxu0
        %2215 = vdwg.mxu0
        %2217 = vrot.lane.b32.xlu0 %v2213, 8
        %v2218 = vpop.permute.xlu0 %2217
        %v2220 = vsel %vm614, %v2046, %v2218
        %s2221 = scalar_lea.vmem %s5, 32
        %v2222 = vld [vmem:[%s2221] sm:$0xff]
        %v2223 = vld [vmem:[%s2221 + $0x8] sm:$0xff]
        %v2225 = vsel %vm952, %v2220, 0
        %2227 = vmatprep.subr.mxu0 0.0
        %2228 = vmatpush1.msra.mxu0 %v2222
        %2229 = vmatprep.subr.mxu0 0.0
        %2230 = vmatpush1.msra.mxu0 %v2223
        %2231 = vmatprep.subr.mxu0 0.0
        %2232 = vmatpush1.msra.mxu0 0.0
        %2233 = vmatprep.subr.mxu0 0.0
        %2234 = vmatpush1.msra.mxu0 0.0
        %2235 = vmatprep.subr.mxu0 0.0
        %2236 = vmatpush1.msra.mxu0 0.0
        %2237 = vmatprep.subr.mxu0 0.0
        %2238 = vmatpush1.msra.mxu0 0.0
        %2239 = vmatprep.subr.mxu0 0.0
        %2240 = vmatpush1.msra.mxu0 0.0
        %2241 = vmatprep.subr.mxu0 0.0
        %2242 = vmatpush1.msra.mxu0 0.0
        %2243 = vmatprep.subr.mxu0 0.0
        %2244 = vmatpush1.msra.mxu0 0.0
        %2245 = vmatprep.subr.mxu0 0.0
        %2246 = vmatpush1.msra.mxu0 0.0
        %2247 = vmatprep.subr.mxu0 0.0
        %2248 = vmatpush1.msra.mxu0 0.0
        %2249 = vmatprep.subr.mxu0 0.0
        %2250 = vmatpush1.msra.mxu0 0.0
        %2251 = vmatprep.subr.mxu0 0.0
        %2252 = vmatpush1.msra.mxu0 0.0
        %2253 = vmatprep.subr.mxu0 0.0
        %2254 = vmatpush1.msra.mxu0 0.0
        %2255 = vmatprep.subr.mxu0 0.0
        %2256 = vmatpush1.msra.mxu0 0.0
        %2257 = vmatprep.subr.mxu0 0.0
        %2258 = vmatpush1.msra.mxu0 0.0
        %2259 = vmatprep.subr.mxu0 0.0
        %2260 = vmatpush1.msra.mxu0 0.0
        %2261 = vmatprep.subr.mxu0 0.0
        %2262 = vmatpush1.msra.mxu0 0.0
        %2263 = vmatprep.subr.mxu0 0.0
        %2264 = vmatpush1.msra.mxu0 0.0
        %2265 = vmatprep.subr.mxu0 0.0
        %2266 = vmatpush1.msra.mxu0 0.0
        %2267 = vmatprep.subr.mxu0 0.0
        %2268 = vmatpush1.msra.mxu0 0.0
        %2269 = vmatprep.subr.mxu0 0.0
        %2270 = vmatpush1.msra.mxu0 0.0
        %2271 = vmatprep.subr.mxu0 0.0
        %2272 = vmatpush1.msra.mxu0 0.0
        %2273 = vmatprep.subr.mxu0 0.0
        %2274 = vmatpush1.msra.mxu0 0.0
        %2275 = vmatprep.subr.mxu0 0.0
        %2276 = vmatpush1.msra.mxu0 0.0
        %2277 = vmatprep.subr.mxu0 0.0
        %2278 = vmatpush1.msra.mxu0 0.0
        %2279 = vmatprep.subr.mxu0 0.0
        %2280 = vmatpush1.msra.mxu0 0.0
        %2281 = vmatprep.subr.mxu0 0.0
        %2282 = vmatpush1.msra.mxu0 0.0
        %2283 = vmatprep.subr.mxu0 0.0
        %2284 = vmatpush1.msra.mxu0 0.0
        %2285 = vmatprep.subr.mxu0 0.0
        %2286 = vmatpush1.msra.mxu0 0.0
        %2287 = vmatprep.subr.mxu0 0.0
        %2288 = vmatpush1.msra.mxu0 0.0
        %2289 = vmatprep.subr.mxu0 0.0
        %2290 = vmatpush1.msra.mxu0 0.0
        %2291 = vmatprep.mubr.f32.mxu0 0.0
        %2292 = vmatmul.mubr.f32.gmra.mrb[0].mxu0 %v2225
        %v2293 = vpop.f32.mrb[0].mxu0
        %v2294 = vadd.f32 0.0, %v2293
        %v2295 = vpop.f32.mrb[0].mxu0
        %2296 = vdwg.mxu0
        %v2297 = vadd.f32 %v1766, %v2294
        %v2298 = vsel %vm374, %v2297, 0.0
        %2299 = vadd.xlane.f32.xlu0 %v2298
        %v2300 = vpop.xlane.xlu0 %2299
        %v2301 = vrot.slane %v2300, 4
        %v2302 = vadd.f32 %v2300, %v2301
        %v2303 = vrot.slane %v2302, 2
        %v2304 = vadd.f32 %v2302, %v2303
        %v2305 = vrot.slane %v2304, 1
        %v2306 = vadd.f32 %v2304, %v2305
        %s2307 = vtos %v2306
        %v2308 = vrcp.pop 256.0
        %s2309 = vtos %v2308
        %s2310 = smul.f32 %s2307, %s2309
        %v2311 = vmul.f32 %v2297, %v2297
        %v2312 = vsel %vm374, %v2311, 0.0
        %2313 = vadd.xlane.f32.xlu0 %v2312
        %v2314 = vpop.xlane.xlu0 %2313
        %v2315 = vrot.slane %v2314, 4
        %v2316 = vadd.f32 %v2314, %v2315
        %v2317 = vrot.slane %v2316, 2
        %v2318 = vadd.f32 %v2316, %v2317
        %v2319 = vrot.slane %v2318, 1
        %v2320 = vadd.f32 %v2318, %v2319
        %s2321 = vtos %v2320
        %v2322 = vrcp.pop 256.0
        %s2323 = vtos %v2322
        %s2324 = smul.f32 %s2321, %s2323
        %s2325 = smul.f32 %s2310, %s2310
        %s2326 = ssub.f32 %s2324, %s2325
        %s2327 = smax.f32 %s2326, 0.0
        %v2328 = vstv %s2310
        %v2329 = vsub.f32 %v2297, %v2328
        %s2330 = sadd.f32 %s2327, 1e-05
        %v2331 = vstv %s2330
        %v2332 = vrsqrt.pop %v2331
        %s2333 = vtos %v2332
        %v2334 = vstv %s2333
        %v2335 = vmul.f32 %v2329, %v2334
        %s2336 = scalar_lea.vmem %s3, 32
        %v2337 = vld [vmem:[%s2336] sm:$0xff]
        %v2338 = vld [vmem:[%s2336 + $0x8] sm:$0xff]
        %v2339 = vld [vmem:[%s2336 + $0x10] sm:$0xff]
        %v2340 = vld [vmem:[%s2336 + $0x18] sm:$0xff]
        %v2342 = vsel %vm374, %v2335, 0
        %2344 = vmatprep.subr.mxu0 0.0
        %2345 = vmatpush1.msra.mxu0 %v2337
        %2346 = vmatprep.subr.mxu0 0.0
        %2347 = vmatpush1.msra.mxu0 %v2338
        %2348 = vmatprep.subr.mxu0 0.0
        %2349 = vmatpush1.msra.mxu0 %v2339
        %2350 = vmatprep.subr.mxu0 0.0
        %2351 = vmatpush1.msra.mxu0 %v2340
        %2352 = vmatprep.subr.mxu0 0.0
        %2353 = vmatpush1.msra.mxu0 0.0
        %2354 = vmatprep.subr.mxu0 0.0
        %2355 = vmatpush1.msra.mxu0 0.0
        %2356 = vmatprep.subr.mxu0 0.0
        %2357 = vmatpush1.msra.mxu0 0.0
        %2358 = vmatprep.subr.mxu0 0.0
        %2359 = vmatpush1.msra.mxu0 0.0
        %2360 = vmatprep.subr.mxu0 0.0
        %2361 = vmatpush1.msra.mxu0 0.0
        %2362 = vmatprep.subr.mxu0 0.0
        %2363 = vmatpush1.msra.mxu0 0.0
        %2364 = vmatprep.subr.mxu0 0.0
        %2365 = vmatpush1.msra.mxu0 0.0
        %2366 = vmatprep.subr.mxu0 0.0
        %2367 = vmatpush1.msra.mxu0 0.0
        %2368 = vmatprep.subr.mxu0 0.0
        %2369 = vmatpush1.msra.mxu0 0.0
        %2370 = vmatprep.subr.mxu0 0.0
        %2371 = vmatpush1.msra.mxu0 0.0
        %2372 = vmatprep.subr.mxu0 0.0
        %2373 = vmatpush1.msra.mxu0 0.0
        %2374 = vmatprep.subr.mxu0 0.0
        %2375 = vmatpush1.msra.mxu0 0.0
        %2376 = vmatprep.subr.mxu0 0.0
        %2377 = vmatpush1.msra.mxu0 0.0
        %2378 = vmatprep.subr.mxu0 0.0
        %2379 = vmatpush1.msra.mxu0 0.0
        %2380 = vmatprep.subr.mxu0 0.0
        %2381 = vmatpush1.msra.mxu0 0.0
        %2382 = vmatprep.subr.mxu0 0.0
        %2383 = vmatpush1.msra.mxu0 0.0
        %2384 = vmatprep.subr.mxu0 0.0
        %2385 = vmatpush1.msra.mxu0 0.0
        %2386 = vmatprep.subr.mxu0 0.0
        %2387 = vmatpush1.msra.mxu0 0.0
        %2388 = vmatprep.subr.mxu0 0.0
        %2389 = vmatpush1.msra.mxu0 0.0
        %2390 = vmatprep.subr.mxu0 0.0
        %2391 = vmatpush1.msra.mxu0 0.0
        %2392 = vmatprep.subr.mxu0 0.0
        %2393 = vmatpush1.msra.mxu0 0.0
        %2394 = vmatprep.subr.mxu0 0.0
        %2395 = vmatpush1.msra.mxu0 0.0
        %2396 = vmatprep.subr.mxu0 0.0
        %2397 = vmatpush1.msra.mxu0 0.0
        %2398 = vmatprep.subr.mxu0 0.0
        %2399 = vmatpush1.msra.mxu0 0.0
        %2400 = vmatprep.subr.mxu0 0.0
        %2401 = vmatpush1.msra.mxu0 0.0
        %2402 = vmatprep.subr.mxu0 0.0
        %2403 = vmatpush1.msra.mxu0 0.0
        %2404 = vmatprep.subr.mxu0 0.0
        %2405 = vmatpush1.msra.mxu0 0.0
        %2406 = vmatprep.subr.mxu0 0.0
        %2407 = vmatpush1.msra.mxu0 0.0
        %2408 = vmatprep.mubr.f32.mxu0 0.0
        %2409 = vmatmul.mubr.f32.gmra.mrb[0].mxu0 %v2342
        %v2410 = vpop.f32.mrb[0].mxu0
        %v2411 = vadd.f32 0.0, %v2410
        %v2412 = vpop.f32.mrb[0].mxu0
        %2413 = vdwg.mxu0
        %2414 = vrot.lane.b32.xlu0 %v487, 96
        %v2415 = vpop.permute.xlu0 %2414
        %v2417 = vsel %vm614, %v2411, 0
        %v2419 = vsel %vm614, %v2415, 0
        %2421 = vmatprep.subr.mxu0 0.0
        %2422 = vmatpush1.xpose.msra.mxu0 %v2419
        %2423 = vmatprep.subr.mxu0 0.0
        %2424 = vmatpush1.xpose.msra.mxu0 0.0
        %2425 = vmatprep.subr.mxu0 0.0
        %2426 = vmatpush1.xpose.msra.mxu0 0.0
        %2427 = vmatprep.subr.mxu0 0.0
        %2428 = vmatpush1.xpose.msra.mxu0 0.0
        %2429 = vmatprep.subr.mxu0 0.0
        %2430 = vmatpush1.xpose.msra.mxu0 0.0
        %2431 = vmatprep.subr.mxu0 0.0
        %2432 = vmatpush1.xpose.msra.mxu0 0.0
        %2433 = vmatprep.subr.mxu0 0.0
        %2434 = vmatpush1.xpose.msra.mxu0 0.0
        %2435 = vmatprep.subr.mxu0 0.0
        %2436 = vmatpush1.xpose.msra.mxu0 0.0
        %2437 = vmatprep.subr.mxu0 0.0
        %2438 = vmatpush1.xpose.msra.mxu0 0.0
        %2439 = vmatprep.subr.mxu0 0.0
        %2440 = vmatpush1.xpose.msra.mxu0 0.0
        %2441 = vmatprep.subr.mxu0 0.0
        %2442 = vmatpush1.xpose.msra.mxu0 0.0
        %2443 = vmatprep.subr.mxu0 0.0
        %2444 = vmatpush1.xpose.msra.mxu0 0.0
        %2445 = vmatprep.subr.mxu0 0.0
        %2446 = vmatpush1.xpose.msra.mxu0 0.0
        %2447 = vmatprep.subr.mxu0 0.0
        %2448 = vmatpush1.xpose.msra.mxu0 0.0
        %2449 = vmatprep.subr.mxu0 0.0
        %2450 = vmatpush1.xpose.msra.mxu0 0.0
        %2451 = vmatprep.subr.mxu0 0.0
        %2452 = vmatpush1.xpose.msra.mxu0 0.0
        %2453 = vmatprep.subr.mxu0 0.0
        %2454 = vmatpush1.xpose.msra.mxu0 0.0
        %2455 = vmatprep.subr.mxu0 0.0
        %2456 = vmatpush1.xpose.msra.mxu0 0.0
        %2457 = vmatprep.subr.mxu0 0.0
        %2458 = vmatpush1.xpose.msra.mxu0 0.0
        %2459 = vmatprep.subr.mxu0 0.0
        %2460 = vmatpush1.xpose.msra.mxu0 0.0
        %2461 = vmatprep.subr.mxu0 0.0
        %2462 = vmatpush1.xpose.msra.mxu0 0.0
        %2463 = vmatprep.subr.mxu0 0.0
        %2464 = vmatpush1.xpose.msra.mxu0 0.0
        %2465 = vmatprep.subr.mxu0 0.0
        %2466 = vmatpush1.xpose.msra.mxu0 0.0
        %2467 = vmatprep.subr.mxu0 0.0
        %2468 = vmatpush1.xpose.msra.mxu0 0.0
        %2469 = vmatprep.subr.mxu0 0.0
        %2470 = vmatpush1.xpose.msra.mxu0 0.0
        %2471 = vmatprep.subr.mxu0 0.0
        %2472 = vmatpush1.xpose.msra.mxu0 0.0
        %2473 = vmatprep.subr.mxu0 0.0
        %2474 = vmatpush1.xpose.msra.mxu0 0.0
        %2475 = vmatprep.subr.mxu0 0.0
        %2476 = vmatpush1.xpose.msra.mxu0 0.0
        %2477 = vmatprep.subr.mxu0 0.0
        %2478 = vmatpush1.xpose.msra.mxu0 0.0
        %2479 = vmatprep.subr.mxu0 0.0
        %2480 = vmatpush1.xpose.msra.mxu0 0.0
        %2481 = vmatprep.subr.mxu0 0.0
        %2482 = vmatpush1.xpose.msra.mxu0 0.0
        %2483 = vmatprep.subr.mxu0 0.0
        %2484 = vmatpush1.xpose.msra.mxu0 0.0
        %2485 = vmatprep.mubr.f32.mxu0 0.0
        %2486 = vmatmul.mubr.f32.gmra.mrb[0].mxu0 %v2417
        %v2487 = vpop.f32.mrb[0].mxu0
        %v2488 = vadd.f32 0.0, %v2487
        %v2489 = vpop.f32.mrb[0].mxu0
        %2490 = vdwg.mxu0
        %v2491 = vmul.f32 %v2488, 0.35355338
        %v2492 = vsel %vm614, %v2491, -inf
        %2493 = vmax.xlane.f32.xlu0 %v2492
        %v2494 = vpop.xlane.xlu0 %2493
        %v2495 = vsub.f32 %v2491, %v2494
        %v2496 = vmul.f32 %v2495, 1.442695
        %v2497 = vpow.pop %v2496
        %v2498 = vsel %vm614, %v2497, 0.0
        %2499 = vadd.xlane.f32.xlu0 %v2498
        %v2500 = vpop.xlane.xlu0 %2499
        %v2501 = vrcp.pop %v2500
        %v2502 = vmul.f32 %v2497, %v2501
        %2503 = vrot.lane.b32.xlu0 %v487, 80
        %v2504 = vpop.permute.xlu0 %2503
        %v2507 = vsel %vm614, %v2502, 0
        %2509 = vmatprep.subr.mxu0 0.0
        %2510 = vmatpush1.msra.mxu0 %v2504
        %2511 = vmatprep.subr.mxu0 0.0
        %2512 = vmatpush1.msra.mxu0 0.0
        %2513 = vmatprep.subr.mxu0 0.0
        %2514 = vmatpush1.msra.mxu0 0.0
        %2515 = vmatprep.subr.mxu0 0.0
        %2516 = vmatpush1.msra.mxu0 0.0
        %2517 = vmatprep.subr.mxu0 0.0
        %2518 = vmatpush1.msra.mxu0 0.0
        %2519 = vmatprep.subr.mxu0 0.0
        %2520 = vmatpush1.msra.mxu0 0.0
        %2521 = vmatprep.subr.mxu0 0.0
        %2522 = vmatpush1.msra.mxu0 0.0
        %2523 = vmatprep.subr.mxu0 0.0
        %2524 = vmatpush1.msra.mxu0 0.0
        %2525 = vmatprep.subr.mxu0 0.0
        %2526 = vmatpush1.msra.mxu0 0.0
        %2527 = vmatprep.subr.mxu0 0.0
        %2528 = vmatpush1.msra.mxu0 0.0
        %2529 = vmatprep.subr.mxu0 0.0
        %2530 = vmatpush1.msra.mxu0 0.0
        %2531 = vmatprep.subr.mxu0 0.0
        %2532 = vmatpush1.msra.mxu0 0.0
        %2533 = vmatprep.subr.mxu0 0.0
        %2534 = vmatpush1.msra.mxu0 0.0
        %2535 = vmatprep.subr.mxu0 0.0
        %2536 = vmatpush1.msra.mxu0 0.0
        %2537 = vmatprep.subr.mxu0 0.0
        %2538 = vmatpush1.msra.mxu0 0.0
        %2539 = vmatprep.subr.mxu0 0.0
        %2540 = vmatpush1.msra.mxu0 0.0
        %2541 = vmatprep.subr.mxu0 0.0
        %2542 = vmatpush1.msra.mxu0 0.0
        %2543 = vmatprep.subr.mxu0 0.0
        %2544 = vmatpush1.msra.mxu0 0.0
        %2545 = vmatprep.subr.mxu0 0.0
        %2546 = vmatpush1.msra.mxu0 0.0
        %2547 = vmatprep.subr.mxu0 0.0
        %2548 = vmatpush1.msra.mxu0 0.0
        %2549 = vmatprep.subr.mxu0 0.0
        %2550 = vmatpush1.msra.mxu0 0.0
        %2551 = vmatprep.subr.mxu0 0.0
        %2552 = vmatpush1.msra.mxu0 0.0
        %2553 = vmatprep.subr.mxu0 0.0
        %2554 = vmatpush1.msra.mxu0 0.0
        %2555 = vmatprep.subr.mxu0 0.0
        %2556 = vmatpush1.msra.mxu0 0.0
        %2557 = vmatprep.subr.mxu0 0.0
        %2558 = vmatpush1.msra.mxu0 0.0
        %2559 = vmatprep.subr.mxu0 0.0
        %2560 = vmatpush1.msra.mxu0 0.0
        %2561 = vmatprep.subr.mxu0 0.0
        %2562 = vmatpush1.msra.mxu0 0.0
        %2563 = vmatprep.subr.mxu0 0.0
        %2564 = vmatpush1.msra.mxu0 0.0
        %2565 = vmatprep.subr.mxu0 0.0
        %2566 = vmatpush1.msra.mxu0 0.0
        %2567 = vmatprep.subr.mxu0 0.0
        %2568 = vmatpush1.msra.mxu0 0.0
        %2569 = vmatprep.subr.mxu0 0.0
        %2570 = vmatpush1.msra.mxu0 0.0
        %2571 = vmatprep.subr.mxu0 0.0
        %2572 = vmatpush1.msra.mxu0 0.0
        %2573 = vmatprep.mubr.f32.mxu0 0.0
        %2574 = vmatmul.mubr.f32.gmra.mrb[0].mxu0 %v2507
        %v2575 = vpop.f32.mrb[0].mxu0
        %v2576 = vadd.f32 0.0, %v2575
        %v2577 = vpop.f32.mrb[0].mxu0
        %2578 = vdwg.mxu0
        %2579 = vrot.lane.b32.xlu0 %v2411, 120
        %v2580 = vpop.permute.xlu0 %2579
        %2581 = vrot.lane.b32.xlu0 %v487, 88
        %v2582 = vpop.permute.xlu0 %2581
        %v2583 = vsel %vm614, %v2580, 0
        %v2585 = vsel %vm614, %v2582, 0
        %2587 = vmatprep.subr.mxu0 0.0
        %2588 = vmatpush1.xpose.msra.mxu0 %v2585
        %2589 = vmatprep.subr.mxu0 0.0
        %2590 = vmatpush1.xpose.msra.mxu0 0.0
        %2591 = vmatprep.subr.mxu0 0.0
        %2592 = vmatpush1.xpose.msra.mxu0 0.0
        %2593 = vmatprep.subr.mxu0 0.0
        %2594 = vmatpush1.xpose.msra.mxu0 0.0
        %2595 = vmatprep.subr.mxu0 0.0
        %2596 = vmatpush1.xpose.msra.mxu0 0.0
        %2597 = vmatprep.subr.mxu0 0.0
        %2598 = vmatpush1.xpose.msra.mxu0 0.0
        %2599 = vmatprep.subr.mxu0 0.0
        %2600 = vmatpush1.xpose.msra.mxu0 0.0
        %2601 = vmatprep.subr.mxu0 0.0
        %2602 = vmatpush1.xpose.msra.mxu0 0.0
        %2603 = vmatprep.subr.mxu0 0.0
        %2604 = vmatpush1.xpose.msra.mxu0 0.0
        %2605 = vmatprep.subr.mxu0 0.0
        %2606 = vmatpush1.xpose.msra.mxu0 0.0
        %2607 = vmatprep.subr.mxu0 0.0
        %2608 = vmatpush1.xpose.msra.mxu0 0.0
        %2609 = vmatprep.subr.mxu0 0.0
        %2610 = vmatpush1.xpose.msra.mxu0 0.0
        %2611 = vmatprep.subr.mxu0 0.0
        %2612 = vmatpush1.xpose.msra.mxu0 0.0
        %2613 = vmatprep.subr.mxu0 0.0
        %2614 = vmatpush1.xpose.msra.mxu0 0.0
        %2615 = vmatprep.subr.mxu0 0.0
        %2616 = vmatpush1.xpose.msra.mxu0 0.0
        %2617 = vmatprep.subr.mxu0 0.0
        %2618 = vmatpush1.xpose.msra.mxu0 0.0
        %2619 = vmatprep.subr.mxu0 0.0
        %2620 = vmatpush1.xpose.msra.mxu0 0.0
        %2621 = vmatprep.subr.mxu0 0.0
        %2622 = vmatpush1.xpose.msra.mxu0 0.0
        %2623 = vmatprep.subr.mxu0 0.0
        %2624 = vmatpush1.xpose.msra.mxu0 0.0
        %2625 = vmatprep.subr.mxu0 0.0
        %2626 = vmatpush1.xpose.msra.mxu0 0.0
        %2627 = vmatprep.subr.mxu0 0.0
        %2628 = vmatpush1.xpose.msra.mxu0 0.0
        %2629 = vmatprep.subr.mxu0 0.0
        %2630 = vmatpush1.xpose.msra.mxu0 0.0
        %2631 = vmatprep.subr.mxu0 0.0
        %2632 = vmatpush1.xpose.msra.mxu0 0.0
        %2633 = vmatprep.subr.mxu0 0.0
        %2634 = vmatpush1.xpose.msra.mxu0 0.0
        %2635 = vmatprep.subr.mxu0 0.0
        %2636 = vmatpush1.xpose.msra.mxu0 0.0
        %2637 = vmatprep.subr.mxu0 0.0
        %2638 = vmatpush1.xpose.msra.mxu0 0.0
        %2639 = vmatprep.subr.mxu0 0.0
        %2640 = vmatpush1.xpose.msra.mxu0 0.0
        %2641 = vmatprep.subr.mxu0 0.0
        %2642 = vmatpush1.xpose.msra.mxu0 0.0
        %2643 = vmatprep.subr.mxu0 0.0
        %2644 = vmatpush1.xpose.msra.mxu0 0.0
        %2645 = vmatprep.subr.mxu0 0.0
        %2646 = vmatpush1.xpose.msra.mxu0 0.0
        %2647 = vmatprep.subr.mxu0 0.0
        %2648 = vmatpush1.xpose.msra.mxu0 0.0
        %2649 = vmatprep.subr.mxu0 0.0
        %2650 = vmatpush1.xpose.msra.mxu0 0.0
        %2651 = vmatprep.mubr.f32.mxu0 0.0
        %2652 = vmatmul.mubr.f32.gmra.mrb[0].mxu0 %v2583
        %v2653 = vpop.f32.mrb[0].mxu0
        %v2654 = vadd.f32 0.0, %v2653
        %v2655 = vpop.f32.mrb[0].mxu0
        %2656 = vdwg.mxu0
        %v2657 = vmul.f32 %v2654, 0.35355338
        %v2658 = vsel %vm614, %v2657, -inf
        %2659 = vmax.xlane.f32.xlu0 %v2658
        %v2660 = vpop.xlane.xlu0 %2659
        %v2661 = vsub.f32 %v2657, %v2660
        %v2662 = vmul.f32 %v2661, 1.442695
        %v2663 = vpow.pop %v2662
        %v2664 = vsel %vm614, %v2663, 0.0
        %2665 = vadd.xlane.f32.xlu0 %v2664
        %v2666 = vpop.xlane.xlu0 %2665
        %v2667 = vrcp.pop %v2666
        %v2668 = vmul.f32 %v2663, %v2667
        %2669 = vrot.lane.b32.xlu0 %v487, 72
        %v2670 = vpop.permute.xlu0 %2669
        %v2673 = vsel %vm614, %v2668, 0
        %2675 = vmatprep.subr.mxu0 0.0
        %2676 = vmatpush1.msra.mxu0 %v2670
        %2677 = vmatprep.subr.mxu0 0.0
        %2678 = vmatpush1.msra.mxu0 0.0
        %2679 = vmatprep.subr.mxu0 0.0
        %2680 = vmatpush1.msra.mxu0 0.0
        %2681 = vmatprep.subr.mxu0 0.0
        %2682 = vmatpush1.msra.mxu0 0.0
        %2683 = vmatprep.subr.mxu0 0.0
        %2684 = vmatpush1.msra.mxu0 0.0
        %2685 = vmatprep.subr.mxu0 0.0
        %2686 = vmatpush1.msra.mxu0 0.0
        %2687 = vmatprep.subr.mxu0 0.0
        %2688 = vmatpush1.msra.mxu0 0.0
        %2689 = vmatprep.subr.mxu0 0.0
        %2690 = vmatpush1.msra.mxu0 0.0
        %2691 = vmatprep.subr.mxu0 0.0
        %2692 = vmatpush1.msra.mxu0 0.0
        %2693 = vmatprep.subr.mxu0 0.0
        %2694 = vmatpush1.msra.mxu0 0.0
        %2695 = vmatprep.subr.mxu0 0.0
        %2696 = vmatpush1.msra.mxu0 0.0
        %2697 = vmatprep.subr.mxu0 0.0
        %2698 = vmatpush1.msra.mxu0 0.0
        %2699 = vmatprep.subr.mxu0 0.0
        %2700 = vmatpush1.msra.mxu0 0.0
        %2701 = vmatprep.subr.mxu0 0.0
        %2702 = vmatpush1.msra.mxu0 0.0
        %2703 = vmatprep.subr.mxu0 0.0
        %2704 = vmatpush1.msra.mxu0 0.0
        %2705 = vmatprep.subr.mxu0 0.0
        %2706 = vmatpush1.msra.mxu0 0.0
        %2707 = vmatprep.subr.mxu0 0.0
        %2708 = vmatpush1.msra.mxu0 0.0
        %2709 = vmatprep.subr.mxu0 0.0
        %2710 = vmatpush1.msra.mxu0 0.0
        %2711 = vmatprep.subr.mxu0 0.0
        %2712 = vmatpush1.msra.mxu0 0.0
        %2713 = vmatprep.subr.mxu0 0.0
        %2714 = vmatpush1.msra.mxu0 0.0
        %2715 = vmatprep.subr.mxu0 0.0
        %2716 = vmatpush1.msra.mxu0 0.0
        %2717 = vmatprep.subr.mxu0 0.0
        %2718 = vmatpush1.msra.mxu0 0.0
        %2719 = vmatprep.subr.mxu0 0.0
        %2720 = vmatpush1.msra.mxu0 0.0
        %2721 = vmatprep.subr.mxu0 0.0
        %2722 = vmatpush1.msra.mxu0 0.0
        %2723 = vmatprep.subr.mxu0 0.0
        %2724 = vmatpush1.msra.mxu0 0.0
        %2725 = vmatprep.subr.mxu0 0.0
        %2726 = vmatpush1.msra.mxu0 0.0
        %2727 = vmatprep.subr.mxu0 0.0
        %2728 = vmatpush1.msra.mxu0 0.0
        %2729 = vmatprep.subr.mxu0 0.0
        %2730 = vmatpush1.msra.mxu0 0.0
        %2731 = vmatprep.subr.mxu0 0.0
        %2732 = vmatpush1.msra.mxu0 0.0
        %2733 = vmatprep.subr.mxu0 0.0
        %2734 = vmatpush1.msra.mxu0 0.0
        %2735 = vmatprep.subr.mxu0 0.0
        %2736 = vmatpush1.msra.mxu0 0.0
        %2737 = vmatprep.subr.mxu0 0.0
        %2738 = vmatpush1.msra.mxu0 0.0
        %2739 = vmatprep.mubr.f32.mxu0 0.0
        %2740 = vmatmul.mubr.f32.gmra.mrb[0].mxu0 %v2673
        %v2741 = vpop.f32.mrb[0].mxu0
        %v2742 = vadd.f32 0.0, %v2741
        %v2743 = vpop.f32.mrb[0].mxu0
        %2744 = vdwg.mxu0
        %2746 = vrot.lane.b32.xlu0 %v2742, 8
        %v2747 = vpop.permute.xlu0 %2746
        %v2749 = vsel %vm614, %v2576, %v2747
        %s2750 = scalar_lea.vmem %s5, 48
        %v2751 = vld [vmem:[%s2750] sm:$0xff]
        %v2752 = vld [vmem:[%s2750 + $0x8] sm:$0xff]
        %v2754 = vsel %vm952, %v2749, 0
        %2756 = vmatprep.subr.mxu0 0.0
        %2757 = vmatpush1.msra.mxu0 %v2751
        %2758 = vmatprep.subr.mxu0 0.0
        %2759 = vmatpush1.msra.mxu0 %v2752
        %2760 = vmatprep.subr.mxu0 0.0
        %2761 = vmatpush1.msra.mxu0 0.0
        %2762 = vmatprep.subr.mxu0 0.0
        %2763 = vmatpush1.msra.mxu0 0.0
        %2764 = vmatprep.subr.mxu0 0.0
        %2765 = vmatpush1.msra.mxu0 0.0
        %2766 = vmatprep.subr.mxu0 0.0
        %2767 = vmatpush1.msra.mxu0 0.0
        %2768 = vmatprep.subr.mxu0 0.0
        %2769 = vmatpush1.msra.mxu0 0.0
        %2770 = vmatprep.subr.mxu0 0.0
        %2771 = vmatpush1.msra.mxu0 0.0
        %2772 = vmatprep.subr.mxu0 0.0
        %2773 = vmatpush1.msra.mxu0 0.0
        %2774 = vmatprep.subr.mxu0 0.0
        %2775 = vmatpush1.msra.mxu0 0.0
        %2776 = vmatprep.subr.mxu0 0.0
        %2777 = vmatpush1.msra.mxu0 0.0
        %2778 = vmatprep.subr.mxu0 0.0
        %2779 = vmatpush1.msra.mxu0 0.0
        %2780 = vmatprep.subr.mxu0 0.0
        %2781 = vmatpush1.msra.mxu0 0.0
        %2782 = vmatprep.subr.mxu0 0.0
        %2783 = vmatpush1.msra.mxu0 0.0
        %2784 = vmatprep.subr.mxu0 0.0
        %2785 = vmatpush1.msra.mxu0 0.0
        %2786 = vmatprep.subr.mxu0 0.0
        %2787 = vmatpush1.msra.mxu0 0.0
        %2788 = vmatprep.subr.mxu0 0.0
        %2789 = vmatpush1.msra.mxu0 0.0
        %2790 = vmatprep.subr.mxu0 0.0
        %2791 = vmatpush1.msra.mxu0 0.0
        %2792 = vmatprep.subr.mxu0 0.0
        %2793 = vmatpush1.msra.mxu0 0.0
        %2794 = vmatprep.subr.mxu0 0.0
        %2795 = vmatpush1.msra.mxu0 0.0
        %2796 = vmatprep.subr.mxu0 0.0
        %2797 = vmatpush1.msra.mxu0 0.0
        %2798 = vmatprep.subr.mxu0 0.0
        %2799 = vmatpush1.msra.mxu0 0.0
        %2800 = vmatprep.subr.mxu0 0.0
        %2801 = vmatpush1.msra.mxu0 0.0
        %2802 = vmatprep.subr.mxu0 0.0
        %2803 = vmatpush1.msra.mxu0 0.0
        %2804 = vmatprep.subr.mxu0 0.0
        %2805 = vmatpush1.msra.mxu0 0.0
        %2806 = vmatprep.subr.mxu0 0.0
        %2807 = vmatpush1.msra.mxu0 0.0
        %2808 = vmatprep.subr.mxu0 0.0
        %2809 = vmatpush1.msra.mxu0 0.0
        %2810 = vmatprep.subr.mxu0 0.0
        %2811 = vmatpush1.msra.mxu0 0.0
        %2812 = vmatprep.subr.mxu0 0.0
        %2813 = vmatpush1.msra.mxu0 0.0
        %2814 = vmatprep.subr.mxu0 0.0
        %2815 = vmatpush1.msra.mxu0 0.0
        %2816 = vmatprep.subr.mxu0 0.0
        %2817 = vmatpush1.msra.mxu0 0.0
        %2818 = vmatprep.subr.mxu0 0.0
        %2819 = vmatpush1.msra.mxu0 0.0
        %2820 = vmatprep.mubr.f32.mxu0 0.0
        %2821 = vmatmul.mubr.f32.gmra.mrb[0].mxu0 %v2754
        %v2822 = vpop.f32.mrb[0].mxu0
        %v2823 = vadd.f32 0.0, %v2822
        %v2824 = vpop.f32.mrb[0].mxu0
        %2825 = vdwg.mxu0
        %v2826 = vadd.f32 %v2297, %v2823
        %v2827 = vsel %vm374, %v2826, 0.0
        %2828 = vadd.xlane.f32.xlu0 %v2827
        %v2829 = vpop.xlane.xlu0 %2828
        %v2830 = vrot.slane %v2829, 4
        %v2831 = vadd.f32 %v2829, %v2830
        %v2832 = vrot.slane %v2831, 2
        %v2833 = vadd.f32 %v2831, %v2832
        %v2834 = vrot.slane %v2833, 1
        %v2835 = vadd.f32 %v2833, %v2834
        %s2836 = vtos %v2835
        %v2837 = vrcp.pop 256.0
        %s2838 = vtos %v2837
        %s2839 = smul.f32 %s2836, %s2838
        %v2840 = vmul.f32 %v2826, %v2826
        %v2841 = vsel %vm374, %v2840, 0.0
        %2842 = vadd.xlane.f32.xlu0 %v2841
        %v2843 = vpop.xlane.xlu0 %2842
        %v2844 = vrot.slane %v2843, 4
        %v2845 = vadd.f32 %v2843, %v2844
        %v2846 = vrot.slane %v2845, 2
        %v2847 = vadd.f32 %v2845, %v2846
        %v2848 = vrot.slane %v2847, 1
        %v2849 = vadd.f32 %v2847, %v2848
        %s2850 = vtos %v2849
        %v2851 = vrcp.pop 256.0
        %s2852 = vtos %v2851
        %s2853 = smul.f32 %s2850, %s2852
        %s2854 = smul.f32 %s2839, %s2839
        %s2855 = ssub.f32 %s2853, %s2854
        %s2856 = smax.f32 %s2855, 0.0
        %v2857 = vstv %s2839
        %v2858 = vsub.f32 %v2826, %v2857
        %s2859 = sadd.f32 %s2856, 1e-05
        %v2860 = vstv %s2859
        %v2861 = vrsqrt.pop %v2860
        %s2862 = vtos %v2861
        %v2863 = vstv %s2862
        %v2864 = vmul.f32 %v2858, %v2863
        %s2865 = scalar_lea.vmem %s6, 32
        %v2866 = vld [vmem:[%s2865] sm:$0xff]
        %v2867 = vld [vmem:[%s2865 + $0x8] sm:$0xff]
        %v2868 = vld [vmem:[%s2865 + $0x10] sm:$0xff]
        %v2869 = vld [vmem:[%s2865 + $0x18] sm:$0xff]
        %s2870 = scalar_lea.vmem %s7, 1
        %v2871 = vld [vmem:[%s2870] sm:$0x1]
        %v2873 = vlaneseq
        %v2874 = vshrl.u32 %v2873, 7
        %v2875 = vsub.s32 0, %v2874
        %v2876 = vrot.slane %v2871, %v2875
        %v2879 = vsel %vm374, %v2864, 0
        %2881 = vmatprep.subr.mxu0 0.0
        %2882 = vmatpush1.msra.mxu0 %v2866
        %2883 = vmatprep.subr.mxu0 0.0
        %2884 = vmatpush1.msra.mxu0 %v2867
        %2885 = vmatprep.subr.mxu0 0.0
        %2886 = vmatpush1.msra.mxu0 %v2868
        %2887 = vmatprep.subr.mxu0 0.0
        %2888 = vmatpush1.msra.mxu0 %v2869
        %2889 = vmatprep.subr.mxu0 0.0
        %2890 = vmatpush1.msra.mxu0 0.0
        %2891 = vmatprep.subr.mxu0 0.0
        %2892 = vmatpush1.msra.mxu0 0.0
        %2893 = vmatprep.subr.mxu0 0.0
        %2894 = vmatpush1.msra.mxu0 0.0
        %2895 = vmatprep.subr.mxu0 0.0
        %2896 = vmatpush1.msra.mxu0 0.0
        %2897 = vmatprep.subr.mxu0 0.0
        %2898 = vmatpush1.msra.mxu0 0.0
        %2899 = vmatprep.subr.mxu0 0.0
        %2900 = vmatpush1.msra.mxu0 0.0
        %2901 = vmatprep.subr.mxu0 0.0
        %2902 = vmatpush1.msra.mxu0 0.0
        %2903 = vmatprep.subr.mxu0 0.0
        %2904 = vmatpush1.msra.mxu0 0.0
        %2905 = vmatprep.subr.mxu0 0.0
        %2906 = vmatpush1.msra.mxu0 0.0
        %2907 = vmatprep.subr.mxu0 0.0
        %2908 = vmatpush1.msra.mxu0 0.0
        %2909 = vmatprep.subr.mxu0 0.0
        %2910 = vmatpush1.msra.mxu0 0.0
        %2911 = vmatprep.subr.mxu0 0.0
        %2912 = vmatpush1.msra.mxu0 0.0
        %2913 = vmatprep.subr.mxu0 0.0
        %2914 = vmatpush1.msra.mxu0 0.0
        %2915 = vmatprep.subr.mxu0 0.0
        %2916 = vmatpush1.msra.mxu0 0.0
        %2917 = vmatprep.subr.mxu0 0.0
        %2918 = vmatpush1.msra.mxu0 0.0
        %2919 = vmatprep.subr.mxu0 0.0
        %2920 = vmatpush1.msra.mxu0 0.0
        %2921 = vmatprep.subr.mxu0 0.0
        %2922 = vmatpush1.msra.mxu0 0.0
        %2923 = vmatprep.subr.mxu0 0.0
        %2924 = vmatpush1.msra.mxu0 0.0
        %2925 = vmatprep.subr.mxu0 0.0
        %2926 = vmatpush1.msra.mxu0 0.0
        %2927 = vmatprep.subr.mxu0 0.0
        %2928 = vmatpush1.msra.mxu0 0.0
        %2929 = vmatprep.subr.mxu0 0.0
        %2930 = vmatpush1.msra.mxu0 0.0
        %2931 = vmatprep.subr.mxu0 0.0
        %2932 = vmatpush1.msra.mxu0 0.0
        %2933 = vmatprep.subr.mxu0 0.0
        %2934 = vmatpush1.msra.mxu0 0.0
        %2935 = vmatprep.subr.mxu0 0.0
        %2936 = vmatpush1.msra.mxu0 0.0
        %2937 = vmatprep.subr.mxu0 0.0
        %2938 = vmatpush1.msra.mxu0 0.0
        %2939 = vmatprep.subr.mxu0 0.0
        %2940 = vmatpush1.msra.mxu0 0.0
        %2941 = vmatprep.subr.mxu0 0.0
        %2942 = vmatpush1.msra.mxu0 0.0
        %2943 = vmatprep.subr.mxu0 0.0
        %2944 = vmatpush1.msra.mxu0 0.0
        %2945 = vmatprep.mubr.f32.mxu0 0.0
        %2946 = vmatmul.mubr.f32.gmra.mrb[0].mxu0 %v2879
        %v2947 = vpop.f32.mrb[0].mxu0
        %v2948 = vadd.f32 %v2876, %v2947
        %v2949 = vpop.f32.mrb[0].mxu0
        %2950 = vdwg.mxu0
        %v2951 = vmax.f32 %v2948, 0.0
        %s2952 = scalar_lea.vmem %s8, 64
        %v2953 = vld [vmem:[%s2952] sm:$0xff]
        %v2954 = vld [vmem:[%s2952 + $0x8] sm:$0xff]
        %v2955 = vld [vmem:[%s2952 + $0x10] sm:$0xff]
        %v2956 = vld [vmem:[%s2952 + $0x18] sm:$0xff]
        %v2957 = vld [vmem:[%s2952 + $0x20] sm:$0xff]
        %v2958 = vld [vmem:[%s2952 + $0x28] sm:$0xff]
        %v2959 = vld [vmem:[%s2952 + $0x30] sm:$0xff]
        %v2960 = vld [vmem:[%s2952 + $0x38] sm:$0xff]
        %s2961 = scalar_lea.vmem %s9, 1
        %v2962 = vld [vmem:[%s2961] sm:$0x1]
        %v2964 = vlaneseq
        %v2965 = vshrl.u32 %v2964, 7
        %v2966 = vsub.s32 0, %v2965
        %v2967 = vrot.slane %v2962, %v2966
        %v2970 = vsel %vm1692, %v2951, 0
        %2972 = vmatprep.subr.mxu0 0.0
        %2973 = vmatpush1.msra.mxu0 %v2953
        %2974 = vmatprep.subr.mxu0 0.0
        %2975 = vmatpush1.msra.mxu0 %v2954
        %2976 = vmatprep.subr.mxu0 0.0
        %2977 = vmatpush1.msra.mxu0 %v2955
        %2978 = vmatprep.subr.mxu0 0.0
        %2979 = vmatpush1.msra.mxu0 %v2956
        %2980 = vmatprep.subr.mxu0 0.0
        %2981 = vmatpush1.msra.mxu0 %v2957
        %2982 = vmatprep.subr.mxu0 0.0
        %2983 = vmatpush1.msra.mxu0 %v2958
        %2984 = vmatprep.subr.mxu0 0.0
        %2985 = vmatpush1.msra.mxu0 %v2959
        %2986 = vmatprep.subr.mxu0 0.0
        %2987 = vmatpush1.msra.mxu0 %v2960
        %2988 = vmatprep.subr.mxu0 0.0
        %2989 = vmatpush1.msra.mxu0 0.0
        %2990 = vmatprep.subr.mxu0 0.0
        %2991 = vmatpush1.msra.mxu0 0.0
        %2992 = vmatprep.subr.mxu0 0.0
        %2993 = vmatpush1.msra.mxu0 0.0
        %2994 = vmatprep.subr.mxu0 0.0
        %2995 = vmatpush1.msra.mxu0 0.0
        %2996 = vmatprep.subr.mxu0 0.0
        %2997 = vmatpush1.msra.mxu0 0.0
        %2998 = vmatprep.subr.mxu0 0.0
        %2999 = vmatpush1.msra.mxu0 0.0
        %3000 = vmatprep.subr.mxu0 0.0
        %3001 = vmatpush1.msra.mxu0 0.0
        %3002 = vmatprep.subr.mxu0 0.0
        %3003 = vmatpush1.msra.mxu0 0.0
        %3004 = vmatprep.subr.mxu0 0.0
        %3005 = vmatpush1.msra.mxu0 0.0
        %3006 = vmatprep.subr.mxu0 0.0
        %3007 = vmatpush1.msra.mxu0 0.0
        %3008 = vmatprep.subr.mxu0 0.0
        %3009 = vmatpush1.msra.mxu0 0.0
        %3010 = vmatprep.subr.mxu0 0.0
        %3011 = vmatpush1.msra.mxu0 0.0
        %3012 = vmatprep.subr.mxu0 0.0
        %3013 = vmatpush1.msra.mxu0 0.0
        %3014 = vmatprep.subr.mxu0 0.0
        %3015 = vmatpush1.msra.mxu0 0.0
        %3016 = vmatprep.subr.mxu0 0.0
        %3017 = vmatpush1.msra.mxu0 0.0
        %3018 = vmatprep.subr.mxu0 0.0
        %3019 = vmatpush1.msra.mxu0 0.0
        %3020 = vmatprep.subr.mxu0 0.0
        %3021 = vmatpush1.msra.mxu0 0.0
        %3022 = vmatprep.subr.mxu0 0.0
        %3023 = vmatpush1.msra.mxu0 0.0
        %3024 = vmatprep.subr.mxu0 0.0
        %3025 = vmatpush1.msra.mxu0 0.0
        %3026 = vmatprep.subr.mxu0 0.0
        %3027 = vmatpush1.msra.mxu0 0.0
        %3028 = vmatprep.subr.mxu0 0.0
        %3029 = vmatpush1.msra.mxu0 0.0
        %3030 = vmatprep.subr.mxu0 0.0
        %3031 = vmatpush1.msra.mxu0 0.0
        %3032 = vmatprep.subr.mxu0 0.0
        %3033 = vmatpush1.msra.mxu0 0.0
        %3034 = vmatprep.subr.mxu0 0.0
        %3035 = vmatpush1.msra.mxu0 0.0
        %3036 = vmatprep.mubr.f32.mxu0 0.0
        %3037 = vmatmul.mubr.f32.gmra.mrb[0].mxu0 %v2970
        %v3038 = vpop.f32.mrb[0].mxu0
        %v3039 = vadd.f32 %v2967, %v3038
        %v3040 = vpop.f32.mrb[0].mxu0
        %3041 = vdwg.mxu0
        %v3042 = vadd.f32 %v2826, %v3039
        %v3043 = vsel %vm374, %v3042, 0.0
        %3044 = vadd.xlane.f32.xlu0 %v3043
        %v3045 = vpop.xlane.xlu0 %3044
        %v3046 = vrot.slane %v3045, 4
        %v3047 = vadd.f32 %v3045, %v3046
        %v3048 = vrot.slane %v3047, 2
        %v3049 = vadd.f32 %v3047, %v3048
        %v3050 = vrot.slane %v3049, 1
        %v3051 = vadd.f32 %v3049, %v3050
        %s3052 = vtos %v3051
        %v3053 = vrcp.pop 256.0
        %s3054 = vtos %v3053
        %s3055 = smul.f32 %s3052, %s3054
        %v3056 = vmul.f32 %v3042, %v3042
        %v3057 = vsel %vm374, %v3056, 0.0
        %3058 = vadd.xlane.f32.xlu0 %v3057
        %v3059 = vpop.xlane.xlu0 %3058
        %v3060 = vrot.slane %v3059, 4
        %v3061 = vadd.f32 %v3059, %v3060
        %v3062 = vrot.slane %v3061, 2
        %v3063 = vadd.f32 %v3061, %v3062
        %v3064 = vrot.slane %v3063, 1
        %v3065 = vadd.f32 %v3063, %v3064
        %s3066 = vtos %v3065
        %v3067 = vrcp.pop 256.0
        %s3068 = vtos %v3067
        %s3069 = smul.f32 %s3066, %s3068
        %s3070 = smul.f32 %s3055, %s3055
        %s3071 = ssub.f32 %s3069, %s3070
        %s3072 = smax.f32 %s3071, 0.0
        %v3073 = vstv %s3055
        %v3074 = vsub.f32 %v3042, %v3073
        %s3075 = sadd.f32 %s3072, 1e-05
        %v3076 = vstv %s3075
        %v3077 = vrsqrt.pop %v3076
        %s3078 = vtos %v3077
        %v3079 = vstv %s3078
        %v3080 = vmul.f32 %v3074, %v3079
        %s3081 = scalar_lea.vmem %s2, 64
        %v3082 = vld [vmem:[%s3081] sm:$0xff]
        %v3083 = vld [vmem:[%s3081 + $0x8] sm:$0xff]
        %v3084 = vld [vmem:[%s3081 + $0x10] sm:$0xff]
        %v3085 = vld [vmem:[%s3081 + $0x18] sm:$0xff]
        %v3087 = vsel %vm374, %v3080, 0
        %3089 = vmatprep.subr.mxu0 0.0
        %3090 = vmatpush1.msra.mxu0 %v3082
        %3091 = vmatprep.subr.mxu0 0.0
        %3092 = vmatpush1.msra.mxu0 %v3083
        %3093 = vmatprep.subr.mxu0 0.0
        %3094 = vmatpush1.msra.mxu0 %v3084
        %3095 = vmatprep.subr.mxu0 0.0
        %3096 = vmatpush1.msra.mxu0 %v3085
        %3097 = vmatprep.subr.mxu0 0.0
        %3098 = vmatpush1.msra.mxu0 0.0
        %3099 = vmatprep.subr.mxu0 0.0
        %3100 = vmatpush1.msra.mxu0 0.0
        %3101 = vmatprep.subr.mxu0 0.0
        %3102 = vmatpush1.msra.mxu0 0.0
        %3103 = vmatprep.subr.mxu0 0.0
        %3104 = vmatpush1.msra.mxu0 0.0
        %3105 = vmatprep.subr.mxu0 0.0
        %3106 = vmatpush1.msra.mxu0 0.0
        %3107 = vmatprep.subr.mxu0 0.0
        %3108 = vmatpush1.msra.mxu0 0.0
        %3109 = vmatprep.subr.mxu0 0.0
        %3110 = vmatpush1.msra.mxu0 0.0
        %3111 = vmatprep.subr.mxu0 0.0
        %3112 = vmatpush1.msra.mxu0 0.0
        %3113 = vmatprep.subr.mxu0 0.0
        %3114 = vmatpush1.msra.mxu0 0.0
        %3115 = vmatprep.subr.mxu0 0.0
        %3116 = vmatpush1.msra.mxu0 0.0
        %3117 = vmatprep.subr.mxu0 0.0
        %3118 = vmatpush1.msra.mxu0 0.0
        %3119 = vmatprep.subr.mxu0 0.0
        %3120 = vmatpush1.msra.mxu0 0.0
        %3121 = vmatprep.subr.mxu0 0.0
        %3122 = vmatpush1.msra.mxu0 0.0
        %3123 = vmatprep.subr.mxu0 0.0
        %3124 = vmatpush1.msra.mxu0 0.0
        %3125 = vmatprep.subr.mxu0 0.0
        %3126 = vmatpush1.msra.mxu0 0.0
        %3127 = vmatprep.subr.mxu0 0.0
        %3128 = vmatpush1.msra.mxu0 0.0
        %3129 = vmatprep.subr.mxu0 0.0
        %3130 = vmatpush1.msra.mxu0 0.0
        %3131 = vmatprep.subr.mxu0 0.0
        %3132 = vmatpush1.msra.mxu0 0.0
        %3133 = vmatprep.subr.mxu0 0.0
        %3134 = vmatpush1.msra.mxu0 0.0
        %3135 = vmatprep.subr.mxu0 0.0
        %3136 = vmatpush1.msra.mxu0 0.0
        %3137 = vmatprep.subr.mxu0 0.0
        %3138 = vmatpush1.msra.mxu0 0.0
        %3139 = vmatprep.subr.mxu0 0.0
        %3140 = vmatpush1.msra.mxu0 0.0
        %3141 = vmatprep.subr.mxu0 0.0
        %3142 = vmatpush1.msra.mxu0 0.0
        %3143 = vmatprep.subr.mxu0 0.0
        %3144 = vmatpush1.msra.mxu0 0.0
        %3145 = vmatprep.subr.mxu0 0.0
        %3146 = vmatpush1.msra.mxu0 0.0
        %3147 = vmatprep.subr.mxu0 0.0
        %3148 = vmatpush1.msra.mxu0 0.0
        %3149 = vmatprep.subr.mxu0 0.0
        %3150 = vmatpush1.msra.mxu0 0.0
        %3151 = vmatprep.subr.mxu0 0.0
        %3152 = vmatpush1.msra.mxu0 0.0
        %3153 = vmatprep.mubr.f32.mxu0 0.0
        %3154 = vmatmul.mubr.f32.gmra.mrb[0].mxu0 %v3087
        %v3155 = vpop.f32.mrb[0].mxu0
        %v3156 = vadd.f32 0.0, %v3155
        %v3157 = vpop.f32.mrb[0].mxu0
        %3158 = vdwg.mxu0
        %3160 = vrot.lane.b32.xlu0 %v3156, 112
        %v3161 = vpop.permute.xlu0 %3160
        %v3162 = vsel %vm614, %v3156, 0
        %v3164 = vsel %vm614, %v3161, 0
        %3166 = vmatprep.subr.mxu0 0.0
        %3167 = vmatpush1.xpose.msra.mxu0 %v3164
        %3168 = vmatprep.subr.mxu0 0.0
        %3169 = vmatpush1.xpose.msra.mxu0 0.0
        %3170 = vmatprep.subr.mxu0 0.0
        %3171 = vmatpush1.xpose.msra.mxu0 0.0
        %3172 = vmatprep.subr.mxu0 0.0
        %3173 = vmatpush1.xpose.msra.mxu0 0.0
        %3174 = vmatprep.subr.mxu0 0.0
        %3175 = vmatpush1.xpose.msra.mxu0 0.0
        %3176 = vmatprep.subr.mxu0 0.0
        %3177 = vmatpush1.xpose.msra.mxu0 0.0
        %3178 = vmatprep.subr.mxu0 0.0
        %3179 = vmatpush1.xpose.msra.mxu0 0.0
        %3180 = vmatprep.subr.mxu0 0.0
        %3181 = vmatpush1.xpose.msra.mxu0 0.0
        %3182 = vmatprep.subr.mxu0 0.0
        %3183 = vmatpush1.xpose.msra.mxu0 0.0
        %3184 = vmatprep.subr.mxu0 0.0
        %3185 = vmatpush1.xpose.msra.mxu0 0.0
        %3186 = vmatprep.subr.mxu0 0.0
        %3187 = vmatpush1.xpose.msra.mxu0 0.0
        %3188 = vmatprep.subr.mxu0 0.0
        %3189 = vmatpush1.xpose.msra.mxu0 0.0
        %3190 = vmatprep.subr.mxu0 0.0
        %3191 = vmatpush1.xpose.msra.mxu0 0.0
        %3192 = vmatprep.subr.mxu0 0.0
        %3193 = vmatpush1.xpose.msra.mxu0 0.0
        %3194 = vmatprep.subr.mxu0 0.0
        %3195 = vmatpush1.xpose.msra.mxu0 0.0
        %3196 = vmatprep.subr.mxu0 0.0
        %3197 = vmatpush1.xpose.msra.mxu0 0.0
        %3198 = vmatprep.subr.mxu0 0.0
        %3199 = vmatpush1.xpose.msra.mxu0 0.0
        %3200 = vmatprep.subr.mxu0 0.0
        %3201 = vmatpush1.xpose.msra.mxu0 0.0
        %3202 = vmatprep.subr.mxu0 0.0
        %3203 = vmatpush1.xpose.msra.mxu0 0.0
        %3204 = vmatprep.subr.mxu0 0.0
        %3205 = vmatpush1.xpose.msra.mxu0 0.0
        %3206 = vmatprep.subr.mxu0 0.0
        %3207 = vmatpush1.xpose.msra.mxu0 0.0
        %3208 = vmatprep.subr.mxu0 0.0
        %3209 = vmatpush1.xpose.msra.mxu0 0.0
        %3210 = vmatprep.subr.mxu0 0.0
        %3211 = vmatpush1.xpose.msra.mxu0 0.0
        %3212 = vmatprep.subr.mxu0 0.0
        %3213 = vmatpush1.xpose.msra.mxu0 0.0
        %3214 = vmatprep.subr.mxu0 0.0
        %3215 = vmatpush1.xpose.msra.mxu0 0.0
        %3216 = vmatprep.subr.mxu0 0.0
        %3217 = vmatpush1.xpose.msra.mxu0 0.0
        %3218 = vmatprep.subr.mxu0 0.0
        %3219 = vmatpush1.xpose.msra.mxu0 0.0
        %3220 = vmatprep.subr.mxu0 0.0
        %3221 = vmatpush1.xpose.msra.mxu0 0.0
        %3222 = vmatprep.subr.mxu0 0.0
        %3223 = vmatpush1.xpose.msra.mxu0 0.0
        %3224 = vmatprep.subr.mxu0 0.0
        %3225 = vmatpush1.xpose.msra.mxu0 0.0
        %3226 = vmatprep.subr.mxu0 0.0
        %3227 = vmatpush1.xpose.msra.mxu0 0.0
        %3228 = vmatprep.subr.mxu0 0.0
        %3229 = vmatpush1.xpose.msra.mxu0 0.0
        %3230 = vmatprep.mubr.f32.mxu0 0.0
        %3231 = vmatmul.mubr.f32.gmra.mrb[0].mxu0 %v3162
        %v3232 = vpop.f32.mrb[0].mxu0
        %v3233 = vadd.f32 0.0, %v3232
        %v3234 = vpop.f32.mrb[0].mxu0
        %3235 = vdwg.mxu0
        %v3236 = vmul.f32 %v3233, 0.35355338
        %v3237 = vadd.f32 %v3236, %v495
        %v3238 = vsel %vm614, %v3237, -inf
        %3239 = vmax.xlane.f32.xlu0 %v3238
        %v3240 = vpop.xlane.xlu0 %3239
        %v3241 = vsub.f32 %v3237, %v3240
        %v3242 = vmul.f32 %v3241, 1.442695
        %v3243 = vpow.pop %v3242
        %v3244 = vsel %vm614, %v3243, 0.0
        %3245 = vadd.xlane.f32.xlu0 %v3244
        %v3246 = vpop.xlane.xlu0 %3245
        %v3247 = vrcp.pop %v3246
        %v3248 = vmul.f32 %v3243, %v3247
        %3249 = vrot.lane.b32.xlu0 %v3156, 96
        %v3250 = vpop.permute.xlu0 %3249
        %v3253 = vsel %vm614, %v3248, 0
        %3255 = vmatprep.subr.mxu0 0.0
        %3256 = vmatpush1.msra.mxu0 %v3250
        %3257 = vmatprep.subr.mxu0 0.0
        %3258 = vmatpush1.msra.mxu0 0.0
        %3259 = vmatprep.subr.mxu0 0.0
        %3260 = vmatpush1.msra.mxu0 0.0
        %3261 = vmatprep.subr.mxu0 0.0
        %3262 = vmatpush1.msra.mxu0 0.0
        %3263 = vmatprep.subr.mxu0 0.0
        %3264 = vmatpush1.msra.mxu0 0.0
        %3265 = vmatprep.subr.mxu0 0.0
        %3266 = vmatpush1.msra.mxu0 0.0
        %3267 = vmatprep.subr.mxu0 0.0
        %3268 = vmatpush1.msra.mxu0 0.0
        %3269 = vmatprep.subr.mxu0 0.0
        %3270 = vmatpush1.msra.mxu0 0.0
        %3271 = vmatprep.subr.mxu0 0.0
        %3272 = vmatpush1.msra.mxu0 0.0
        %3273 = vmatprep.subr.mxu0 0.0
        %3274 = vmatpush1.msra.mxu0 0.0
        %3275 = vmatprep.subr.mxu0 0.0
        %3276 = vmatpush1.msra.mxu0 0.0
        %3277 = vmatprep.subr.mxu0 0.0
        %3278 = vmatpush1.msra.mxu0 0.0
        %3279 = vmatprep.subr.mxu0 0.0
        %3280 = vmatpush1.msra.mxu0 0.0
        %3281 = vmatprep.subr.mxu0 0.0
        %3282 = vmatpush1.msra.mxu0 0.0
        %3283 = vmatprep.subr.mxu0 0.0
        %3284 = vmatpush1.msra.mxu0 0.0
        %3285 = vmatprep.subr.mxu0 0.0
        %3286 = vmatpush1.msra.mxu0 0.0
        %3287 = vmatprep.subr.mxu0 0.0
        %3288 = vmatpush1.msra.mxu0 0.0
        %3289 = vmatprep.subr.mxu0 0.0
        %3290 = vmatpush1.msra.mxu0 0.0
        %3291 = vmatprep.subr.mxu0 0.0
        %3292 = vmatpush1.msra.mxu0 0.0
        %3293 = vmatprep.subr.mxu0 0.0
        %3294 = vmatpush1.msra.mxu0 0.0
        %3295 = vmatprep.subr.mxu0 0.0
        %3296 = vmatpush1.msra.mxu0 0.0
        %3297 = vmatprep.subr.mxu0 0.0
        %3298 = vmatpush1.msra.mxu0 0.0
        %3299 = vmatprep.subr.mxu0 0.0
        %3300 = vmatpush1.msra.mxu0 0.0
        %3301 = vmatprep.subr.mxu0 0.0
        %3302 = vmatpush1.msra.mxu0 0.0
        %3303 = vmatprep.subr.mxu0 0.0
        %3304 = vmatpush1.msra.mxu0 0.0
        %3305 = vmatprep.subr.mxu0 0.0
        %3306 = vmatpush1.msra.mxu0 0.0
        %3307 = vmatprep.subr.mxu0 0.0
        %3308 = vmatpush1.msra.mxu0 0.0
        %3309 = vmatprep.subr.mxu0 0.0
        %3310 = vmatpush1.msra.mxu0 0.0
        %3311 = vmatprep.subr.mxu0 0.0
        %3312 = vmatpush1.msra.mxu0 0.0
        %3313 = vmatprep.subr.mxu0 0.0
        %3314 = vmatpush1.msra.mxu0 0.0
        %3315 = vmatprep.subr.mxu0 0.0
        %3316 = vmatpush1.msra.mxu0 0.0
        %3317 = vmatprep.subr.mxu0 0.0
        %3318 = vmatpush1.msra.mxu0 0.0
        %3319 = vmatprep.mubr.f32.mxu0 0.0
        %3320 = vmatmul.mubr.f32.gmra.mrb[0].mxu0 %v3253
        %v3321 = vpop.f32.mrb[0].mxu0
        %v3322 = vadd.f32 0.0, %v3321
        %v3323 = vpop.f32.mrb[0].mxu0
        %3324 = vdwg.mxu0
        %3325 = vrot.lane.b32.xlu0 %v3156, 120
        %v3326 = vpop.permute.xlu0 %3325
        %3327 = vrot.lane.b32.xlu0 %v3156, 104
        %v3328 = vpop.permute.xlu0 %3327
        %v3329 = vsel %vm614, %v3326, 0
        %v3331 = vsel %vm614, %v3328, 0
        %3333 = vmatprep.subr.mxu0 0.0
        %3334 = vmatpush1.xpose.msra.mxu0 %v3331
        %3335 = vmatprep.subr.mxu0 0.0
        %3336 = vmatpush1.xpose.msra.mxu0 0.0
        %3337 = vmatprep.subr.mxu0 0.0
        %3338 = vmatpush1.xpose.msra.mxu0 0.0
        %3339 = vmatprep.subr.mxu0 0.0
        %3340 = vmatpush1.xpose.msra.mxu0 0.0
        %3341 = vmatprep.subr.mxu0 0.0
        %3342 = vmatpush1.xpose.msra.mxu0 0.0
        %3343 = vmatprep.subr.mxu0 0.0
        %3344 = vmatpush1.xpose.msra.mxu0 0.0
        %3345 = vmatprep.subr.mxu0 0.0
        %3346 = vmatpush1.xpose.msra.mxu0 0.0
        %3347 = vmatprep.subr.mxu0 0.0
        %3348 = vmatpush1.xpose.msra.mxu0 0.0
        %3349 = vmatprep.subr.mxu0 0.0
        %3350 = vmatpush1.xpose.msra.mxu0 0.0
        %3351 = vmatprep.subr.mxu0 0.0
        %3352 = vmatpush1.xpose.msra.mxu0 0.0
        %3353 = vmatprep.subr.mxu0 0.0
        %3354 = vmatpush1.xpose.msra.mxu0 0.0
        %3355 = vmatprep.subr.mxu0 0.0
        %3356 = vmatpush1.xpose.msra.mxu0 0.0
        %3357 = vmatprep.subr.mxu0 0.0
        %3358 = vmatpush1.xpose.msra.mxu0 0.0
        %3359 = vmatprep.subr.mxu0 0.0
        %3360 = vmatpush1.xpose.msra.mxu0 0.0
        %3361 = vmatprep.subr.mxu0 0.0
        %3362 = vmatpush1.xpose.msra.mxu0 0.0
        %3363 = vmatprep.subr.mxu0 0.0
        %3364 = vmatpush1.xpose.msra.mxu0 0.0
        %3365 = vmatprep.subr.mxu0 0.0
        %3366 = vmatpush1.xpose.msra.mxu0 0.0
        %3367 = vmatprep.subr.mxu0 0.0
        %3368 = vmatpush1.xpose.msra.mxu0 0.0
        %3369 = vmatprep.subr.mxu0 0.0
        %3370 = vmatpush1.xpose.msra.mxu0 0.0
        %3371 = vmatprep.subr.mxu0 0.0
        %3372 = vmatpush1.xpose.msra.mxu0 0.0
        %3373 = vmatprep.subr.mxu0 0.0
        %3374 = vmatpush1.xpose.msra.mxu0 0.0
        %3375 = vmatprep.subr.mxu0 0.0
        %3376 = vmatpush1.xpose.msra.mxu0 0.0
        %3377 = vmatprep.subr.mxu0 0.0
        %3378 = vmatpush1.xpose.msra.mxu0 0.0
        %3379 = vmatprep.subr.mxu0 0.0
        %3380 = vmatpush1.xpose.msra.mxu0 0.0
        %3381 = vmatprep.subr.mxu0 0.0
        %3382 = vmatpush1.xpose.msra.mxu0 0.0
        %3383 = vmatprep.subr.mxu0 0.0
        %3384 = vmatpush1.xpose.msra.mxu0 0.0
        %3385 = vmatprep.subr.mxu0 0.0
        %3386 = vmatpush1.xpose.msra.mxu0 0.0
        %3387 = vmatprep.subr.mxu0 0.0
        %3388 = vmatpush1.xpose.msra.mxu0 0.0
        %3389 = vmatprep.subr.mxu0 0.0
        %3390 = vmatpush1.xpose.msra.mxu0 0.0
        %3391 = vmatprep.subr.mxu0 0.0
        %3392 = vmatpush1.xpose.msra.mxu0 0.0
        %3393 = vmatprep.subr.mxu0 0.0
        %3394 = vmatpush1.xpose.msra.mxu0 0.0
        %3395 = vmatprep.subr.mxu0 0.0
        %3396 = vmatpush1.xpose.msra.mxu0 0.0
        %3397 = vmatprep.mubr.f32.mxu0 0.0
        %3398 = vmatmul.mubr.f32.gmra.mrb[0].mxu0 %v3329
        %v3399 = vpop.f32.mrb[0].mxu0
        %v3400 = vadd.f32 0.0, %v3399
        %v3401 = vpop.f32.mrb[0].mxu0
        %3402 = vdwg.mxu0
        %v3403 = vmul.f32 %v3400, 0.35355338
        %v3404 = vadd.f32 %v3403, %v495
        %v3405 = vsel %vm614, %v3404, -inf
        %3406 = vmax.xlane.f32.xlu0 %v3405
        %v3407 = vpop.xlane.xlu0 %3406
        %v3408 = vsub.f32 %v3404, %v3407
        %v3409 = vmul.f32 %v3408, 1.442695
        %v3410 = vpow.pop %v3409
        %v3411 = vsel %vm614, %v3410, 0.0
        %3412 = vadd.xlane.f32.xlu0 %v3411
        %v3413 = vpop.xlane.xlu0 %3412
        %v3414 = vrcp.pop %v3413
        %v3415 = vmul.f32 %v3410, %v3414
        %3416 = vrot.lane.b32.xlu0 %v3156, 88
        %v3417 = vpop.permute.xlu0 %3416
        %v3420 = vsel %vm614, %v3415, 0
        %3422 = vmatprep.subr.mxu0 0.0
        %3423 = vmatpush1.msra.mxu0 %v3417
        %3424 = vmatprep.subr.mxu0 0.0
        %3425 = vmatpush1.msra.mxu0 0.0
        %3426 = vmatprep.subr.mxu0 0.0
        %3427 = vmatpush1.msra.mxu0 0.0
        %3428 = vmatprep.subr.mxu0 0.0
        %3429 = vmatpush1.msra.mxu0 0.0
        %3430 = vmatprep.subr.mxu0 0.0
        %3431 = vmatpush1.msra.mxu0 0.0
        %3432 = vmatprep.subr.mxu0 0.0
        %3433 = vmatpush1.msra.mxu0 0.0
        %3434 = vmatprep.subr.mxu0 0.0
        %3435 = vmatpush1.msra.mxu0 0.0
        %3436 = vmatprep.subr.mxu0 0.0
        %3437 = vmatpush1.msra.mxu0 0.0
        %3438 = vmatprep.subr.mxu0 0.0
        %3439 = vmatpush1.msra.mxu0 0.0
        %3440 = vmatprep.subr.mxu0 0.0
        %3441 = vmatpush1.msra.mxu0 0.0
        %3442 = vmatprep.subr.mxu0 0.0
        %3443 = vmatpush1.msra.mxu0 0.0
        %3444 = vmatprep.subr.mxu0 0.0
        %3445 = vmatpush1.msra.mxu0 0.0
        %3446 = vmatprep.subr.mxu0 0.0
        %3447 = vmatpush1.msra.mxu0 0.0
        %3448 = vmatprep.subr.mxu0 0.0
        %3449 = vmatpush1.msra.mxu0 0.0
        %3450 = vmatprep.subr.mxu0 0.0
        %3451 = vmatpush1.msra.mxu0 0.0
        %3452 = vmatprep.subr.mxu0 0.0
        %3453 = vmatpush1.msra.mxu0 0.0
        %3454 = vmatprep.subr.mxu0 0.0
        %3455 = vmatpush1.msra.mxu0 0.0
        %3456 = vmatprep.subr.mxu0 0.0
        %3457 = vmatpush1.msra.mxu0 0.0
        %3458 = vmatprep.subr.mxu0 0.0
        %3459 = vmatpush1.msra.mxu0 0.0
        %3460 = vmatprep.subr.mxu0 0.0
        %3461 = vmatpush1.msra.mxu0 0.0
        %3462 = vmatprep.subr.mxu0 0.0
        %3463 = vmatpush1.msra.mxu0 0.0
        %3464 = vmatprep.subr.mxu0 0.0
        %3465 = vmatpush1.msra.mxu0 0.0
        %3466 = vmatprep.subr.mxu0 0.0
        %3467 = vmatpush1.msra.mxu0 0.0
        %3468 = vmatprep.subr.mxu0 0.0
        %3469 = vmatpush1.msra.mxu0 0.0
        %3470 = vmatprep.subr.mxu0 0.0
        %3471 = vmatpush1.msra.mxu0 0.0
        %3472 = vmatprep.subr.mxu0 0.0
        %3473 = vmatpush1.msra.mxu0 0.0
        %3474 = vmatprep.subr.mxu0 0.0
        %3475 = vmatpush1.msra.mxu0 0.0
        %3476 = vmatprep.subr.mxu0 0.0
        %3477 = vmatpush1.msra.mxu0 0.0
        %3478 = vmatprep.subr.mxu0 0.0
        %3479 = vmatpush1.msra.mxu0 0.0
        %3480 = vmatprep.subr.mxu0 0.0
        %3481 = vmatpush1.msra.mxu0 0.0
        %3482 = vmatprep.subr.mxu0 0.0
        %3483 = vmatpush1.msra.mxu0 0.0
        %3484 = vmatprep.subr.mxu0 0.0
        %3485 = vmatpush1.msra.mxu0 0.0
        %3486 = vmatprep.mubr.f32.mxu0 0.0
        %3487 = vmatmul.mubr.f32.gmra.mrb[0].mxu0 %v3420
        %v3488 = vpop.f32.mrb[0].mxu0
        %v3489 = vadd.f32 0.0, %v3488
        %v3490 = vpop.f32.mrb[0].mxu0
        %3491 = vdwg.mxu0
        %3493 = vrot.lane.b32.xlu0 %v3489, 8
        %v3494 = vpop.permute.xlu0 %3493
        %v3496 = vsel %vm614, %v3322, %v3494
        %s3497 = scalar_lea.vmem %s5, 64
        %v3498 = vld [vmem:[%s3497] sm:$0xff]
        %v3499 = vld [vmem:[%s3497 + $0x8] sm:$0xff]
        %v3501 = vsel %vm952, %v3496, 0
        %3503 = vmatprep.subr.mxu0 0.0
        %3504 = vmatpush1.msra.mxu0 %v3498
        %3505 = vmatprep.subr.mxu0 0.0
        %3506 = vmatpush1.msra.mxu0 %v3499
        %3507 = vmatprep.subr.mxu0 0.0
        %3508 = vmatpush1.msra.mxu0 0.0
        %3509 = vmatprep.subr.mxu0 0.0
        %3510 = vmatpush1.msra.mxu0 0.0
        %3511 = vmatprep.subr.mxu0 0.0
        %3512 = vmatpush1.msra.mxu0 0.0
        %3513 = vmatprep.subr.mxu0 0.0
        %3514 = vmatpush1.msra.mxu0 0.0
        %3515 = vmatprep.subr.mxu0 0.0
        %3516 = vmatpush1.msra.mxu0 0.0
        %3517 = vmatprep.subr.mxu0 0.0
        %3518 = vmatpush1.msra.mxu0 0.0
        %3519 = vmatprep.subr.mxu0 0.0
        %3520 = vmatpush1.msra.mxu0 0.0
        %3521 = vmatprep.subr.mxu0 0.0
        %3522 = vmatpush1.msra.mxu0 0.0
        %3523 = vmatprep.subr.mxu0 0.0
        %3524 = vmatpush1.msra.mxu0 0.0
        %3525 = vmatprep.subr.mxu0 0.0
        %3526 = vmatpush1.msra.mxu0 0.0
        %3527 = vmatprep.subr.mxu0 0.0
        %3528 = vmatpush1.msra.mxu0 0.0
        %3529 = vmatprep.subr.mxu0 0.0
        %3530 = vmatpush1.msra.mxu0 0.0
        %3531 = vmatprep.subr.mxu0 0.0
        %3532 = vmatpush1.msra.mxu0 0.0
        %3533 = vmatprep.subr.mxu0 0.0
        %3534 = vmatpush1.msra.mxu0 0.0
        %3535 = vmatprep.subr.mxu0 0.0
        %3536 = vmatpush1.msra.mxu0 0.0
        %3537 = vmatprep.subr.mxu0 0.0
        %3538 = vmatpush1.msra.mxu0 0.0
        %3539 = vmatprep.subr.mxu0 0.0
        %3540 = vmatpush1.msra.mxu0 0.0
        %3541 = vmatprep.subr.mxu0 0.0
        %3542 = vmatpush1.msra.mxu0 0.0
        %3543 = vmatprep.subr.mxu0 0.0
        %3544 = vmatpush1.msra.mxu0 0.0
        %3545 = vmatprep.subr.mxu0 0.0
        %3546 = vmatpush1.msra.mxu0 0.0
        %3547 = vmatprep.subr.mxu0 0.0
        %3548 = vmatpush1.msra.mxu0 0.0
        %3549 = vmatprep.subr.mxu0 0.0
        %3550 = vmatpush1.msra.mxu0 0.0
        %3551 = vmatprep.subr.mxu0 0.0
        %3552 = vmatpush1.msra.mxu0 0.0
        %3553 = vmatprep.subr.mxu0 0.0
        %3554 = vmatpush1.msra.mxu0 0.0
        %3555 = vmatprep.subr.mxu0 0.0
        %3556 = vmatpush1.msra.mxu0 0.0
        %3557 = vmatprep.subr.mxu0 0.0
        %3558 = vmatpush1.msra.mxu0 0.0
        %3559 = vmatprep.subr.mxu0 0.0
        %3560 = vmatpush1.msra.mxu0 0.0
        %3561 = vmatprep.subr.mxu0 0.0
        %3562 = vmatpush1.msra.mxu0 0.0
        %3563 = vmatprep.subr.mxu0 0.0
        %3564 = vmatpush1.msra.mxu0 0.0
        %3565 = vmatprep.subr.mxu0 0.0
        %3566 = vmatpush1.msra.mxu0 0.0
        %3567 = vmatprep.mubr.f32.mxu0 0.0
        %3568 = vmatmul.mubr.f32.gmra.mrb[0].mxu0 %v3501
        %v3569 = vpop.f32.mrb[0].mxu0
        %v3570 = vadd.f32 0.0, %v3569
        %v3571 = vpop.f32.mrb[0].mxu0
        %3572 = vdwg.mxu0
        %v3573 = vadd.f32 %v3042, %v3570
        %v3574 = vsel %vm374, %v3573, 0.0
        %3575 = vadd.xlane.f32.xlu0 %v3574
        %v3576 = vpop.xlane.xlu0 %3575
        %v3577 = vrot.slane %v3576, 4
        %v3578 = vadd.f32 %v3576, %v3577
        %v3579 = vrot.slane %v3578, 2
        %v3580 = vadd.f32 %v3578, %v3579
        %v3581 = vrot.slane %v3580, 1
        %v3582 = vadd.f32 %v3580, %v3581
        %s3583 = vtos %v3582
        %v3584 = vrcp.pop 256.0
        %s3585 = vtos %v3584
        %s3586 = smul.f32 %s3583, %s3585
        %v3587 = vmul.f32 %v3573, %v3573
        %v3588 = vsel %vm374, %v3587, 0.0
        %3589 = vadd.xlane.f32.xlu0 %v3588
        %v3590 = vpop.xlane.xlu0 %3589
        %v3591 = vrot.slane %v3590, 4
        %v3592 = vadd.f32 %v3590, %v3591
        %v3593 = vrot.slane %v3592, 2
        %v3594 = vadd.f32 %v3592, %v3593
        %v3595 = vrot.slane %v3594, 1
        %v3596 = vadd.f32 %v3594, %v3595
        %s3597 = vtos %v3596
        %v3598 = vrcp.pop 256.0
        %s3599 = vtos %v3598
        %s3600 = smul.f32 %s3597, %s3599
        %s3601 = smul.f32 %s3586, %s3586
        %s3602 = ssub.f32 %s3600, %s3601
        %s3603 = smax.f32 %s3602, 0.0
        %v3604 = vstv %s3586
        %v3605 = vsub.f32 %v3573, %v3604
        %s3606 = sadd.f32 %s3603, 1e-05
        %v3607 = vstv %s3606
        %v3608 = vrsqrt.pop %v3607
        %s3609 = vtos %v3608
        %v3610 = vstv %s3609
        %v3611 = vmul.f32 %v3605, %v3610
        %s3612 = scalar_lea.vmem %s3, 64
        %v3613 = vld [vmem:[%s3612] sm:$0xff]
        %v3614 = vld [vmem:[%s3612 + $0x8] sm:$0xff]
        %v3615 = vld [vmem:[%s3612 + $0x10] sm:$0xff]
        %v3616 = vld [vmem:[%s3612 + $0x18] sm:$0xff]
        %v3618 = vsel %vm374, %v3611, 0
        %3620 = vmatprep.subr.mxu0 0.0
        %3621 = vmatpush1.msra.mxu0 %v3613
        %3622 = vmatprep.subr.mxu0 0.0
        %3623 = vmatpush1.msra.mxu0 %v3614
        %3624 = vmatprep.subr.mxu0 0.0
        %3625 = vmatpush1.msra.mxu0 %v3615
        %3626 = vmatprep.subr.mxu0 0.0
        %3627 = vmatpush1.msra.mxu0 %v3616
        %3628 = vmatprep.subr.mxu0 0.0
        %3629 = vmatpush1.msra.mxu0 0.0
        %3630 = vmatprep.subr.mxu0 0.0
        %3631 = vmatpush1.msra.mxu0 0.0
        %3632 = vmatprep.subr.mxu0 0.0
        %3633 = vmatpush1.msra.mxu0 0.0
        %3634 = vmatprep.subr.mxu0 0.0
        %3635 = vmatpush1.msra.mxu0 0.0
        %3636 = vmatprep.subr.mxu0 0.0
        %3637 = vmatpush1.msra.mxu0 0.0
        %3638 = vmatprep.subr.mxu0 0.0
        %3639 = vmatpush1.msra.mxu0 0.0
        %3640 = vmatprep.subr.mxu0 0.0
        %3641 = vmatpush1.msra.mxu0 0.0
        %3642 = vmatprep.subr.mxu0 0.0
        %3643 = vmatpush1.msra.mxu0 0.0
        %3644 = vmatprep.subr.mxu0 0.0
        %3645 = vmatpush1.msra.mxu0 0.0
        %3646 = vmatprep.subr.mxu0 0.0
        %3647 = vmatpush1.msra.mxu0 0.0
        %3648 = vmatprep.subr.mxu0 0.0
        %3649 = vmatpush1.msra.mxu0 0.0
        %3650 = vmatprep.subr.mxu0 0.0
        %3651 = vmatpush1.msra.mxu0 0.0
        %3652 = vmatprep.subr.mxu0 0.0
        %3653 = vmatpush1.msra.mxu0 0.0
        %3654 = vmatprep.subr.mxu0 0.0
        %3655 = vmatpush1.msra.mxu0 0.0
        %3656 = vmatprep.subr.mxu0 0.0
        %3657 = vmatpush1.msra.mxu0 0.0
        %3658 = vmatprep.subr.mxu0 0.0
        %3659 = vmatpush1.msra.mxu0 0.0
        %3660 = vmatprep.subr.mxu0 0.0
        %3661 = vmatpush1.msra.mxu0 0.0
        %3662 = vmatprep.subr.mxu0 0.0
        %3663 = vmatpush1.msra.mxu0 0.0
        %3664 = vmatprep.subr.mxu0 0.0
        %3665 = vmatpush1.msra.mxu0 0.0
        %3666 = vmatprep.subr.mxu0 0.0
        %3667 = vmatpush1.msra.mxu0 0.0
        %3668 = vmatprep.subr.mxu0 0.0
        %3669 = vmatpush1.msra.mxu0 0.0
        %3670 = vmatprep.subr.mxu0 0.0
        %3671 = vmatpush1.msra.mxu0 0.0
        %3672 = vmatprep.subr.mxu0 0.0
        %3673 = vmatpush1.msra.mxu0 0.0
        %3674 = vmatprep.subr.mxu0 0.0
        %3675 = vmatpush1.msra.mxu0 0.0
        %3676 = vmatprep.subr.mxu0 0.0
        %3677 = vmatpush1.msra.mxu0 0.0
        %3678 = vmatprep.subr.mxu0 0.0
        %3679 = vmatpush1.msra.mxu0 0.0
        %3680 = vmatprep.subr.mxu0 0.0
        %3681 = vmatpush1.msra.mxu0 0.0
        %3682 = vmatprep.subr.mxu0 0.0
        %3683 = vmatpush1.msra.mxu0 0.0
        %3684 = vmatprep.mubr.f32.mxu0 0.0
        %3685 = vmatmul.mubr.f32.gmra.mrb[0].mxu0 %v3618
        %v3686 = vpop.f32.mrb[0].mxu0
        %v3687 = vadd.f32 0.0, %v3686
        %v3688 = vpop.f32.mrb[0].mxu0
        %3689 = vdwg.mxu0
        %3690 = vrot.lane.b32.xlu0 %v487, 64
        %v3691 = vpop.permute.xlu0 %3690
        %v3693 = vsel %vm614, %v3687, 0
        %v3695 = vsel %vm614, %v3691, 0
        %3697 = vmatprep.subr.mxu0 0.0
        %3698 = vmatpush1.xpose.msra.mxu0 %v3695
        %3699 = vmatprep.subr.mxu0 0.0
        %3700 = vmatpush1.xpose.msra.mxu0 0.0
        %3701 = vmatprep.subr.mxu0 0.0
        %3702 = vmatpush1.xpose.msra.mxu0 0.0
        %3703 = vmatprep.subr.mxu0 0.0
        %3704 = vmatpush1.xpose.msra.mxu0 0.0
        %3705 = vmatprep.subr.mxu0 0.0
        %3706 = vmatpush1.xpose.msra.mxu0 0.0
        %3707 = vmatprep.subr.mxu0 0.0
        %3708 = vmatpush1.xpose.msra.mxu0 0.0
        %3709 = vmatprep.subr.mxu0 0.0
        %3710 = vmatpush1.xpose.msra.mxu0 0.0
        %3711 = vmatprep.subr.mxu0 0.0
        %3712 = vmatpush1.xpose.msra.mxu0 0.0
        %3713 = vmatprep.subr.mxu0 0.0
        %3714 = vmatpush1.xpose.msra.mxu0 0.0
        %3715 = vmatprep.subr.mxu0 0.0
        %3716 = vmatpush1.xpose.msra.mxu0 0.0
        %3717 = vmatprep.subr.mxu0 0.0
        %3718 = vmatpush1.xpose.msra.mxu0 0.0
        %3719 = vmatprep.subr.mxu0 0.0
        %3720 = vmatpush1.xpose.msra.mxu0 0.0
        %3721 = vmatprep.subr.mxu0 0.0
        %3722 = vmatpush1.xpose.msra.mxu0 0.0
        %3723 = vmatprep.subr.mxu0 0.0
        %3724 = vmatpush1.xpose.msra.mxu0 0.0
        %3725 = vmatprep.subr.mxu0 0.0
        %3726 = vmatpush1.xpose.msra.mxu0 0.0
        %3727 = vmatprep.subr.mxu0 0.0
        %3728 = vmatpush1.xpose.msra.mxu0 0.0
        %3729 = vmatprep.subr.mxu0 0.0
        %3730 = vmatpush1.xpose.msra.mxu0 0.0
        %3731 = vmatprep.subr.mxu0 0.0
        %3732 = vmatpush1.xpose.msra.mxu0 0.0
        %3733 = vmatprep.subr.mxu0 0.0
        %3734 = vmatpush1.xpose.msra.mxu0 0.0
        %3735 = vmatprep.subr.mxu0 0.0
        %3736 = vmatpush1.xpose.msra.mxu0 0.0
        %3737 = vmatprep.subr.mxu0 0.0
        %3738 = vmatpush1.xpose.msra.mxu0 0.0
        %3739 = vmatprep.subr.mxu0 0.0
        %3740 = vmatpush1.xpose.msra.mxu0 0.0
        %3741 = vmatprep.subr.mxu0 0.0
        %3742 = vmatpush1.xpose.msra.mxu0 0.0
        %3743 = vmatprep.subr.mxu0 0.0
        %3744 = vmatpush1.xpose.msra.mxu0 0.0
        %3745 = vmatprep.subr.mxu0 0.0
        %3746 = vmatpush1.xpose.msra.mxu0 0.0
        %3747 = vmatprep.subr.mxu0 0.0
        %3748 = vmatpush1.xpose.msra.mxu0 0.0
        %3749 = vmatprep.subr.mxu0 0.0
        %3750 = vmatpush1.xpose.msra.mxu0 0.0
        %3751 = vmatprep.subr.mxu0 0.0
        %3752 = vmatpush1.xpose.msra.mxu0 0.0
        %3753 = vmatprep.subr.mxu0 0.0
        %3754 = vmatpush1.xpose.msra.mxu0 0.0
        %3755 = vmatprep.subr.mxu0 0.0
        %3756 = vmatpush1.xpose.msra.mxu0 0.0
        %3757 = vmatprep.subr.mxu0 0.0
        %3758 = vmatpush1.xpose.msra.mxu0 0.0
        %3759 = vmatprep.subr.mxu0 0.0
        %3760 = vmatpush1.xpose.msra.mxu0 0.0
        %3761 = vmatprep.mubr.f32.mxu0 0.0
        %3762 = vmatmul.mubr.f32.gmra.mrb[0].mxu0 %v3693
        %v3763 = vpop.f32.mrb[0].mxu0
        %v3764 = vadd.f32 0.0, %v3763
        %v3765 = vpop.f32.mrb[0].mxu0
        %3766 = vdwg.mxu0
        %v3767 = vmul.f32 %v3764, 0.35355338
        %v3768 = vsel %vm614, %v3767, -inf
        %3769 = vmax.xlane.f32.xlu0 %v3768
        %v3770 = vpop.xlane.xlu0 %3769
        %v3771 = vsub.f32 %v3767, %v3770
        %v3772 = vmul.f32 %v3771, 1.442695
        %v3773 = vpow.pop %v3772
        %v3774 = vsel %vm614, %v3773, 0.0
        %3775 = vadd.xlane.f32.xlu0 %v3774
        %v3776 = vpop.xlane.xlu0 %3775
        %v3777 = vrcp.pop %v3776
        %v3778 = vmul.f32 %v3773, %v3777
        %3779 = vrot.lane.b32.xlu0 %v487, 48
        %v3780 = vpop.permute.xlu0 %3779
        %v3783 = vsel %vm614, %v3778, 0
        %3785 = vmatprep.subr.mxu0 0.0
        %3786 = vmatpush1.msra.mxu0 %v3780
        %3787 = vmatprep.subr.mxu0 0.0
        %3788 = vmatpush1.msra.mxu0 0.0
        %3789 = vmatprep.subr.mxu0 0.0
        %3790 = vmatpush1.msra.mxu0 0.0
        %3791 = vmatprep.subr.mxu0 0.0
        %3792 = vmatpush1.msra.mxu0 0.0
        %3793 = vmatprep.subr.mxu0 0.0
        %3794 = vmatpush1.msra.mxu0 0.0
        %3795 = vmatprep.subr.mxu0 0.0
        %3796 = vmatpush1.msra.mxu0 0.0
        %3797 = vmatprep.subr.mxu0 0.0
        %3798 = vmatpush1.msra.mxu0 0.0
        %3799 = vmatprep.subr.mxu0 0.0
        %3800 = vmatpush1.msra.mxu0 0.0
        %3801 = vmatprep.subr.mxu0 0.0
        %3802 = vmatpush1.msra.mxu0 0.0
        %3803 = vmatprep.subr.mxu0 0.0
        %3804 = vmatpush1.msra.mxu0 0.0
        %3805 = vmatprep.subr.mxu0 0.0
        %3806 = vmatpush1.msra.mxu0 0.0
        %3807 = vmatprep.subr.mxu0 0.0
        %3808 = vmatpush1.msra.mxu0 0.0
        %3809 = vmatprep.subr.mxu0 0.0
        %3810 = vmatpush1.msra.mxu0 0.0
        %3811 = vmatprep.subr.mxu0 0.0
        %3812 = vmatpush1.msra.mxu0 0.0
        %3813 = vmatprep.subr.mxu0 0.0
        %3814 = vmatpush1.msra.mxu0 0.0
        %3815 = vmatprep.subr.mxu0 0.0
        %3816 = vmatpush1.msra.mxu0 0.0
        %3817 = vmatprep.subr.mxu0 0.0
        %3818 = vmatpush1.msra.mxu0 0.0
        %3819 = vmatprep.subr.mxu0 0.0
        %3820 = vmatpush1.msra.mxu0 0.0
        %3821 = vmatprep.subr.mxu0 0.0
        %3822 = vmatpush1.msra.mxu0 0.0
        %3823 = vmatprep.subr.mxu0 0.0
        %3824 = vmatpush1.msra.mxu0 0.0
        %3825 = vmatprep.subr.mxu0 0.0
        %3826 = vmatpush1.msra.mxu0 0.0
        %3827 = vmatprep.subr.mxu0 0.0
        %3828 = vmatpush1.msra.mxu0 0.0
        %3829 = vmatprep.subr.mxu0 0.0
        %3830 = vmatpush1.msra.mxu0 0.0
        %3831 = vmatprep.subr.mxu0 0.0
        %3832 = vmatpush1.msra.mxu0 0.0
        %3833 = vmatprep.subr.mxu0 0.0
        %3834 = vmatpush1.msra.mxu0 0.0
        %3835 = vmatprep.subr.mxu0 0.0
        %3836 = vmatpush1.msra.mxu0 0.0
        %3837 = vmatprep.subr.mxu0 0.0
        %3838 = vmatpush1.msra.mxu0 0.0
        %3839 = vmatprep.subr.mxu0 0.0
        %3840 = vmatpush1.msra.mxu0 0.0
        %3841 = vmatprep.subr.mxu0 0.0
        %3842 = vmatpush1.msra.mxu0 0.0
        %3843 = vmatprep.subr.mxu0 0.0
        %3844 = vmatpush1.msra.mxu0 0.0
        %3845 = vmatprep.subr.mxu0 0.0
        %3846 = vmatpush1.msra.mxu0 0.0
        %3847 = vmatprep.subr.mxu0 0.0
        %3848 = vmatpush1.msra.mxu0 0.0
        %3849 = vmatprep.mubr.f32.mxu0 0.0
        %3850 = vmatmul.mubr.f32.gmra.mrb[0].mxu0 %v3783
        %v3851 = vpop.f32.mrb[0].mxu0
        %v3852 = vadd.f32 0.0, %v3851
        %v3853 = vpop.f32.mrb[0].mxu0
        %3854 = vdwg.mxu0
        %3855 = vrot.lane.b32.xlu0 %v3687, 120
        %v3856 = vpop.permute.xlu0 %3855
        %3857 = vrot.lane.b32.xlu0 %v487, 56
        %v3858 = vpop.permute.xlu0 %3857
        %v3859 = vsel %vm614, %v3856, 0
        %v3861 = vsel %vm614, %v3858, 0
        %3863 = vmatprep.subr.mxu0 0.0
        %3864 = vmatpush1.xpose.msra.mxu0 %v3861
        %3865 = vmatprep.subr.mxu0 0.0
        %3866 = vmatpush1.xpose.msra.mxu0 0.0
        %3867 = vmatprep.subr.mxu0 0.0
        %3868 = vmatpush1.xpose.msra.mxu0 0.0
        %3869 = vmatprep.subr.mxu0 0.0
        %3870 = vmatpush1.xpose.msra.mxu0 0.0
        %3871 = vmatprep.subr.mxu0 0.0
        %3872 = vmatpush1.xpose.msra.mxu0 0.0
        %3873 = vmatprep.subr.mxu0 0.0
        %3874 = vmatpush1.xpose.msra.mxu0 0.0
        %3875 = vmatprep.subr.mxu0 0.0
        %3876 = vmatpush1.xpose.msra.mxu0 0.0
        %3877 = vmatprep.subr.mxu0 0.0
        %3878 = vmatpush1.xpose.msra.mxu0 0.0
        %3879 = vmatprep.subr.mxu0 0.0
        %3880 = vmatpush1.xpose.msra.mxu0 0.0
        %3881 = vmatprep.subr.mxu0 0.0
        %3882 = vmatpush1.xpose.msra.mxu0 0.0
        %3883 = vmatprep.subr.mxu0 0.0
        %3884 = vmatpush1.xpose.msra.mxu0 0.0
        %3885 = vmatprep.subr.mxu0 0.0
        %3886 = vmatpush1.xpose.msra.mxu0 0.0
        %3887 = vmatprep.subr.mxu0 0.0
        %3888 = vmatpush1.xpose.msra.mxu0 0.0
        %3889 = vmatprep.subr.mxu0 0.0
        %3890 = vmatpush1.xpose.msra.mxu0 0.0
        %3891 = vmatprep.subr.mxu0 0.0
        %3892 = vmatpush1.xpose.msra.mxu0 0.0
        %3893 = vmatprep.subr.mxu0 0.0
        %3894 = vmatpush1.xpose.msra.mxu0 0.0
        %3895 = vmatprep.subr.mxu0 0.0
        %3896 = vmatpush1.xpose.msra.mxu0 0.0
        %3897 = vmatprep.subr.mxu0 0.0
        %3898 = vmatpush1.xpose.msra.mxu0 0.0
        %3899 = vmatprep.subr.mxu0 0.0
        %3900 = vmatpush1.xpose.msra.mxu0 0.0
        %3901 = vmatprep.subr.mxu0 0.0
        %3902 = vmatpush1.xpose.msra.mxu0 0.0
        %3903 = vmatprep.subr.mxu0 0.0
        %3904 = vmatpush1.xpose.msra.mxu0 0.0
        %3905 = vmatprep.subr.mxu0 0.0
        %3906 = vmatpush1.xpose.msra.mxu0 0.0
        %3907 = vmatprep.subr.mxu0 0.0
        %3908 = vmatpush1.xpose.msra.mxu0 0.0
        %3909 = vmatprep.subr.mxu0 0.0
        %3910 = vmatpush1.xpose.msra.mxu0 0.0
        %3911 = vmatprep.subr.mxu0 0.0
        %3912 = vmatpush1.xpose.msra.mxu0 0.0
        %3913 = vmatprep.subr.mxu0 0.0
        %3914 = vmatpush1.xpose.msra.mxu0 0.0
        %3915 = vmatprep.subr.mxu0 0.0
        %3916 = vmatpush1.xpose.msra.mxu0 0.0
        %3917 = vmatprep.subr.mxu0 0.0
        %3918 = vmatpush1.xpose.msra.mxu0 0.0
        %3919 = vmatprep.subr.mxu0 0.0
        %3920 = vmatpush1.xpose.msra.mxu0 0.0
        %3921 = vmatprep.subr.mxu0 0.0
        %3922 = vmatpush1.xpose.msra.mxu0 0.0
        %3923 = vmatprep.subr.mxu0 0.0
        %3924 = vmatpush1.xpose.msra.mxu0 0.0
        %3925 = vmatprep.subr.mxu0 0.0
        %3926 = vmatpush1.xpose.msra.mxu0 0.0
        %3927 = vmatprep.mubr.f32.mxu0 0.0
        %3928 = vmatmul.mubr.f32.gmra.mrb[0].mxu0 %v3859
        %v3929 = vpop.f32.mrb[0].mxu0
        %v3930 = vadd.f32 0.0, %v3929
        %v3931 = vpop.f32.mrb[0].mxu0
        %3932 = vdwg.mxu0
        %v3933 = vmul.f32 %v3930, 0.35355338
        %v3934 = vsel %vm614, %v3933, -inf
        %3935 = vmax.xlane.f32.xlu0 %v3934
        %v3936 = vpop.xlane.xlu0 %3935
        %v3937 = vsub.f32 %v3933, %v3936
        %v3938 = vmul.f32 %v3937, 1.442695
        %v3939 = vpow.pop %v3938
        %v3940 = vsel %vm614, %v3939, 0.0
        %3941 = vadd.xlane.f32.xlu0 %v3940
        %v3942 = vpop.xlane.xlu0 %3941
        %v3943 = vrcp.pop %v3942
        %v3944 = vmul.f32 %v3939, %v3943
        %3945 = vrot.lane.b32.xlu0 %v487, 40
        %v3946 = vpop.permute.xlu0 %3945
        %v3949 = vsel %vm614, %v3944, 0
        %3951 = vmatprep.subr.mxu0 0.0
        %3952 = vmatpush1.msra.mxu0 %v3946
        %3953 = vmatprep.subr.mxu0 0.0
        %3954 = vmatpush1.msra.mxu0 0.0
        %3955 = vmatprep.subr.mxu0 0.0
        %3956 = vmatpush1.msra.mxu0 0.0
        %3957 = vmatprep.subr.mxu0 0.0
        %3958 = vmatpush1.msra.mxu0 0.0
        %3959 = vmatprep.subr.mxu0 0.0
        %3960 = vmatpush1.msra.mxu0 0.0
        %3961 = vmatprep.subr.mxu0 0.0
        %3962 = vmatpush1.msra.mxu0 0.0
        %3963 = vmatprep.subr.mxu0 0.0
        %3964 = vmatpush1.msra.mxu0 0.0
        %3965 = vmatprep.subr.mxu0 0.0
        %3966 = vmatpush1.msra.mxu0 0.0
        %3967 = vmatprep.subr.mxu0 0.0
        %3968 = vmatpush1.msra.mxu0 0.0
        %3969 = vmatprep.subr.mxu0 0.0
        %3970 = vmatpush1.msra.mxu0 0.0
        %3971 = vmatprep.subr.mxu0 0.0
        %3972 = vmatpush1.msra.mxu0 0.0
        %3973 = vmatprep.subr.mxu0 0.0
        %3974 = vmatpush1.msra.mxu0 0.0
        %3975 = vmatprep.subr.mxu0 0.0
        %3976 = vmatpush1.msra.mxu0 0.0
        %3977 = vmatprep.subr.mxu0 0.0
        %3978 = vmatpush1.msra.mxu0 0.0
        %3979 = vmatprep.subr.mxu0 0.0
        %3980 = vmatpush1.msra.mxu0 0.0
        %3981 = vmatprep.subr.mxu0 0.0
        %3982 = vmatpush1.msra.mxu0 0.0
        %3983 = vmatprep.subr.mxu0 0.0
        %3984 = vmatpush1.msra.mxu0 0.0
        %3985 = vmatprep.subr.mxu0 0.0
        %3986 = vmatpush1.msra.mxu0 0.0
        %3987 = vmatprep.subr.mxu0 0.0
        %3988 = vmatpush1.msra.mxu0 0.0
        %3989 = vmatprep.subr.mxu0 0.0
        %3990 = vmatpush1.msra.mxu0 0.0
        %3991 = vmatprep.subr.mxu0 0.0
        %3992 = vmatpush1.msra.mxu0 0.0
        %3993 = vmatprep.subr.mxu0 0.0
        %3994 = vmatpush1.msra.mxu0 0.0
        %3995 = vmatprep.subr.mxu0 0.0
        %3996 = vmatpush1.msra.mxu0 0.0
        %3997 = vmatprep.subr.mxu0 0.0
        %3998 = vmatpush1.msra.mxu0 0.0
        %3999 = vmatprep.subr.mxu0 0.0
        %4000 = vmatpush1.msra.mxu0 0.0
        %4001 = vmatprep.subr.mxu0 0.0
        %4002 = vmatpush1.msra.mxu0 0.0
        %4003 = vmatprep.subr.mxu0 0.0
        %4004 = vmatpush1.msra.mxu0 0.0
        %4005 = vmatprep.subr.mxu0 0.0
        %4006 = vmatpush1.msra.mxu0 0.0
        %4007 = vmatprep.subr.mxu0 0.0
        %4008 = vmatpush1.msra.mxu0 0.0
        %4009 = vmatprep.subr.mxu0 0.0
        %4010 = vmatpush1.msra.mxu0 0.0
        %4011 = vmatprep.subr.mxu0 0.0
        %4012 = vmatpush1.msra.mxu0 0.0
        %4013 = vmatprep.subr.mxu0 0.0
        %4014 = vmatpush1.msra.mxu0 0.0
        %4015 = vmatprep.mubr.f32.mxu0 0.0
        %4016 = vmatmul.mubr.f32.gmra.mrb[0].mxu0 %v3949
        %v4017 = vpop.f32.mrb[0].mxu0
        %v4018 = vadd.f32 0.0, %v4017
        %v4019 = vpop.f32.mrb[0].mxu0
        %4020 = vdwg.mxu0
        %4022 = vrot.lane.b32.xlu0 %v4018, 8
        %v4023 = vpop.permute.xlu0 %4022
        %v4025 = vsel %vm614, %v3852, %v4023
        %s4026 = scalar_lea.vmem %s5, 80
        %v4027 = vld [vmem:[%s4026] sm:$0xff]
        %v4028 = vld [vmem:[%s4026 + $0x8] sm:$0xff]
        %v4030 = vsel %vm952, %v4025, 0
        %4032 = vmatprep.subr.mxu0 0.0
        %4033 = vmatpush1.msra.mxu0 %v4027
        %4034 = vmatprep.subr.mxu0 0.0
        %4035 = vmatpush1.msra.mxu0 %v4028
        %4036 = vmatprep.subr.mxu0 0.0
        %4037 = vmatpush1.msra.mxu0 0.0
        %4038 = vmatprep.subr.mxu0 0.0
        %4039 = vmatpush1.msra.mxu0 0.0
        %4040 = vmatprep.subr.mxu0 0.0
        %4041 = vmatpush1.msra.mxu0 0.0
        %4042 = vmatprep.subr.mxu0 0.0
        %4043 = vmatpush1.msra.mxu0 0.0
        %4044 = vmatprep.subr.mxu0 0.0
        %4045 = vmatpush1.msra.mxu0 0.0
        %4046 = vmatprep.subr.mxu0 0.0
        %4047 = vmatpush1.msra.mxu0 0.0
        %4048 = vmatprep.subr.mxu0 0.0
        %4049 = vmatpush1.msra.mxu0 0.0
        %4050 = vmatprep.subr.mxu0 0.0
        %4051 = vmatpush1.msra.mxu0 0.0
        %4052 = vmatprep.subr.mxu0 0.0
        %4053 = vmatpush1.msra.mxu0 0.0
        %4054 = vmatprep.subr.mxu0 0.0
        %4055 = vmatpush1.msra.mxu0 0.0
        %4056 = vmatprep.subr.mxu0 0.0
        %4057 = vmatpush1.msra.mxu0 0.0
        %4058 = vmatprep.subr.mxu0 0.0
        %4059 = vmatpush1.msra.mxu0 0.0
        %4060 = vmatprep.subr.mxu0 0.0
        %4061 = vmatpush1.msra.mxu0 0.0
        %4062 = vmatprep.subr.mxu0 0.0
        %4063 = vmatpush1.msra.mxu0 0.0
        %4064 = vmatprep.subr.mxu0 0.0
        %4065 = vmatpush1.msra.mxu0 0.0
        %4066 = vmatprep.subr.mxu0 0.0
        %4067 = vmatpush1.msra.mxu0 0.0
        %4068 = vmatprep.subr.mxu0 0.0
        %4069 = vmatpush1.msra.mxu0 0.0
        %4070 = vmatprep.subr.mxu0 0.0
        %4071 = vmatpush1.msra.mxu0 0.0
        %4072 = vmatprep.subr.mxu0 0.0
        %4073 = vmatpush1.msra.mxu0 0.0
        %4074 = vmatprep.subr.mxu0 0.0
        %4075 = vmatpush1.msra.mxu0 0.0
        %4076 = vmatprep.subr.mxu0 0.0
        %4077 = vmatpush1.msra.mxu0 0.0
        %4078 = vmatprep.subr.mxu0 0.0
        %4079 = vmatpush1.msra.mxu0 0.0
        %4080 = vmatprep.subr.mxu0 0.0
        %4081 = vmatpush1.msra.mxu0 0.0
        %4082 = vmatprep.subr.mxu0 0.0
        %4083 = vmatpush1.msra.mxu0 0.0
        %4084 = vmatprep.subr.mxu0 0.0
        %4085 = vmatpush1.msra.mxu0 0.0
        %4086 = vmatprep.subr.mxu0 0.0
        %4087 = vmatpush1.msra.mxu0 0.0
        %4088 = vmatprep.subr.mxu0 0.0
        %4089 = vmatpush1.msra.mxu0 0.0
        %4090 = vmatprep.subr.mxu0 0.0
        %4091 = vmatpush1.msra.mxu0 0.0
        %4092 = vmatprep.subr.mxu0 0.0
        %4093 = vmatpush1.msra.mxu0 0.0
        %4094 = vmatprep.subr.mxu0 0.0
        %4095 = vmatpush1.msra.mxu0 0.0
        %4096 = vmatprep.mubr.f32.mxu0 0.0
        %4097 = vmatmul.mubr.f32.gmra.mrb[0].mxu0 %v4030
        %v4098 = vpop.f32.mrb[0].mxu0
        %v4099 = vadd.f32 0.0, %v4098
        %v4100 = vpop.f32.mrb[0].mxu0
        %4101 = vdwg.mxu0
        %v4102 = vadd.f32 %v3573, %v4099
        %v4103 = vsel %vm374, %v4102, 0.0
        %4104 = vadd.xlane.f32.xlu0 %v4103
        %v4105 = vpop.xlane.xlu0 %4104
        %v4106 = vrot.slane %v4105, 4
        %v4107 = vadd.f32 %v4105, %v4106
        %v4108 = vrot.slane %v4107, 2
        %v4109 = vadd.f32 %v4107, %v4108
        %v4110 = vrot.slane %v4109, 1
        %v4111 = vadd.f32 %v4109, %v4110
        %s4112 = vtos %v4111
        %v4113 = vrcp.pop 256.0
        %s4114 = vtos %v4113
        %s4115 = smul.f32 %s4112, %s4114
        %v4116 = vmul.f32 %v4102, %v4102
        %v4117 = vsel %vm374, %v4116, 0.0
        %4118 = vadd.xlane.f32.xlu0 %v4117
        %v4119 = vpop.xlane.xlu0 %4118
        %v4120 = vrot.slane %v4119, 4
        %v4121 = vadd.f32 %v4119, %v4120
        %v4122 = vrot.slane %v4121, 2
        %v4123 = vadd.f32 %v4121, %v4122
        %v4124 = vrot.slane %v4123, 1
        %v4125 = vadd.f32 %v4123, %v4124
        %s4126 = vtos %v4125
        %v4127 = vrcp.pop 256.0
        %s4128 = vtos %v4127
        %s4129 = smul.f32 %s4126, %s4128
        %s4130 = smul.f32 %s4115, %s4115
        %s4131 = ssub.f32 %s4129, %s4130
        %s4132 = smax.f32 %s4131, 0.0
        %v4133 = vstv %s4115
        %v4134 = vsub.f32 %v4102, %v4133
        %s4135 = sadd.f32 %s4132, 1e-05
        %v4136 = vstv %s4135
        %v4137 = vrsqrt.pop %v4136
        %s4138 = vtos %v4137
        %v4139 = vstv %s4138
        %v4140 = vmul.f32 %v4134, %v4139
        %s4141 = scalar_lea.vmem %s6, 64
        %v4142 = vld [vmem:[%s4141] sm:$0xff]
        %v4143 = vld [vmem:[%s4141 + $0x8] sm:$0xff]
        %v4144 = vld [vmem:[%s4141 + $0x10] sm:$0xff]
        %v4145 = vld [vmem:[%s4141 + $0x18] sm:$0xff]
        %s4146 = scalar_lea.vmem %s7, 2
        %v4147 = vld [vmem:[%s4146] sm:$0x1]
        %v4149 = vlaneseq
        %v4150 = vshrl.u32 %v4149, 7
        %v4151 = vsub.s32 0, %v4150
        %v4152 = vrot.slane %v4147, %v4151
        %v4155 = vsel %vm374, %v4140, 0
        %4157 = vmatprep.subr.mxu0 0.0
        %4158 = vmatpush1.msra.mxu0 %v4142
        %4159 = vmatprep.subr.mxu0 0.0
        %4160 = vmatpush1.msra.mxu0 %v4143
        %4161 = vmatprep.subr.mxu0 0.0
        %4162 = vmatpush1.msra.mxu0 %v4144
        %4163 = vmatprep.subr.mxu0 0.0
        %4164 = vmatpush1.msra.mxu0 %v4145
        %4165 = vmatprep.subr.mxu0 0.0
        %4166 = vmatpush1.msra.mxu0 0.0
        %4167 = vmatprep.subr.mxu0 0.0
        %4168 = vmatpush1.msra.mxu0 0.0
        %4169 = vmatprep.subr.mxu0 0.0
        %4170 = vmatpush1.msra.mxu0 0.0
        %4171 = vmatprep.subr.mxu0 0.0
        %4172 = vmatpush1.msra.mxu0 0.0
        %4173 = vmatprep.subr.mxu0 0.0
        %4174 = vmatpush1.msra.mxu0 0.0
        %4175 = vmatprep.subr.mxu0 0.0
        %4176 = vmatpush1.msra.mxu0 0.0
        %4177 = vmatprep.subr.mxu0 0.0
        %4178 = vmatpush1.msra.mxu0 0.0
        %4179 = vmatprep.subr.mxu0 0.0
        %4180 = vmatpush1.msra.mxu0 0.0
        %4181 = vmatprep.subr.mxu0 0.0
        %4182 = vmatpush1.msra.mxu0 0.0
        %4183 = vmatprep.subr.mxu0 0.0
        %4184 = vmatpush1.msra.mxu0 0.0
        %4185 = vmatprep.subr.mxu0 0.0
        %4186 = vmatpush1.msra.mxu0 0.0
        %4187 = vmatprep.subr.mxu0 0.0
        %4188 = vmatpush1.msra.mxu0 0.0
        %4189 = vmatprep.subr.mxu0 0.0
        %4190 = vmatpush1.msra.mxu0 0.0
        %4191 = vmatprep.subr.mxu0 0.0
        %4192 = vmatpush1.msra.mxu0 0.0
        %4193 = vmatprep.subr.mxu0 0.0
        %4194 = vmatpush1.msra.mxu0 0.0
        %4195 = vmatprep.subr.mxu0 0.0
        %4196 = vmatpush1.msra.mxu0 0.0
        %4197 = vmatprep.subr.mxu0 0.0
        %4198 = vmatpush1.msra.mxu0 0.0
        %4199 = vmatprep.subr.mxu0 0.0
        %4200 = vmatpush1.msra.mxu0 0.0
        %4201 = vmatprep.subr.mxu0 0.0
        %4202 = vmatpush1.msra.mxu0 0.0
        %4203 = vmatprep.subr.mxu0 0.0
        %4204 = vmatpush1.msra.mxu0 0.0
        %4205 = vmatprep.subr.mxu0 0.0
        %4206 = vmatpush1.msra.mxu0 0.0
        %4207 = vmatprep.subr.mxu0 0.0
        %4208 = vmatpush1.msra.mxu0 0.0
        %4209 = vmatprep.subr.mxu0 0.0
        %4210 = vmatpush1.msra.mxu0 0.0
        %4211 = vmatprep.subr.mxu0 0.0
        %4212 = vmatpush1.msra.mxu0 0.0
        %4213 = vmatprep.subr.mxu0 0.0
        %4214 = vmatpush1.msra.mxu0 0.0
        %4215 = vmatprep.subr.mxu0 0.0
        %4216 = vmatpush1.msra.mxu0 0.0
        %4217 = vmatprep.subr.mxu0 0.0
        %4218 = vmatpush1.msra.mxu0 0.0
        %4219 = vmatprep.subr.mxu0 0.0
        %4220 = vmatpush1.msra.mxu0 0.0
        %4221 = vmatprep.mubr.f32.mxu0 0.0
        %4222 = vmatmul.mubr.f32.gmra.mrb[0].mxu0 %v4155
        %v4223 = vpop.f32.mrb[0].mxu0
        %v4224 = vadd.f32 %v4152, %v4223
        %v4225 = vpop.f32.mrb[0].mxu0
        %4226 = vdwg.mxu0
        %v4227 = vmax.f32 %v4224, 0.0
        %s4228 = scalar_lea.vmem %s8, 128
        %v4229 = vld [vmem:[%s4228] sm:$0xff]
        %v4230 = vld [vmem:[%s4228 + $0x8] sm:$0xff]
        %v4231 = vld [vmem:[%s4228 + $0x10] sm:$0xff]
        %v4232 = vld [vmem:[%s4228 + $0x18] sm:$0xff]
        %v4233 = vld [vmem:[%s4228 + $0x20] sm:$0xff]
        %v4234 = vld [vmem:[%s4228 + $0x28] sm:$0xff]
        %v4235 = vld [vmem:[%s4228 + $0x30] sm:$0xff]
        %v4236 = vld [vmem:[%s4228 + $0x38] sm:$0xff]
        %s4237 = scalar_lea.vmem %s9, 2
        %v4238 = vld [vmem:[%s4237] sm:$0x1]
        %v4240 = vlaneseq
        %v4241 = vshrl.u32 %v4240, 7
        %v4242 = vsub.s32 0, %v4241
        %v4243 = vrot.slane %v4238, %v4242
        %v4246 = vsel %vm1692, %v4227, 0
        %4248 = vmatprep.subr.mxu0 0.0
        %4249 = vmatpush1.msra.mxu0 %v4229
        %4250 = vmatprep.subr.mxu0 0.0
        %4251 = vmatpush1.msra.mxu0 %v4230
        %4252 = vmatprep.subr.mxu0 0.0
        %4253 = vmatpush1.msra.mxu0 %v4231
        %4254 = vmatprep.subr.mxu0 0.0
        %4255 = vmatpush1.msra.mxu0 %v4232
        %4256 = vmatprep.subr.mxu0 0.0
        %4257 = vmatpush1.msra.mxu0 %v4233
        %4258 = vmatprep.subr.mxu0 0.0
        %4259 = vmatpush1.msra.mxu0 %v4234
        %4260 = vmatprep.subr.mxu0 0.0
        %4261 = vmatpush1.msra.mxu0 %v4235
        %4262 = vmatprep.subr.mxu0 0.0
        %4263 = vmatpush1.msra.mxu0 %v4236
        %4264 = vmatprep.subr.mxu0 0.0
        %4265 = vmatpush1.msra.mxu0 0.0
        %4266 = vmatprep.subr.mxu0 0.0
        %4267 = vmatpush1.msra.mxu0 0.0
        %4268 = vmatprep.subr.mxu0 0.0
        %4269 = vmatpush1.msra.mxu0 0.0
        %4270 = vmatprep.subr.mxu0 0.0
        %4271 = vmatpush1.msra.mxu0 0.0
        %4272 = vmatprep.subr.mxu0 0.0
        %4273 = vmatpush1.msra.mxu0 0.0
        %4274 = vmatprep.subr.mxu0 0.0
        %4275 = vmatpush1.msra.mxu0 0.0
        %4276 = vmatprep.subr.mxu0 0.0
        %4277 = vmatpush1.msra.mxu0 0.0
        %4278 = vmatprep.subr.mxu0 0.0
        %4279 = vmatpush1.msra.mxu0 0.0
        %4280 = vmatprep.subr.mxu0 0.0
        %4281 = vmatpush1.msra.mxu0 0.0
        %4282 = vmatprep.subr.mxu0 0.0
        %4283 = vmatpush1.msra.mxu0 0.0
        %4284 = vmatprep.subr.mxu0 0.0
        %4285 = vmatpush1.msra.mxu0 0.0
        %4286 = vmatprep.subr.mxu0 0.0
        %4287 = vmatpush1.msra.mxu0 0.0
        %4288 = vmatprep.subr.mxu0 0.0
        %4289 = vmatpush1.msra.mxu0 0.0
        %4290 = vmatprep.subr.mxu0 0.0
        %4291 = vmatpush1.msra.mxu0 0.0
        %4292 = vmatprep.subr.mxu0 0.0
        %4293 = vmatpush1.msra.mxu0 0.0
        %4294 = vmatprep.subr.mxu0 0.0
        %4295 = vmatpush1.msra.mxu0 0.0
        %4296 = vmatprep.subr.mxu0 0.0
        %4297 = vmatpush1.msra.mxu0 0.0
        %4298 = vmatprep.subr.mxu0 0.0
        %4299 = vmatpush1.msra.mxu0 0.0
        %4300 = vmatprep.subr.mxu0 0.0
        %4301 = vmatpush1.msra.mxu0 0.0
        %4302 = vmatprep.subr.mxu0 0.0
        %4303 = vmatpush1.msra.mxu0 0.0
        %4304 = vmatprep.subr.mxu0 0.0
        %4305 = vmatpush1.msra.mxu0 0.0
        %4306 = vmatprep.subr.mxu0 0.0
        %4307 = vmatpush1.msra.mxu0 0.0
        %4308 = vmatprep.subr.mxu0 0.0
        %4309 = vmatpush1.msra.mxu0 0.0
        %4310 = vmatprep.subr.mxu0 0.0
        %4311 = vmatpush1.msra.mxu0 0.0
        %4312 = vmatprep.mubr.f32.mxu0 0.0
        %4313 = vmatmul.mubr.f32.gmra.mrb[0].mxu0 %v4246
        %v4314 = vpop.f32.mrb[0].mxu0
        %v4315 = vadd.f32 %v4243, %v4314
        %v4316 = vpop.f32.mrb[0].mxu0
        %4317 = vdwg.mxu0
        %v4318 = vadd.f32 %v4102, %v4315
        %4319 = vst.msk [vmem:[%s363] sm:$0xff] %vm374, %v4318
        %s4320 = sand.u32 %s252, 1
        %s4321 = scalar_lea.sflag [#allocation3], %s4320
        %s4322 = sand.u32 %s252, 1
        %s4323 = smul.addr %s4322, 8
        %s4324 = scalar_lea.vmem [#allocation2], %s4323
        // Predicated region
        $region61: #{decoder_fwd.1} parent=59 // pred_check
          %p4325 = pneg %p262
        $region62: #{decoder_fwd.1} parent=59 // pred_check_branch
          %4327 = sbr.rel (%p4325) target = $region64
        $region63: #{decoder_fwd.1} parent=59 // pred_region
          %s4329 = ssub.s32 128, 128
          %4330 = vsyncadd %s4321, %s4329
          %s4331 = smul.addr %s24, 128
          %s4332 = scalar_lea.hbm %s10, %s4331
          %s4334 = sshll.u32 %s4324, 4
          %s4335 = int_to_ptr.vmem [resolvable:$true] %s4334
          %4337 = dma.vmem_to_hbm [thread:$0]  %s4335, 128, %s4332, %s4321
        $region64: #{decoder_fwd.1} parent=59 // pred_fallthru
          _
      $region60: #{decoder_fwd.1} parent=5 // pred_fallthru
        _
      %p4338 = scmp.le.s32.totalorder 2, %s19
      // Predicated region
      $region65: #{decoder_fwd.1} parent=5 // pred_check
        %p4339 = pneg %p4338
      $region66: #{decoder_fwd.1} parent=5 // pred_check_branch
        %4341 = sbr.rel (%p4339) target = $region68
      $region67: #{decoder_fwd.1} parent=5 // pred_region
        %s4342 = ssub.s32 %s19, 2
        // Predicated region
        $region69: #{decoder_fwd.1} parent=67 // pred_check
          %p4343 = pneg %p268
        $region70: #{decoder_fwd.1} parent=67 // pred_check_branch
          %4345 = sbr.rel (%p4343) target = $region72
        $region71: #{decoder_fwd.1} parent=67 // pred_region
          %s4346 = sand.u32 %s253, 1
          %s4347 = scalar_lea.sflag [#allocation3], %s4346
          %s4348 = sand.u32 %s253, 1
          %s4349 = smul.addr %s4348, 8
          %s4350 = scalar_lea.vmem [#allocation2], %s4349
          %4351 = dma.done %s4347, 128
        $region72: #{decoder_fwd.1} parent=67 // pred_fallthru
          _
      $region68: #{decoder_fwd.1} parent=5 // pred_fallthru
        _
    $region6: #{decoder_fwd.1} parent=1 // loop_footer
      %s23 = sadd.s32 1, %s19
    $region7: #{decoder_fwd.1} parent=1 // loop_footer_branch
      %18 = sbr.rel target = $region3
    $region8: #{decoder_fwd.1} parent=1 // loop_exit
      _
    %4352 = vsyncpa [#allocation3], 1
    %s4353 = scalar_lea.sflag [#allocation3], 1
    %4354 = vsyncpa %s4353, 1

</llo_original>
